<compile_context>
chip_gen: v7x
topology: tpu7x:2x2x1
jax: 0.10.0
libtpu: 0.0.40
codegen_flags: <defaults>
</compile_context>

<pallas_src>
import jax
import jax.numpy as jnp
from jax import lax
from jax.experimental import pallas as pl
from jax.experimental.pallas import tpu as pltpu

NEG_INF = -1e9


# ----------------------------------------------------------------------------
# Fused per-batch kernel: DMA-gather embeddings -> encoder -> classifier.
#   ids_ref   : SMEM (B, L) int32   token ids (scalar prefetch)
#   valid_ref : VMEM (1, L) f32     key-validity for this batch element
#   emb_hbm   : HBM  (V, D) f32     embedding table (memory_space=pl.ANY)
#   weights   : full VMEM blocks (matmul weights stored bf16)
#   enc_ref   : VMEM (L, D) f32     encoded tokens of this batch element
#   cls_ref   : VMEM (1, C) f32     log-softmax logits (CLS token)
# ----------------------------------------------------------------------------
def fused_pipeline_kernel(ids_ref, valid_ref, emb_hbm,
                          wqkv_ref, wo_ref,
                          w1_ref, b1_ref, w2_ref, b2_ref,
                          g1_ref, be1_ref, g2_ref, be2_ref,
                          cw_ref, cb_ref,
                          enc_ref, cls_ref,
                          x_buf, gather_sem):
    b = pl.program_id(0)
    L, D = enc_ref.shape

    # --- embedding lookup: per-row DMA gather from the HBM table ------------
    @pl.loop(0, L, unroll=True)
    def _issue(i):
        row = ids_ref[b, i]
        pltpu.make_async_copy(emb_hbm.at[pl.ds(row, 1), :],
                              x_buf.at[pl.ds(i, 1), :],
                              gather_sem.at[i]).start()

    @pl.loop(0, L, unroll=True)
    def _wait(i):
        pltpu.make_async_copy(emb_hbm.at[pl.ds(0, 1), :],   # dummy src, size only
                              x_buf.at[pl.ds(i, 1), :],
                              gather_sem.at[i]).wait()

    x = x_buf[...]                                            # (L, D) f32

    # --- attention key mask built in-kernel from the validity vector --------
    bias = (1.0 - valid_ref[...]) * NEG_INF                   # (1, L)

    # --- single-head self-attention, per-batch (L, L) scores ----------------
    # fused qkv projection; 1/sqrt(D) already folded into the q columns
    qkv = jnp.dot(x.astype(jnp.bfloat16), wqkv_ref[...],
                  preferred_element_type=jnp.float32)         # (L, 3D)
    q = qkv[:, :D]
    k = qkv[:, D:2 * D]
    v = qkv[:, 2 * D:]

    # contract last axes of q and k -> no materialized transpose of k
    s = lax.dot_general(q.astype(jnp.bfloat16), k.astype(jnp.bfloat16),
                        (((1,), (1,)), ((), ())),
                        preferred_element_type=jnp.float32)   # (L, L)
    s = s + bias
    m = jnp.max(s, axis=-1, keepdims=True)
    p = jnp.exp(s - m)
    p = p * pl.reciprocal(jnp.sum(p, axis=-1, keepdims=True), approx=True)
    attn = jnp.dot(p.astype(jnp.bfloat16), v.astype(jnp.bfloat16),
                   preferred_element_type=jnp.float32)        # (L, D)
    attn = jnp.dot(attn.astype(jnp.bfloat16), wo_ref[...],
                   preferred_element_type=jnp.float32)

    # --- residual + layernorm 1 (f32 elementwise) ----------------------------
    h = x + attn
    mu = jnp.mean(h, axis=-1, keepdims=True)
    var = jnp.mean((h - mu) ** 2, axis=-1, keepdims=True)
    h = (h - mu) * lax.rsqrt(var + 1e-5) * g1_ref[...] + be1_ref[...]

    # --- feed-forward ---------------------------------------------------------
    # TODO(synk): original BertEncoder source unavailable; tanh-approx GELU is
    # used here (PyTorch nn.GELU default is the exact erf form).
    f = jnp.dot(h.astype(jnp.bfloat16), w1_ref[...],
                preferred_element_type=jnp.float32) + b1_ref[...]
    f = jax.nn.gelu(f, approximate=True)
    f = jnp.dot(f.astype(jnp.bfloat16), w2_ref[...],
                preferred_element_type=jnp.float32) + b2_ref[...]

    # --- residual + layernorm 2 ----------------------------------------------
    h2 = h + f
    mu2 = jnp.mean(h2, axis=-1, keepdims=True)
    var2 = jnp.mean((h2 - mu2) ** 2, axis=-1, keepdims=True)
    out = (h2 - mu2) * lax.rsqrt(var2 + 1e-5) * g2_ref[...] + be2_ref[...]

    enc_ref[...] = out.astype(enc_ref.dtype)

    # --- classifier: CLS token (row 0 of this batch block) + log-softmax ----
    pooled = out[0:1, :]                                      # (1, D) static slice
    logits = jnp.dot(pooled.astype(jnp.bfloat16), cw_ref[...],
                     preferred_element_type=jnp.float32) + cb_ref[...]
    mx = jnp.max(logits, axis=-1, keepdims=True)
    lse = jnp.log(jnp.sum(jnp.exp(logits - mx), axis=-1, keepdims=True)) + mx
    cls_ref[...] = (logits - lse).astype(cls_ref.dtype)


# ----------------------------------------------------------------------------
# Wrapper: Pipeline.forward
# ----------------------------------------------------------------------------
def pipeline_forward(sent1, sent2, bert1, bert2, params):
    B, S = sent1.shape
    L = 2 * S
    D = params["emb"].shape[1]
    F = params["w1"].shape[1]
    C = params["cls_b"].shape[1]

    ids = jnp.concatenate([sent1, sent2], axis=1).astype(jnp.int32)        # (B, L)
    valid = jnp.concatenate([bert1, bert2], axis=1).astype(jnp.float32)    # (B, L)
    valid = valid.reshape(B, 1, L)

    def _full(shape):
        zeros = (0,) * len(shape)
        return pl.BlockSpec(shape, lambda b, ids_ref, _z=zeros: _z)

    grid_spec = pltpu.PrefetchScalarGridSpec(
        num_scalar_prefetch=1,                    # ids -> SMEM
        grid=(B,),
        in_specs=[
            pl.BlockSpec((None, 1, L), lambda b, ids_ref: (b, 0, 0)),  # valid
            pl.BlockSpec(memory_space=pl.ANY),                         # emb in HBM
            _full((D, 3 * D)),                                         # wqkv
            _full((D, D)),                                             # wo
            _full((D, F)), _full((1, F)),                              # w1, b1
            _full((F, D)), _full((1, D)),                              # w2, b2
            _full((1, D)), _full((1, D)),                              # ln1 g, b
            _full((1, D)), _full((1, D)),                              # ln2 g, b
            _full((D, C)), _full((1, C)),                              # cls w, b
        ],
        out_specs=[
            pl.BlockSpec((None, L, D), lambda b, ids_ref: (b, 0, 0)),  # enc
            pl.BlockSpec((None, 1, C), lambda b, ids_ref: (b, 0, 0)),  # logits
        ],
        scratch_shapes=[
            pltpu.VMEM((L, D), jnp.float32),      # gathered embeddings
            pltpu.SemaphoreType.DMA((L,)),        # one sem per gathered row
        ],
    )

    enc, cls = pl.pallas_call(
        fused_pipeline_kernel,
        out_shape=(jax.ShapeDtypeStruct((B, L, D), jnp.float32),
                   jax.ShapeDtypeStruct((B, 1, C), jnp.float32)),
        grid_spec=grid_spec,
        compiler_params=pltpu.CompilerParams(
            dimension_semantics=("parallel",),
            vmem_limit_bytes=32 * 1024 * 1024),
    )(ids, valid, params["emb"],
      params["wqkv"], params["wo"],
      params["w1"], params["b1"], params["w2"], params["b2"],
      params["ln1_g"], params["ln1_b"], params["ln2_g"], params["ln2_b"],
      params["cls_w"], params["cls_b"])

    return enc, cls.reshape(B, C)


def init_params(key, V, D, F, C):
    ks = jax.random.split(key, 8)
    s = 0.05
    bf = jnp.bfloat16
    attn_scale = 1.0 / float(D) ** 0.5
    # fold the 1/sqrt(D) softmax scale into the q columns (one-time, host side)
    wq = jax.random.normal(ks[1], (D, D), jnp.float32) * s * attn_scale
    wk = jax.random.normal(ks[2], (D, D), jnp.float32) * s
    wv = jax.random.normal(ks[3], (D, D), jnp.float32) * s
    return {
        "emb":   jax.random.normal(ks[0], (V, D), jnp.float32) * s,
        "wqkv":  jnp.concatenate([wq, wk, wv], axis=1).astype(bf),    # (D, 3D)
        "wo":    (jax.random.normal(ks[4], (D, D), jnp.float32) * s).astype(bf),
        "w1":    (jax.random.normal(ks[5], (D, F), jnp.float32) * s).astype(bf),
        "b1":    jnp.zeros((1, F), jnp.float32),
        "w2":    (jax.random.normal(ks[6], (F, D), jnp.float32) * s).astype(bf),
        "b2":    jnp.zeros((1, D), jnp.float32),
        "ln1_g": jnp.ones((1, D), jnp.float32),
        "ln1_b": jnp.zeros((1, D), jnp.float32),
        "ln2_g": jnp.ones((1, D), jnp.float32),
        "ln2_b": jnp.zeros((1, D), jnp.float32),
        "cls_w": (jax.random.normal(ks[7], (D, C), jnp.float32) * s).astype(bf),
        "cls_b": jnp.zeros((1, C), jnp.float32),
    }


if __name__ == "__main__":
    B, S, D, F, V, C = 2, 8, 32, 64, 100, 3   # L = 2*S = 16 tokens per example

    key = jax.random.PRNGKey(0)
    k_p, k_s1, k_s2 = jax.random.split(key, 3)

    params = init_params(k_p, V, D, F, C)

    sent1 = jax.random.randint(k_s1, (B, S), 0, V, dtype=jnp.int32)
    sent2 = jax.random.randint(k_s2, (B, S), 0, V, dtype=jnp.int32)
    # bert1/bert2 act as attention masks (last two tokens of sent2 padded).
    bert1 = jnp.ones((B, S), jnp.int32)
    bert2 = jnp.ones((B, S), jnp.int32).at[:, -2:].set(0)

    enc, output = pipeline_forward(sent1, sent2, bert1, bert2, params)
    jax.block_until_ready((enc, output))

    assert enc.shape == (B, 2 * S, D)
    assert output.shape == (B, C)
    # log-softmax rows sum to 1 in prob space
    assert bool(jnp.allclose(jnp.exp(output).sum(-1), 1.0, atol=1e-4))
    assert bool(jnp.all(jnp.isfinite(enc))) and bool(jnp.all(jnp.isfinite(output)))

    print("KERNEL_OK")
</pallas_src>

<mosaic_0001>
module attributes {stable_mosaic.version = 11 : i64} {
  func.func @fused_pipeline_kernel(%arg0: i32, %arg1: memref<2x16xi32, #tpu.memory_space<smem>>, %arg2: memref<1x1x16xf32, #tpu.memory_space<vmem>>, %arg3: memref<100x32xf32, #tpu.memory_space<any>>, %arg4: memref<32x96xbf16, #tpu.memory_space<vmem>>, %arg5: memref<32x32xbf16, #tpu.memory_space<vmem>>, %arg6: memref<32x64xbf16, #tpu.memory_space<vmem>>, %arg7: memref<1x64xf32, #tpu.memory_space<vmem>>, %arg8: memref<64x32xbf16, #tpu.memory_space<vmem>>, %arg9: memref<1x32xf32, #tpu.memory_space<vmem>>, %arg10: memref<1x32xf32, #tpu.memory_space<vmem>>, %arg11: memref<1x32xf32, #tpu.memory_space<vmem>>, %arg12: memref<1x32xf32, #tpu.memory_space<vmem>>, %arg13: memref<1x32xf32, #tpu.memory_space<vmem>>, %arg14: memref<32x3xbf16, #tpu.memory_space<vmem>>, %arg15: memref<1x3xf32, #tpu.memory_space<vmem>>, %arg16: memref<1x16x32xf32, #tpu.memory_space<vmem>>, %arg17: memref<1x1x3xf32, #tpu.memory_space<vmem>>, %arg18: memref<16x32xf32, #tpu.memory_space<vmem>>, %arg19: memref<16x!tpu.dma_semaphore, #tpu.memory_space<semaphore_mem>>) attributes {dimension_semantics = [#tpu.dimension_semantics<parallel>], iteration_bounds = array<i64: 2>, scalar_prefetch = 1 : i64, scratch_operands = 2 : i64, tpu.core_type = #tpu.core_type<tc>, window_params = [{transform_indices = @transform_0, window_bounds = array<i64: 1, 1, 16>}, {}, {pipeline_mode = #tpu.pipeline_mode<synchronous>, transform_indices = @transform_2, window_bounds = array<i64: 32, 96>}, {pipeline_mode = #tpu.pipeline_mode<synchronous>, transform_indices = @transform_3, window_bounds = array<i64: 32, 32>}, {pipeline_mode = #tpu.pipeline_mode<synchronous>, transform_indices = @transform_4, window_bounds = array<i64: 32, 64>}, {pipeline_mode = #tpu.pipeline_mode<synchronous>, transform_indices = @transform_5, window_bounds = array<i64: 1, 64>}, {pipeline_mode = #tpu.pipeline_mode<synchronous>, transform_indices = @transform_6, window_bounds = array<i64: 64, 32>}, {pipeline_mode = #tpu.pipeline_mode<synchronous>, transform_indices = @transform_7, window_bounds = array<i64: 1, 32>}, {pipeline_mode = #tpu.pipeline_mode<synchronous>, transform_indices = @transform_8, window_bounds = array<i64: 1, 32>}, {pipeline_mode = #tpu.pipeline_mode<synchronous>, transform_indices = @transform_9, window_bounds = array<i64: 1, 32>}, {pipeline_mode = #tpu.pipeline_mode<synchronous>, transform_indices = @transform_10, window_bounds = array<i64: 1, 32>}, {pipeline_mode = #tpu.pipeline_mode<synchronous>, transform_indices = @transform_11, window_bounds = array<i64: 1, 32>}, {pipeline_mode = #tpu.pipeline_mode<synchronous>, transform_indices = @transform_12, window_bounds = array<i64: 32, 3>}, {pipeline_mode = #tpu.pipeline_mode<synchronous>, transform_indices = @transform_13, window_bounds = array<i64: 1, 3>}, {transform_indices = @transform_14, window_bounds = array<i64: 1, 16, 32>}, {transform_indices = @transform_15, window_bounds = array<i64: 1, 1, 3>}]} {
    %c0_i32 = arith.constant 0 : i32
    %c1_i32 = arith.constant 1 : i32
    %0 = arith.muli %c0_i32, %c1_i32 : i32
    %c0_i32_0 = arith.constant 0 : i32
    %1 = arith.addi %c0_i32_0, %0 : i32
    %2 = arith.index_cast %arg0 : i32 to index
    %3 = arith.index_cast %1 : i32 to index
    %4 = memref.load %arg1[%2, %3] : memref<2x16xi32, #tpu.memory_space<smem>>
    %c0_i32_1 = arith.constant 0 : i32
    %5 = tpu.memref_slice %arg3[%4, %c0_i32_1] : memref<100x32xf32, #tpu.memory_space<any>> -> memref<1x32xf32, #tpu.memory_space<any>>
    %c0_i32_2 = arith.constant 0 : i32
    %6 = tpu.memref_slice %arg18[%1, %c0_i32_2] : memref<16x32xf32, #tpu.memory_space<vmem>> -> memref<1x32xf32, #tpu.memory_space<vmem>>
    %7 = tpu.memref_slice %arg19[%1] : memref<16x!tpu.dma_semaphore, #tpu.memory_space<semaphore_mem>> -> memref<1x!tpu.dma_semaphore, #tpu.memory_space<semaphore_mem>>
    %8 = tpu.memref_squeeze %7 : memref<1x!tpu.dma_semaphore, #tpu.memory_space<semaphore_mem>> -> memref<!tpu.dma_semaphore, #tpu.memory_space<semaphore_mem>>
    tpu.enqueue_dma source(%5 : memref<1x32xf32, #tpu.memory_space<any>>) target(%6 : memref<1x32xf32, #tpu.memory_space<vmem>>) target_semaphore(%8 : memref<!tpu.dma_semaphore, #tpu.memory_space<semaphore_mem>>)
    %c1_i32_3 = arith.constant 1 : i32
    %c1_i32_4 = arith.constant 1 : i32
    %9 = arith.muli %c1_i32_3, %c1_i32_4 : i32
    %c0_i32_5 = arith.constant 0 : i32
    %10 = arith.addi %c0_i32_5, %9 : i32
    %11 = arith.index_cast %arg0 : i32 to index
    %12 = arith.index_cast %10 : i32 to index
    %13 = memref.load %arg1[%11, %12] : memref<2x16xi32, #tpu.memory_space<smem>>
    %c0_i32_6 = arith.constant 0 : i32
    %14 = tpu.memref_slice %arg3[%13, %c0_i32_6] : memref<100x32xf32, #tpu.memory_space<any>> -> memref<1x32xf32, #tpu.memory_space<any>>
    %c0_i32_7 = arith.constant 0 : i32
    %15 = tpu.memref_slice %arg18[%10, %c0_i32_7] : memref<16x32xf32, #tpu.memory_space<vmem>> -> memref<1x32xf32, #tpu.memory_space<vmem>>
    %16 = tpu.memref_slice %arg19[%10] : memref<16x!tpu.dma_semaphore, #tpu.memory_space<semaphore_mem>> -> memref<1x!tpu.dma_semaphore, #tpu.memory_space<semaphore_mem>>
    %17 = tpu.memref_squeeze %16 : memref<1x!tpu.dma_semaphore, #tpu.memory_space<semaphore_mem>> -> memref<!tpu.dma_semaphore, #tpu.memory_space<semaphore_mem>>
    tpu.enqueue_dma source(%14 : memref<1x32xf32, #tpu.memory_space<any>>) target(%15 : memref<1x32xf32, #tpu.memory_space<vmem>>) target_semaphore(%17 : memref<!tpu.dma_semaphore, #tpu.memory_space<semaphore_mem>>)
    %c2_i32 = arith.constant 2 : i32
    %c1_i32_8 = arith.constant 1 : i32
    %18 = arith.muli %c2_i32, %c1_i32_8 : i32
    %c0_i32_9 = arith.constant 0 : i32
    %19 = arith.addi %c0_i32_9, %18 : i32
    %20 = arith.index_cast %arg0 : i32 to index
    %21 = arith.index_cast %19 : i32 to index
    %22 = memref.load %arg1[%20, %21] : memref<2x16xi32, #tpu.memory_space<smem>>
    %c0_i32_10 = arith.constant 0 : i32
    %23 = tpu.memref_slice %arg3[%22, %c0_i32_10] : memref<100x32xf32, #tpu.memory_space<any>> -> memref<1x32xf32, #tpu.memory_space<any>>
    %c0_i32_11 = arith.constant 0 : i32
    %24 = tpu.memref_slice %arg18[%19, %c0_i32_11] : memref<16x32xf32, #tpu.memory_space<vmem>> -> memref<1x32xf32, #tpu.memory_space<vmem>>
    %25 = tpu.memref_slice %arg19[%19] : memref<16x!tpu.dma_semaphore, #tpu.memory_space<semaphore_mem>> -> memref<1x!tpu.dma_semaphore, #tpu.memory_space<semaphore_mem>>
    %26 = tpu.memref_squeeze %25 : memref<1x!tpu.dma_semaphore, #tpu.memory_space<semaphore_mem>> -> memref<!tpu.dma_semaphore, #tpu.memory_space<semaphore_mem>>
    tpu.enqueue_dma source(%23 : memref<1x32xf32, #tpu.memory_space<any>>) target(%24 : memref<1x32xf32, #tpu.memory_space<vmem>>) target_semaphore(%26 : memref<!tpu.dma_semaphore, #tpu.memory_space<semaphore_mem>>)
    %c3_i32 = arith.constant 3 : i32
    %c1_i32_12 = arith.constant 1 : i32
    %27 = arith.muli %c3_i32, %c1_i32_12 : i32
    %c0_i32_13 = arith.constant 0 : i32
    %28 = arith.addi %c0_i32_13, %27 : i32
    %29 = arith.index_cast %arg0 : i32 to index
    %30 = arith.index_cast %28 : i32 to index
    %31 = memref.load %arg1[%29, %30] : memref<2x16xi32, #tpu.memory_space<smem>>
    %c0_i32_14 = arith.constant 0 : i32
    %32 = tpu.memref_slice %arg3[%31, %c0_i32_14] : memref<100x32xf32, #tpu.memory_space<any>> -> memref<1x32xf32, #tpu.memory_space<any>>
    %c0_i32_15 = arith.constant 0 : i32
    %33 = tpu.memref_slice %arg18[%28, %c0_i32_15] : memref<16x32xf32, #tpu.memory_space<vmem>> -> memref<1x32xf32, #tpu.memory_space<vmem>>
    %34 = tpu.memref_slice %arg19[%28] : memref<16x!tpu.dma_semaphore, #tpu.memory_space<semaphore_mem>> -> memref<1x!tpu.dma_semaphore, #tpu.memory_space<semaphore_mem>>
    %35 = tpu.memref_squeeze %34 : memref<1x!tpu.dma_semaphore, #tpu.memory_space<semaphore_mem>> -> memref<!tpu.dma_semaphore, #tpu.memory_space<semaphore_mem>>
    tpu.enqueue_dma source(%32 : memref<1x32xf32, #tpu.memory_space<any>>) target(%33 : memref<1x32xf32, #tpu.memory_space<vmem>>) target_semaphore(%35 : memref<!tpu.dma_semaphore, #tpu.memory_space<semaphore_mem>>)
    %c4_i32 = arith.constant 4 : i32
    %c1_i32_16 = arith.constant 1 : i32
    %36 = arith.muli %c4_i32, %c1_i32_16 : i32
    %c0_i32_17 = arith.constant 0 : i32
    %37 = arith.addi %c0_i32_17, %36 : i32
    %38 = arith.index_cast %arg0 : i32 to index
    %39 = arith.index_cast %37 : i32 to index
    %40 = memref.load %arg1[%38, %39] : memref<2x16xi32, #tpu.memory_space<smem>>
    %c0_i32_18 = arith.constant 0 : i32
    %41 = tpu.memref_slice %arg3[%40, %c0_i32_18] : memref<100x32xf32, #tpu.memory_space<any>> -> memref<1x32xf32, #tpu.memory_space<any>>
    %c0_i32_19 = arith.constant 0 : i32
    %42 = tpu.memref_slice %arg18[%37, %c0_i32_19] : memref<16x32xf32, #tpu.memory_space<vmem>> -> memref<1x32xf32, #tpu.memory_space<vmem>>
    %43 = tpu.memref_slice %arg19[%37] : memref<16x!tpu.dma_semaphore, #tpu.memory_space<semaphore_mem>> -> memref<1x!tpu.dma_semaphore, #tpu.memory_space<semaphore_mem>>
    %44 = tpu.memref_squeeze %43 : memref<1x!tpu.dma_semaphore, #tpu.memory_space<semaphore_mem>> -> memref<!tpu.dma_semaphore, #tpu.memory_space<semaphore_mem>>
    tpu.enqueue_dma source(%41 : memref<1x32xf32, #tpu.memory_space<any>>) target(%42 : memref<1x32xf32, #tpu.memory_space<vmem>>) target_semaphore(%44 : memref<!tpu.dma_semaphore, #tpu.memory_space<semaphore_mem>>)
    %c5_i32 = arith.constant 5 : i32
    %c1_i32_20 = arith.constant 1 : i32
    %45 = arith.muli %c5_i32, %c1_i32_20 : i32
    %c0_i32_21 = arith.constant 0 : i32
    %46 = arith.addi %c0_i32_21, %45 : i32
    %47 = arith.index_cast %arg0 : i32 to index
    %48 = arith.index_cast %46 : i32 to index
    %49 = memref.load %arg1[%47, %48] : memref<2x16xi32, #tpu.memory_space<smem>>
    %c0_i32_22 = arith.constant 0 : i32
    %50 = tpu.memref_slice %arg3[%49, %c0_i32_22] : memref<100x32xf32, #tpu.memory_space<any>> -> memref<1x32xf32, #tpu.memory_space<any>>
    %c0_i32_23 = arith.constant 0 : i32
    %51 = tpu.memref_slice %arg18[%46, %c0_i32_23] : memref<16x32xf32, #tpu.memory_space<vmem>> -> memref<1x32xf32, #tpu.memory_space<vmem>>
    %52 = tpu.memref_slice %arg19[%46] : memref<16x!tpu.dma_semaphore, #tpu.memory_space<semaphore_mem>> -> memref<1x!tpu.dma_semaphore, #tpu.memory_space<semaphore_mem>>
    %53 = tpu.memref_squeeze %52 : memref<1x!tpu.dma_semaphore, #tpu.memory_space<semaphore_mem>> -> memref<!tpu.dma_semaphore, #tpu.memory_space<semaphore_mem>>
    tpu.enqueue_dma source(%50 : memref<1x32xf32, #tpu.memory_space<any>>) target(%51 : memref<1x32xf32, #tpu.memory_space<vmem>>) target_semaphore(%53 : memref<!tpu.dma_semaphore, #tpu.memory_space<semaphore_mem>>)
    %c6_i32 = arith.constant 6 : i32
    %c1_i32_24 = arith.constant 1 : i32
    %54 = arith.muli %c6_i32, %c1_i32_24 : i32
    %c0_i32_25 = arith.constant 0 : i32
    %55 = arith.addi %c0_i32_25, %54 : i32
    %56 = arith.index_cast %arg0 : i32 to index
    %57 = arith.index_cast %55 : i32 to index
    %58 = memref.load %arg1[%56, %57] : memref<2x16xi32, #tpu.memory_space<smem>>
    %c0_i32_26 = arith.constant 0 : i32
    %59 = tpu.memref_slice %arg3[%58, %c0_i32_26] : memref<100x32xf32, #tpu.memory_space<any>> -> memref<1x32xf32, #tpu.memory_space<any>>
    %c0_i32_27 = arith.constant 0 : i32
    %60 = tpu.memref_slice %arg18[%55, %c0_i32_27] : memref<16x32xf32, #tpu.memory_space<vmem>> -> memref<1x32xf32, #tpu.memory_space<vmem>>
    %61 = tpu.memref_slice %arg19[%55] : memref<16x!tpu.dma_semaphore, #tpu.memory_space<semaphore_mem>> -> memref<1x!tpu.dma_semaphore, #tpu.memory_space<semaphore_mem>>
    %62 = tpu.memref_squeeze %61 : memref<1x!tpu.dma_semaphore, #tpu.memory_space<semaphore_mem>> -> memref<!tpu.dma_semaphore, #tpu.memory_space<semaphore_mem>>
    tpu.enqueue_dma source(%59 : memref<1x32xf32, #tpu.memory_space<any>>) target(%60 : memref<1x32xf32, #tpu.memory_space<vmem>>) target_semaphore(%62 : memref<!tpu.dma_semaphore, #tpu.memory_space<semaphore_mem>>)
    %c7_i32 = arith.constant 7 : i32
    %c1_i32_28 = arith.constant 1 : i32
    %63 = arith.muli %c7_i32, %c1_i32_28 : i32
    %c0_i32_29 = arith.constant 0 : i32
    %64 = arith.addi %c0_i32_29, %63 : i32
    %65 = arith.index_cast %arg0 : i32 to index
    %66 = arith.index_cast %64 : i32 to index
    %67 = memref.load %arg1[%65, %66] : memref<2x16xi32, #tpu.memory_space<smem>>
    %c0_i32_30 = arith.constant 0 : i32
    %68 = tpu.memref_slice %arg3[%67, %c0_i32_30] : memref<100x32xf32, #tpu.memory_space<any>> -> memref<1x32xf32, #tpu.memory_space<any>>
    %c0_i32_31 = arith.constant 0 : i32
    %69 = tpu.memref_slice %arg18[%64, %c0_i32_31] : memref<16x32xf32, #tpu.memory_space<vmem>> -> memref<1x32xf32, #tpu.memory_space<vmem>>
    %70 = tpu.memref_slice %arg19[%64] : memref<16x!tpu.dma_semaphore, #tpu.memory_space<semaphore_mem>> -> memref<1x!tpu.dma_semaphore, #tpu.memory_space<semaphore_mem>>
    %71 = tpu.memref_squeeze %70 : memref<1x!tpu.dma_semaphore, #tpu.memory_space<semaphore_mem>> -> memref<!tpu.dma_semaphore, #tpu.memory_space<semaphore_mem>>
    tpu.enqueue_dma source(%68 : memref<1x32xf32, #tpu.memory_space<any>>) target(%69 : memref<1x32xf32, #tpu.memory_space<vmem>>) target_semaphore(%71 : memref<!tpu.dma_semaphore, #tpu.memory_space<semaphore_mem>>)
    %c8_i32 = arith.constant 8 : i32
    %c1_i32_32 = arith.constant 1 : i32
    %72 = arith.muli %c8_i32, %c1_i32_32 : i32
    %c0_i32_33 = arith.constant 0 : i32
    %73 = arith.addi %c0_i32_33, %72 : i32
    %74 = arith.index_cast %arg0 : i32 to index
    %75 = arith.index_cast %73 : i32 to index
    %76 = memref.load %arg1[%74, %75] : memref<2x16xi32, #tpu.memory_space<smem>>
    %c0_i32_34 = arith.constant 0 : i32
    %77 = tpu.memref_slice %arg3[%76, %c0_i32_34] : memref<100x32xf32, #tpu.memory_space<any>> -> memref<1x32xf32, #tpu.memory_space<any>>
    %c0_i32_35 = arith.constant 0 : i32
    %78 = tpu.memref_slice %arg18[%73, %c0_i32_35] : memref<16x32xf32, #tpu.memory_space<vmem>> -> memref<1x32xf32, #tpu.memory_space<vmem>>
    %79 = tpu.memref_slice %arg19[%73] : memref<16x!tpu.dma_semaphore, #tpu.memory_space<semaphore_mem>> -> memref<1x!tpu.dma_semaphore, #tpu.memory_space<semaphore_mem>>
    %80 = tpu.memref_squeeze %79 : memref<1x!tpu.dma_semaphore, #tpu.memory_space<semaphore_mem>> -> memref<!tpu.dma_semaphore, #tpu.memory_space<semaphore_mem>>
    tpu.enqueue_dma source(%77 : memref<1x32xf32, #tpu.memory_space<any>>) target(%78 : memref<1x32xf32, #tpu.memory_space<vmem>>) target_semaphore(%80 : memref<!tpu.dma_semaphore, #tpu.memory_space<semaphore_mem>>)
    %c9_i32 = arith.constant 9 : i32
    %c1_i32_36 = arith.constant 1 : i32
    %81 = arith.muli %c9_i32, %c1_i32_36 : i32
    %c0_i32_37 = arith.constant 0 : i32
    %82 = arith.addi %c0_i32_37, %81 : i32
    %83 = arith.index_cast %arg0 : i32 to index
    %84 = arith.index_cast %82 : i32 to index
    %85 = memref.load %arg1[%83, %84] : memref<2x16xi32, #tpu.memory_space<smem>>
    %c0_i32_38 = arith.constant 0 : i32
    %86 = tpu.memref_slice %arg3[%85, %c0_i32_38] : memref<100x32xf32, #tpu.memory_space<any>> -> memref<1x32xf32, #tpu.memory_space<any>>
    %c0_i32_39 = arith.constant 0 : i32
    %87 = tpu.memref_slice %arg18[%82, %c0_i32_39] : memref<16x32xf32, #tpu.memory_space<vmem>> -> memref<1x32xf32, #tpu.memory_space<vmem>>
    %88 = tpu.memref_slice %arg19[%82] : memref<16x!tpu.dma_semaphore, #tpu.memory_space<semaphore_mem>> -> memref<1x!tpu.dma_semaphore, #tpu.memory_space<semaphore_mem>>
    %89 = tpu.memref_squeeze %88 : memref<1x!tpu.dma_semaphore, #tpu.memory_space<semaphore_mem>> -> memref<!tpu.dma_semaphore, #tpu.memory_space<semaphore_mem>>
    tpu.enqueue_dma source(%86 : memref<1x32xf32, #tpu.memory_space<any>>) target(%87 : memref<1x32xf32, #tpu.memory_space<vmem>>) target_semaphore(%89 : memref<!tpu.dma_semaphore, #tpu.memory_space<semaphore_mem>>)
    %c10_i32 = arith.constant 10 : i32
    %c1_i32_40 = arith.constant 1 : i32
    %90 = arith.muli %c10_i32, %c1_i32_40 : i32
    %c0_i32_41 = arith.constant 0 : i32
    %91 = arith.addi %c0_i32_41, %90 : i32
    %92 = arith.index_cast %arg0 : i32 to index
    %93 = arith.index_cast %91 : i32 to index
    %94 = memref.load %arg1[%92, %93] : memref<2x16xi32, #tpu.memory_space<smem>>
    %c0_i32_42 = arith.constant 0 : i32
    %95 = tpu.memref_slice %arg3[%94, %c0_i32_42] : memref<100x32xf32, #tpu.memory_space<any>> -> memref<1x32xf32, #tpu.memory_space<any>>
    %c0_i32_43 = arith.constant 0 : i32
    %96 = tpu.memref_slice %arg18[%91, %c0_i32_43] : memref<16x32xf32, #tpu.memory_space<vmem>> -> memref<1x32xf32, #tpu.memory_space<vmem>>
    %97 = tpu.memref_slice %arg19[%91] : memref<16x!tpu.dma_semaphore, #tpu.memory_space<semaphore_mem>> -> memref<1x!tpu.dma_semaphore, #tpu.memory_space<semaphore_mem>>
    %98 = tpu.memref_squeeze %97 : memref<1x!tpu.dma_semaphore, #tpu.memory_space<semaphore_mem>> -> memref<!tpu.dma_semaphore, #tpu.memory_space<semaphore_mem>>
    tpu.enqueue_dma source(%95 : memref<1x32xf32, #tpu.memory_space<any>>) target(%96 : memref<1x32xf32, #tpu.memory_space<vmem>>) target_semaphore(%98 : memref<!tpu.dma_semaphore, #tpu.memory_space<semaphore_mem>>)
    %c11_i32 = arith.constant 11 : i32
    %c1_i32_44 = arith.constant 1 : i32
    %99 = arith.muli %c11_i32, %c1_i32_44 : i32
    %c0_i32_45 = arith.constant 0 : i32
    %100 = arith.addi %c0_i32_45, %99 : i32
    %101 = arith.index_cast %arg0 : i32 to index
    %102 = arith.index_cast %100 : i32 to index
    %103 = memref.load %arg1[%101, %102] : memref<2x16xi32, #tpu.memory_space<smem>>
    %c0_i32_46 = arith.constant 0 : i32
    %104 = tpu.memref_slice %arg3[%103, %c0_i32_46] : memref<100x32xf32, #tpu.memory_space<any>> -> memref<1x32xf32, #tpu.memory_space<any>>
    %c0_i32_47 = arith.constant 0 : i32
    %105 = tpu.memref_slice %arg18[%100, %c0_i32_47] : memref<16x32xf32, #tpu.memory_space<vmem>> -> memref<1x32xf32, #tpu.memory_space<vmem>>
    %106 = tpu.memref_slice %arg19[%100] : memref<16x!tpu.dma_semaphore, #tpu.memory_space<semaphore_mem>> -> memref<1x!tpu.dma_semaphore, #tpu.memory_space<semaphore_mem>>
    %107 = tpu.memref_squeeze %106 : memref<1x!tpu.dma_semaphore, #tpu.memory_space<semaphore_mem>> -> memref<!tpu.dma_semaphore, #tpu.memory_space<semaphore_mem>>
    tpu.enqueue_dma source(%104 : memref<1x32xf32, #tpu.memory_space<any>>) target(%105 : memref<1x32xf32, #tpu.memory_space<vmem>>) target_semaphore(%107 : memref<!tpu.dma_semaphore, #tpu.memory_space<semaphore_mem>>)
    %c12_i32 = arith.constant 12 : i32
    %c1_i32_48 = arith.constant 1 : i32
    %108 = arith.muli %c12_i32, %c1_i32_48 : i32
    %c0_i32_49 = arith.constant 0 : i32
    %109 = arith.addi %c0_i32_49, %108 : i32
    %110 = arith.index_cast %arg0 : i32 to index
    %111 = arith.index_cast %109 : i32 to index
    %112 = memref.load %arg1[%110, %111] : memref<2x16xi32, #tpu.memory_space<smem>>
    %c0_i32_50 = arith.constant 0 : i32
    %113 = tpu.memref_slice %arg3[%112, %c0_i32_50] : memref<100x32xf32, #tpu.memory_space<any>> -> memref<1x32xf32, #tpu.memory_space<any>>
    %c0_i32_51 = arith.constant 0 : i32
    %114 = tpu.memref_slice %arg18[%109, %c0_i32_51] : memref<16x32xf32, #tpu.memory_space<vmem>> -> memref<1x32xf32, #tpu.memory_space<vmem>>
    %115 = tpu.memref_slice %arg19[%109] : memref<16x!tpu.dma_semaphore, #tpu.memory_space<semaphore_mem>> -> memref<1x!tpu.dma_semaphore, #tpu.memory_space<semaphore_mem>>
    %116 = tpu.memref_squeeze %115 : memref<1x!tpu.dma_semaphore, #tpu.memory_space<semaphore_mem>> -> memref<!tpu.dma_semaphore, #tpu.memory_space<semaphore_mem>>
    tpu.enqueue_dma source(%113 : memref<1x32xf32, #tpu.memory_space<any>>) target(%114 : memref<1x32xf32, #tpu.memory_space<vmem>>) target_semaphore(%116 : memref<!tpu.dma_semaphore, #tpu.memory_space<semaphore_mem>>)
    %c13_i32 = arith.constant 13 : i32
    %c1_i32_52 = arith.constant 1 : i32
    %117 = arith.muli %c13_i32, %c1_i32_52 : i32
    %c0_i32_53 = arith.constant 0 : i32
    %118 = arith.addi %c0_i32_53, %117 : i32
    %119 = arith.index_cast %arg0 : i32 to index
    %120 = arith.index_cast %118 : i32 to index
    %121 = memref.load %arg1[%119, %120] : memref<2x16xi32, #tpu.memory_space<smem>>
    %c0_i32_54 = arith.constant 0 : i32
    %122 = tpu.memref_slice %arg3[%121, %c0_i32_54] : memref<100x32xf32, #tpu.memory_space<any>> -> memref<1x32xf32, #tpu.memory_space<any>>
    %c0_i32_55 = arith.constant 0 : i32
    %123 = tpu.memref_slice %arg18[%118, %c0_i32_55] : memref<16x32xf32, #tpu.memory_space<vmem>> -> memref<1x32xf32, #tpu.memory_space<vmem>>
    %124 = tpu.memref_slice %arg19[%118] : memref<16x!tpu.dma_semaphore, #tpu.memory_space<semaphore_mem>> -> memref<1x!tpu.dma_semaphore, #tpu.memory_space<semaphore_mem>>
    %125 = tpu.memref_squeeze %124 : memref<1x!tpu.dma_semaphore, #tpu.memory_space<semaphore_mem>> -> memref<!tpu.dma_semaphore, #tpu.memory_space<semaphore_mem>>
    tpu.enqueue_dma source(%122 : memref<1x32xf32, #tpu.memory_space<any>>) target(%123 : memref<1x32xf32, #tpu.memory_space<vmem>>) target_semaphore(%125 : memref<!tpu.dma_semaphore, #tpu.memory_space<semaphore_mem>>)
    %c14_i32 = arith.constant 14 : i32
    %c1_i32_56 = arith.constant 1 : i32
    %126 = arith.muli %c14_i32, %c1_i32_56 : i32
    %c0_i32_57 = arith.constant 0 : i32
    %127 = arith.addi %c0_i32_57, %126 : i32
    %128 = arith.index_cast %arg0 : i32 to index
    %129 = arith.index_cast %127 : i32 to index
    %130 = memref.load %arg1[%128, %129] : memref<2x16xi32, #tpu.memory_space<smem>>
    %c0_i32_58 = arith.constant 0 : i32
    %131 = tpu.memref_slice %arg3[%130, %c0_i32_58] : memref<100x32xf32, #tpu.memory_space<any>> -> memref<1x32xf32, #tpu.memory_space<any>>
    %c0_i32_59 = arith.constant 0 : i32
    %132 = tpu.memref_slice %arg18[%127, %c0_i32_59] : memref<16x32xf32, #tpu.memory_space<vmem>> -> memref<1x32xf32, #tpu.memory_space<vmem>>
    %133 = tpu.memref_slice %arg19[%127] : memref<16x!tpu.dma_semaphore, #tpu.memory_space<semaphore_mem>> -> memref<1x!tpu.dma_semaphore, #tpu.memory_space<semaphore_mem>>
    %134 = tpu.memref_squeeze %133 : memref<1x!tpu.dma_semaphore, #tpu.memory_space<semaphore_mem>> -> memref<!tpu.dma_semaphore, #tpu.memory_space<semaphore_mem>>
    tpu.enqueue_dma source(%131 : memref<1x32xf32, #tpu.memory_space<any>>) target(%132 : memref<1x32xf32, #tpu.memory_space<vmem>>) target_semaphore(%134 : memref<!tpu.dma_semaphore, #tpu.memory_space<semaphore_mem>>)
    %c15_i32 = arith.constant 15 : i32
    %c1_i32_60 = arith.constant 1 : i32
    %135 = arith.muli %c15_i32, %c1_i32_60 : i32
    %c0_i32_61 = arith.constant 0 : i32
    %136 = arith.addi %c0_i32_61, %135 : i32
    %137 = arith.index_cast %arg0 : i32 to index
    %138 = arith.index_cast %136 : i32 to index
    %139 = memref.load %arg1[%137, %138] : memref<2x16xi32, #tpu.memory_space<smem>>
    %c0_i32_62 = arith.constant 0 : i32
    %140 = tpu.memref_slice %arg3[%139, %c0_i32_62] : memref<100x32xf32, #tpu.memory_space<any>> -> memref<1x32xf32, #tpu.memory_space<any>>
    %c0_i32_63 = arith.constant 0 : i32
    %141 = tpu.memref_slice %arg18[%136, %c0_i32_63] : memref<16x32xf32, #tpu.memory_space<vmem>> -> memref<1x32xf32, #tpu.memory_space<vmem>>
    %142 = tpu.memref_slice %arg19[%136] : memref<16x!tpu.dma_semaphore, #tpu.memory_space<semaphore_mem>> -> memref<1x!tpu.dma_semaphore, #tpu.memory_space<semaphore_mem>>
    %143 = tpu.memref_squeeze %142 : memref<1x!tpu.dma_semaphore, #tpu.memory_space<semaphore_mem>> -> memref<!tpu.dma_semaphore, #tpu.memory_space<semaphore_mem>>
    tpu.enqueue_dma source(%140 : memref<1x32xf32, #tpu.memory_space<any>>) target(%141 : memref<1x32xf32, #tpu.memory_space<vmem>>) target_semaphore(%143 : memref<!tpu.dma_semaphore, #tpu.memory_space<semaphore_mem>>)
    %c16_i32 = arith.constant 16 : i32
    %c0_i32_64 = arith.constant 0 : i32
    %c1_i32_65 = arith.constant 1 : i32
    %144 = arith.muli %c0_i32_64, %c1_i32_65 : i32
    %c0_i32_66 = arith.constant 0 : i32
    %145 = arith.addi %c0_i32_66, %144 : i32
    %c0_i32_67 = arith.constant 0 : i32
    %c0_i32_68 = arith.constant 0 : i32
    %146 = tpu.memref_slice %arg3[%c0_i32_67, %c0_i32_68] : memref<100x32xf32, #tpu.memory_space<any>> -> memref<1x32xf32, #tpu.memory_space<any>>
    %c0_i32_69 = arith.constant 0 : i32
    %147 = tpu.memref_slice %arg18[%145, %c0_i32_69] : memref<16x32xf32, #tpu.memory_space<vmem>> -> memref<1x32xf32, #tpu.memory_space<vmem>>
    %148 = tpu.memref_slice %arg19[%145] : memref<16x!tpu.dma_semaphore, #tpu.memory_space<semaphore_mem>> -> memref<1x!tpu.dma_semaphore, #tpu.memory_space<semaphore_mem>>
    %149 = tpu.memref_squeeze %148 : memref<1x!tpu.dma_semaphore, #tpu.memory_space<semaphore_mem>> -> memref<!tpu.dma_semaphore, #tpu.memory_space<semaphore_mem>>
    tpu.wait_dma2 semaphore(%149 : memref<!tpu.dma_semaphore, #tpu.memory_space<semaphore_mem>>) src(%146 : memref<1x32xf32, #tpu.memory_space<any>>) dst(%147 : memref<1x32xf32, #tpu.memory_space<vmem>>)
    %c1_i32_70 = arith.constant 1 : i32
    %c1_i32_71 = arith.constant 1 : i32
    %150 = arith.muli %c1_i32_70, %c1_i32_71 : i32
    %c0_i32_72 = arith.constant 0 : i32
    %151 = arith.addi %c0_i32_72, %150 : i32
    %c0_i32_73 = arith.constant 0 : i32
    %c0_i32_74 = arith.constant 0 : i32
    %152 = tpu.memref_slice %arg3[%c0_i32_73, %c0_i32_74] : memref<100x32xf32, #tpu.memory_space<any>> -> memref<1x32xf32, #tpu.memory_space<any>>
    %c0_i32_75 = arith.constant 0 : i32
    %153 = tpu.memref_slice %arg18[%151, %c0_i32_75] : memref<16x32xf32, #tpu.memory_space<vmem>> -> memref<1x32xf32, #tpu.memory_space<vmem>>
    %154 = tpu.memref_slice %arg19[%151] : memref<16x!tpu.dma_semaphore, #tpu.memory_space<semaphore_mem>> -> memref<1x!tpu.dma_semaphore, #tpu.memory_space<semaphore_mem>>
    %155 = tpu.memref_squeeze %154 : memref<1x!tpu.dma_semaphore, #tpu.memory_space<semaphore_mem>> -> memref<!tpu.dma_semaphore, #tpu.memory_space<semaphore_mem>>
    tpu.wait_dma2 semaphore(%155 : memref<!tpu.dma_semaphore, #tpu.memory_space<semaphore_mem>>) src(%152 : memref<1x32xf32, #tpu.memory_space<any>>) dst(%153 : memref<1x32xf32, #tpu.memory_space<vmem>>)
    %c2_i32_76 = arith.constant 2 : i32
    %c1_i32_77 = arith.constant 1 : i32
    %156 = arith.muli %c2_i32_76, %c1_i32_77 : i32
    %c0_i32_78 = arith.constant 0 : i32
    %157 = arith.addi %c0_i32_78, %156 : i32
    %c0_i32_79 = arith.constant 0 : i32
    %c0_i32_80 = arith.constant 0 : i32
    %158 = tpu.memref_slice %arg3[%c0_i32_79, %c0_i32_80] : memref<100x32xf32, #tpu.memory_space<any>> -> memref<1x32xf32, #tpu.memory_space<any>>
    %c0_i32_81 = arith.constant 0 : i32
    %159 = tpu.memref_slice %arg18[%157, %c0_i32_81] : memref<16x32xf32, #tpu.memory_space<vmem>> -> memref<1x32xf32, #tpu.memory_space<vmem>>
    %160 = tpu.memref_slice %arg19[%157] : memref<16x!tpu.dma_semaphore, #tpu.memory_space<semaphore_mem>> -> memref<1x!tpu.dma_semaphore, #tpu.memory_space<semaphore_mem>>
    %161 = tpu.memref_squeeze %160 : memref<1x!tpu.dma_semaphore, #tpu.memory_space<semaphore_mem>> -> memref<!tpu.dma_semaphore, #tpu.memory_space<semaphore_mem>>
    tpu.wait_dma2 semaphore(%161 : memref<!tpu.dma_semaphore, #tpu.memory_space<semaphore_mem>>) src(%158 : memref<1x32xf32, #tpu.memory_space<any>>) dst(%159 : memref<1x32xf32, #tpu.memory_space<vmem>>)
    %c3_i32_82 = arith.constant 3 : i32
    %c1_i32_83 = arith.constant 1 : i32
    %162 = arith.muli %c3_i32_82, %c1_i32_83 : i32
    %c0_i32_84 = arith.constant 0 : i32
    %163 = arith.addi %c0_i32_84, %162 : i32
    %c0_i32_85 = arith.constant 0 : i32
    %c0_i32_86 = arith.constant 0 : i32
    %164 = tpu.memref_slice %arg3[%c0_i32_85, %c0_i32_86] : memref<100x32xf32, #tpu.memory_space<any>> -> memref<1x32xf32, #tpu.memory_space<any>>
    %c0_i32_87 = arith.constant 0 : i32
    %165 = tpu.memref_slice %arg18[%163, %c0_i32_87] : memref<16x32xf32, #tpu.memory_space<vmem>> -> memref<1x32xf32, #tpu.memory_space<vmem>>
    %166 = tpu.memref_slice %arg19[%163] : memref<16x!tpu.dma_semaphore, #tpu.memory_space<semaphore_mem>> -> memref<1x!tpu.dma_semaphore, #tpu.memory_space<semaphore_mem>>
    %167 = tpu.memref_squeeze %166 : memref<1x!tpu.dma_semaphore, #tpu.memory_space<semaphore_mem>> -> memref<!tpu.dma_semaphore, #tpu.memory_space<semaphore_mem>>
    tpu.wait_dma2 semaphore(%167 : memref<!tpu.dma_semaphore, #tpu.memory_space<semaphore_mem>>) src(%164 : memref<1x32xf32, #tpu.memory_space<any>>) dst(%165 : memref<1x32xf32, #tpu.memory_space<vmem>>)
    %c4_i32_88 = arith.constant 4 : i32
    %c1_i32_89 = arith.constant 1 : i32
    %168 = arith.muli %c4_i32_88, %c1_i32_89 : i32
    %c0_i32_90 = arith.constant 0 : i32
    %169 = arith.addi %c0_i32_90, %168 : i32
    %c0_i32_91 = arith.constant 0 : i32
    %c0_i32_92 = arith.constant 0 : i32
    %170 = tpu.memref_slice %arg3[%c0_i32_91, %c0_i32_92] : memref<100x32xf32, #tpu.memory_space<any>> -> memref<1x32xf32, #tpu.memory_space<any>>
    %c0_i32_93 = arith.constant 0 : i32
    %171 = tpu.memref_slice %arg18[%169, %c0_i32_93] : memref<16x32xf32, #tpu.memory_space<vmem>> -> memref<1x32xf32, #tpu.memory_space<vmem>>
    %172 = tpu.memref_slice %arg19[%169] : memref<16x!tpu.dma_semaphore, #tpu.memory_space<semaphore_mem>> -> memref<1x!tpu.dma_semaphore, #tpu.memory_space<semaphore_mem>>
    %173 = tpu.memref_squeeze %172 : memref<1x!tpu.dma_semaphore, #tpu.memory_space<semaphore_mem>> -> memref<!tpu.dma_semaphore, #tpu.memory_space<semaphore_mem>>
    tpu.wait_dma2 semaphore(%173 : memref<!tpu.dma_semaphore, #tpu.memory_space<semaphore_mem>>) src(%170 : memref<1x32xf32, #tpu.memory_space<any>>) dst(%171 : memref<1x32xf32, #tpu.memory_space<vmem>>)
    %c5_i32_94 = arith.constant 5 : i32
    %c1_i32_95 = arith.constant 1 : i32
    %174 = arith.muli %c5_i32_94, %c1_i32_95 : i32
    %c0_i32_96 = arith.constant 0 : i32
    %175 = arith.addi %c0_i32_96, %174 : i32
    %c0_i32_97 = arith.constant 0 : i32
    %c0_i32_98 = arith.constant 0 : i32
    %176 = tpu.memref_slice %arg3[%c0_i32_97, %c0_i32_98] : memref<100x32xf32, #tpu.memory_space<any>> -> memref<1x32xf32, #tpu.memory_space<any>>
    %c0_i32_99 = arith.constant 0 : i32
    %177 = tpu.memref_slice %arg18[%175, %c0_i32_99] : memref<16x32xf32, #tpu.memory_space<vmem>> -> memref<1x32xf32, #tpu.memory_space<vmem>>
    %178 = tpu.memref_slice %arg19[%175] : memref<16x!tpu.dma_semaphore, #tpu.memory_space<semaphore_mem>> -> memref<1x!tpu.dma_semaphore, #tpu.memory_space<semaphore_mem>>
    %179 = tpu.memref_squeeze %178 : memref<1x!tpu.dma_semaphore, #tpu.memory_space<semaphore_mem>> -> memref<!tpu.dma_semaphore, #tpu.memory_space<semaphore_mem>>
    tpu.wait_dma2 semaphore(%179 : memref<!tpu.dma_semaphore, #tpu.memory_space<semaphore_mem>>) src(%176 : memref<1x32xf32, #tpu.memory_space<any>>) dst(%177 : memref<1x32xf32, #tpu.memory_space<vmem>>)
    %c6_i32_100 = arith.constant 6 : i32
    %c1_i32_101 = arith.constant 1 : i32
    %180 = arith.muli %c6_i32_100, %c1_i32_101 : i32
    %c0_i32_102 = arith.constant 0 : i32
    %181 = arith.addi %c0_i32_102, %180 : i32
    %c0_i32_103 = arith.constant 0 : i32
    %c0_i32_104 = arith.constant 0 : i32
    %182 = tpu.memref_slice %arg3[%c0_i32_103, %c0_i32_104] : memref<100x32xf32, #tpu.memory_space<any>> -> memref<1x32xf32, #tpu.memory_space<any>>
    %c0_i32_105 = arith.constant 0 : i32
    %183 = tpu.memref_slice %arg18[%181, %c0_i32_105] : memref<16x32xf32, #tpu.memory_space<vmem>> -> memref<1x32xf32, #tpu.memory_space<vmem>>
    %184 = tpu.memref_slice %arg19[%181] : memref<16x!tpu.dma_semaphore, #tpu.memory_space<semaphore_mem>> -> memref<1x!tpu.dma_semaphore, #tpu.memory_space<semaphore_mem>>
    %185 = tpu.memref_squeeze %184 : memref<1x!tpu.dma_semaphore, #tpu.memory_space<semaphore_mem>> -> memref<!tpu.dma_semaphore, #tpu.memory_space<semaphore_mem>>
    tpu.wait_dma2 semaphore(%185 : memref<!tpu.dma_semaphore, #tpu.memory_space<semaphore_mem>>) src(%182 : memref<1x32xf32, #tpu.memory_space<any>>) dst(%183 : memref<1x32xf32, #tpu.memory_space<vmem>>)
    %c7_i32_106 = arith.constant 7 : i32
    %c1_i32_107 = arith.constant 1 : i32
    %186 = arith.muli %c7_i32_106, %c1_i32_107 : i32
    %c0_i32_108 = arith.constant 0 : i32
    %187 = arith.addi %c0_i32_108, %186 : i32
    %c0_i32_109 = arith.constant 0 : i32
    %c0_i32_110 = arith.constant 0 : i32
    %188 = tpu.memref_slice %arg3[%c0_i32_109, %c0_i32_110] : memref<100x32xf32, #tpu.memory_space<any>> -> memref<1x32xf32, #tpu.memory_space<any>>
    %c0_i32_111 = arith.constant 0 : i32
    %189 = tpu.memref_slice %arg18[%187, %c0_i32_111] : memref<16x32xf32, #tpu.memory_space<vmem>> -> memref<1x32xf32, #tpu.memory_space<vmem>>
    %190 = tpu.memref_slice %arg19[%187] : memref<16x!tpu.dma_semaphore, #tpu.memory_space<semaphore_mem>> -> memref<1x!tpu.dma_semaphore, #tpu.memory_space<semaphore_mem>>
    %191 = tpu.memref_squeeze %190 : memref<1x!tpu.dma_semaphore, #tpu.memory_space<semaphore_mem>> -> memref<!tpu.dma_semaphore, #tpu.memory_space<semaphore_mem>>
    tpu.wait_dma2 semaphore(%191 : memref<!tpu.dma_semaphore, #tpu.memory_space<semaphore_mem>>) src(%188 : memref<1x32xf32, #tpu.memory_space<any>>) dst(%189 : memref<1x32xf32, #tpu.memory_space<vmem>>)
    %c8_i32_112 = arith.constant 8 : i32
    %c1_i32_113 = arith.constant 1 : i32
    %192 = arith.muli %c8_i32_112, %c1_i32_113 : i32
    %c0_i32_114 = arith.constant 0 : i32
    %193 = arith.addi %c0_i32_114, %192 : i32
    %c0_i32_115 = arith.constant 0 : i32
    %c0_i32_116 = arith.constant 0 : i32
    %194 = tpu.memref_slice %arg3[%c0_i32_115, %c0_i32_116] : memref<100x32xf32, #tpu.memory_space<any>> -> memref<1x32xf32, #tpu.memory_space<any>>
    %c0_i32_117 = arith.constant 0 : i32
    %195 = tpu.memref_slice %arg18[%193, %c0_i32_117] : memref<16x32xf32, #tpu.memory_space<vmem>> -> memref<1x32xf32, #tpu.memory_space<vmem>>
    %196 = tpu.memref_slice %arg19[%193] : memref<16x!tpu.dma_semaphore, #tpu.memory_space<semaphore_mem>> -> memref<1x!tpu.dma_semaphore, #tpu.memory_space<semaphore_mem>>
    %197 = tpu.memref_squeeze %196 : memref<1x!tpu.dma_semaphore, #tpu.memory_space<semaphore_mem>> -> memref<!tpu.dma_semaphore, #tpu.memory_space<semaphore_mem>>
    tpu.wait_dma2 semaphore(%197 : memref<!tpu.dma_semaphore, #tpu.memory_space<semaphore_mem>>) src(%194 : memref<1x32xf32, #tpu.memory_space<any>>) dst(%195 : memref<1x32xf32, #tpu.memory_space<vmem>>)
    %c9_i32_118 = arith.constant 9 : i32
    %c1_i32_119 = arith.constant 1 : i32
    %198 = arith.muli %c9_i32_118, %c1_i32_119 : i32
    %c0_i32_120 = arith.constant 0 : i32
    %199 = arith.addi %c0_i32_120, %198 : i32
    %c0_i32_121 = arith.constant 0 : i32
    %c0_i32_122 = arith.constant 0 : i32
    %200 = tpu.memref_slice %arg3[%c0_i32_121, %c0_i32_122] : memref<100x32xf32, #tpu.memory_space<any>> -> memref<1x32xf32, #tpu.memory_space<any>>
    %c0_i32_123 = arith.constant 0 : i32
    %201 = tpu.memref_slice %arg18[%199, %c0_i32_123] : memref<16x32xf32, #tpu.memory_space<vmem>> -> memref<1x32xf32, #tpu.memory_space<vmem>>
    %202 = tpu.memref_slice %arg19[%199] : memref<16x!tpu.dma_semaphore, #tpu.memory_space<semaphore_mem>> -> memref<1x!tpu.dma_semaphore, #tpu.memory_space<semaphore_mem>>
    %203 = tpu.memref_squeeze %202 : memref<1x!tpu.dma_semaphore, #tpu.memory_space<semaphore_mem>> -> memref<!tpu.dma_semaphore, #tpu.memory_space<semaphore_mem>>
    tpu.wait_dma2 semaphore(%203 : memref<!tpu.dma_semaphore, #tpu.memory_space<semaphore_mem>>) src(%200 : memref<1x32xf32, #tpu.memory_space<any>>) dst(%201 : memref<1x32xf32, #tpu.memory_space<vmem>>)
    %c10_i32_124 = arith.constant 10 : i32
    %c1_i32_125 = arith.constant 1 : i32
    %204 = arith.muli %c10_i32_124, %c1_i32_125 : i32
    %c0_i32_126 = arith.constant 0 : i32
    %205 = arith.addi %c0_i32_126, %204 : i32
    %c0_i32_127 = arith.constant 0 : i32
    %c0_i32_128 = arith.constant 0 : i32
    %206 = tpu.memref_slice %arg3[%c0_i32_127, %c0_i32_128] : memref<100x32xf32, #tpu.memory_space<any>> -> memref<1x32xf32, #tpu.memory_space<any>>
    %c0_i32_129 = arith.constant 0 : i32
    %207 = tpu.memref_slice %arg18[%205, %c0_i32_129] : memref<16x32xf32, #tpu.memory_space<vmem>> -> memref<1x32xf32, #tpu.memory_space<vmem>>
    %208 = tpu.memref_slice %arg19[%205] : memref<16x!tpu.dma_semaphore, #tpu.memory_space<semaphore_mem>> -> memref<1x!tpu.dma_semaphore, #tpu.memory_space<semaphore_mem>>
    %209 = tpu.memref_squeeze %208 : memref<1x!tpu.dma_semaphore, #tpu.memory_space<semaphore_mem>> -> memref<!tpu.dma_semaphore, #tpu.memory_space<semaphore_mem>>
    tpu.wait_dma2 semaphore(%209 : memref<!tpu.dma_semaphore, #tpu.memory_space<semaphore_mem>>) src(%206 : memref<1x32xf32, #tpu.memory_space<any>>) dst(%207 : memref<1x32xf32, #tpu.memory_space<vmem>>)
    %c11_i32_130 = arith.constant 11 : i32
    %c1_i32_131 = arith.constant 1 : i32
    %210 = arith.muli %c11_i32_130, %c1_i32_131 : i32
    %c0_i32_132 = arith.constant 0 : i32
    %211 = arith.addi %c0_i32_132, %210 : i32
    %c0_i32_133 = arith.constant 0 : i32
    %c0_i32_134 = arith.constant 0 : i32
    %212 = tpu.memref_slice %arg3[%c0_i32_133, %c0_i32_134] : memref<100x32xf32, #tpu.memory_space<any>> -> memref<1x32xf32, #tpu.memory_space<any>>
    %c0_i32_135 = arith.constant 0 : i32
    %213 = tpu.memref_slice %arg18[%211, %c0_i32_135] : memref<16x32xf32, #tpu.memory_space<vmem>> -> memref<1x32xf32, #tpu.memory_space<vmem>>
    %214 = tpu.memref_slice %arg19[%211] : memref<16x!tpu.dma_semaphore, #tpu.memory_space<semaphore_mem>> -> memref<1x!tpu.dma_semaphore, #tpu.memory_space<semaphore_mem>>
    %215 = tpu.memref_squeeze %214 : memref<1x!tpu.dma_semaphore, #tpu.memory_space<semaphore_mem>> -> memref<!tpu.dma_semaphore, #tpu.memory_space<semaphore_mem>>
    tpu.wait_dma2 semaphore(%215 : memref<!tpu.dma_semaphore, #tpu.memory_space<semaphore_mem>>) src(%212 : memref<1x32xf32, #tpu.memory_space<any>>) dst(%213 : memref<1x32xf32, #tpu.memory_space<vmem>>)
    %c12_i32_136 = arith.constant 12 : i32
    %c1_i32_137 = arith.constant 1 : i32
    %216 = arith.muli %c12_i32_136, %c1_i32_137 : i32
    %c0_i32_138 = arith.constant 0 : i32
    %217 = arith.addi %c0_i32_138, %216 : i32
    %c0_i32_139 = arith.constant 0 : i32
    %c0_i32_140 = arith.constant 0 : i32
    %218 = tpu.memref_slice %arg3[%c0_i32_139, %c0_i32_140] : memref<100x32xf32, #tpu.memory_space<any>> -> memref<1x32xf32, #tpu.memory_space<any>>
    %c0_i32_141 = arith.constant 0 : i32
    %219 = tpu.memref_slice %arg18[%217, %c0_i32_141] : memref<16x32xf32, #tpu.memory_space<vmem>> -> memref<1x32xf32, #tpu.memory_space<vmem>>
    %220 = tpu.memref_slice %arg19[%217] : memref<16x!tpu.dma_semaphore, #tpu.memory_space<semaphore_mem>> -> memref<1x!tpu.dma_semaphore, #tpu.memory_space<semaphore_mem>>
    %221 = tpu.memref_squeeze %220 : memref<1x!tpu.dma_semaphore, #tpu.memory_space<semaphore_mem>> -> memref<!tpu.dma_semaphore, #tpu.memory_space<semaphore_mem>>
    tpu.wait_dma2 semaphore(%221 : memref<!tpu.dma_semaphore, #tpu.memory_space<semaphore_mem>>) src(%218 : memref<1x32xf32, #tpu.memory_space<any>>) dst(%219 : memref<1x32xf32, #tpu.memory_space<vmem>>)
    %c13_i32_142 = arith.constant 13 : i32
    %c1_i32_143 = arith.constant 1 : i32
    %222 = arith.muli %c13_i32_142, %c1_i32_143 : i32
    %c0_i32_144 = arith.constant 0 : i32
    %223 = arith.addi %c0_i32_144, %222 : i32
    %c0_i32_145 = arith.constant 0 : i32
    %c0_i32_146 = arith.constant 0 : i32
    %224 = tpu.memref_slice %arg3[%c0_i32_145, %c0_i32_146] : memref<100x32xf32, #tpu.memory_space<any>> -> memref<1x32xf32, #tpu.memory_space<any>>
    %c0_i32_147 = arith.constant 0 : i32
    %225 = tpu.memref_slice %arg18[%223, %c0_i32_147] : memref<16x32xf32, #tpu.memory_space<vmem>> -> memref<1x32xf32, #tpu.memory_space<vmem>>
    %226 = tpu.memref_slice %arg19[%223] : memref<16x!tpu.dma_semaphore, #tpu.memory_space<semaphore_mem>> -> memref<1x!tpu.dma_semaphore, #tpu.memory_space<semaphore_mem>>
    %227 = tpu.memref_squeeze %226 : memref<1x!tpu.dma_semaphore, #tpu.memory_space<semaphore_mem>> -> memref<!tpu.dma_semaphore, #tpu.memory_space<semaphore_mem>>
    tpu.wait_dma2 semaphore(%227 : memref<!tpu.dma_semaphore, #tpu.memory_space<semaphore_mem>>) src(%224 : memref<1x32xf32, #tpu.memory_space<any>>) dst(%225 : memref<1x32xf32, #tpu.memory_space<vmem>>)
    %c14_i32_148 = arith.constant 14 : i32
    %c1_i32_149 = arith.constant 1 : i32
    %228 = arith.muli %c14_i32_148, %c1_i32_149 : i32
    %c0_i32_150 = arith.constant 0 : i32
    %229 = arith.addi %c0_i32_150, %228 : i32
    %c0_i32_151 = arith.constant 0 : i32
    %c0_i32_152 = arith.constant 0 : i32
    %230 = tpu.memref_slice %arg3[%c0_i32_151, %c0_i32_152] : memref<100x32xf32, #tpu.memory_space<any>> -> memref<1x32xf32, #tpu.memory_space<any>>
    %c0_i32_153 = arith.constant 0 : i32
    %231 = tpu.memref_slice %arg18[%229, %c0_i32_153] : memref<16x32xf32, #tpu.memory_space<vmem>> -> memref<1x32xf32, #tpu.memory_space<vmem>>
    %232 = tpu.memref_slice %arg19[%229] : memref<16x!tpu.dma_semaphore, #tpu.memory_space<semaphore_mem>> -> memref<1x!tpu.dma_semaphore, #tpu.memory_space<semaphore_mem>>
    %233 = tpu.memref_squeeze %232 : memref<1x!tpu.dma_semaphore, #tpu.memory_space<semaphore_mem>> -> memref<!tpu.dma_semaphore, #tpu.memory_space<semaphore_mem>>
    tpu.wait_dma2 semaphore(%233 : memref<!tpu.dma_semaphore, #tpu.memory_space<semaphore_mem>>) src(%230 : memref<1x32xf32, #tpu.memory_space<any>>) dst(%231 : memref<1x32xf32, #tpu.memory_space<vmem>>)
    %c15_i32_154 = arith.constant 15 : i32
    %c1_i32_155 = arith.constant 1 : i32
    %234 = arith.muli %c15_i32_154, %c1_i32_155 : i32
    %c0_i32_156 = arith.constant 0 : i32
    %235 = arith.addi %c0_i32_156, %234 : i32
    %c0_i32_157 = arith.constant 0 : i32
    %c0_i32_158 = arith.constant 0 : i32
    %236 = tpu.memref_slice %arg3[%c0_i32_157, %c0_i32_158] : memref<100x32xf32, #tpu.memory_space<any>> -> memref<1x32xf32, #tpu.memory_space<any>>
    %c0_i32_159 = arith.constant 0 : i32
    %237 = tpu.memref_slice %arg18[%235, %c0_i32_159] : memref<16x32xf32, #tpu.memory_space<vmem>> -> memref<1x32xf32, #tpu.memory_space<vmem>>
    %238 = tpu.memref_slice %arg19[%235] : memref<16x!tpu.dma_semaphore, #tpu.memory_space<semaphore_mem>> -> memref<1x!tpu.dma_semaphore, #tpu.memory_space<semaphore_mem>>
    %239 = tpu.memref_squeeze %238 : memref<1x!tpu.dma_semaphore, #tpu.memory_space<semaphore_mem>> -> memref<!tpu.dma_semaphore, #tpu.memory_space<semaphore_mem>>
    tpu.wait_dma2 semaphore(%239 : memref<!tpu.dma_semaphore, #tpu.memory_space<semaphore_mem>>) src(%236 : memref<1x32xf32, #tpu.memory_space<any>>) dst(%237 : memref<1x32xf32, #tpu.memory_space<vmem>>)
    %c16_i32_160 = arith.constant 16 : i32
    %c0 = arith.constant 0 : index
    %c0_161 = arith.constant 0 : index
    %240 = vector.load %arg18[%c0, %c0_161] : memref<16x32xf32, #tpu.memory_space<vmem>>, vector<16x32xf32>
    %c0_162 = arith.constant 0 : index
    %c0_163 = arith.constant 0 : index
    %c0_164 = arith.constant 0 : index
    %241 = vector.load %arg2[%c0_162, %c0_163, %c0_164] : memref<1x1x16xf32, #tpu.memory_space<vmem>>, vector<1x1x16xf32>
    %242 = vector.shape_cast %241 : vector<1x1x16xf32> to vector<1x16xf32>
    %cst = arith.constant 1.000000e+00 : f32
    %243 = vector.broadcast %cst : f32 to vector<1x16xf32>
    %244 = arith.subf %243, %242 : vector<1x16xf32>
    %cst_165 = arith.constant -1.000000e+09 : f32
    %245 = vector.broadcast %cst_165 : f32 to vector<1x16xf32>
    %246 = arith.mulf %244, %245 : vector<1x16xf32>
    %247 = arith.truncf %240 : vector<16x32xf32> to vector<16x32xbf16>
    %c0_166 = arith.constant 0 : index
    %c0_167 = arith.constant 0 : index
    %248 = vector.load %arg4[%c0_166, %c0_167] : memref<32x96xbf16, #tpu.memory_space<vmem>>, vector<32x96xbf16>
    %cst_168 = arith.constant dense<0.000000e+00> : vector<16x96xf32>
    %249 = tpu.matmul %247, %248, %cst_168 {dimension_numbers = #tpu.dot_dimension_numbers<[1], [0], [0], [1], [0, 0, 1, 1], [], []>} : vector<16x32xbf16>, vector<32x96xbf16>, vector<16x96xf32> -> vector<16x96xf32>
    %250 = vector.extract_strided_slice %249 {offsets = [0, 0], sizes = [16, 32], strides = [1, 1]} : vector<16x96xf32> to vector<16x32xf32>
    %251 = vector.extract_strided_slice %249 {offsets = [0, 32], sizes = [16, 32], strides = [1, 1]} : vector<16x96xf32> to vector<16x32xf32>
    %252 = vector.extract_strided_slice %249 {offsets = [0, 64], sizes = [16, 32], strides = [1, 1]} : vector<16x96xf32> to vector<16x32xf32>
    %253 = arith.truncf %250 : vector<16x32xf32> to vector<16x32xbf16>
    %254 = arith.truncf %251 : vector<16x32xf32> to vector<16x32xbf16>
    %cst_169 = arith.constant dense<0.000000e+00> : vector<16x16xf32>
    %255 = tpu.matmul %253, %254, %cst_169 {dimension_numbers = #tpu.dot_dimension_numbers<[1], [1], [0], [0], [0, 0, 1, 0], [], []>} : vector<16x32xbf16>, vector<16x32xbf16>, vector<16x16xf32> -> vector<16x16xf32>
    %256 = vector.broadcast %246 : vector<1x16xf32> to vector<16x16xf32>
    %257 = arith.addf %255, %256 : vector<16x16xf32>
    %cst_170 = arith.constant dense<0xFF800000> : vector<16xf32>
    %258 = vector.multi_reduction <maximumf>, %257, %cst_170 [1] : vector<16x16xf32> to vector<16xf32>
    %259 = vector.shape_cast %258 : vector<16xf32> to vector<16x1xf32>
    %260 = vector.broadcast %259 : vector<16x1xf32> to vector<16x16xf32>
    %261 = arith.subf %257, %260 : vector<16x16xf32>
    %262 = math.exp %261 : vector<16x16xf32>
    %cst_171 = arith.constant dense<0.000000e+00> : vector<16xf32>
    %263 = vector.multi_reduction <add>, %262, %cst_171 [1] : vector<16x16xf32> to vector<16xf32>
    %264 = vector.shape_cast %263 : vector<16xf32> to vector<16x1xf32>
    %265 = tpu.reciprocal %264 {approx = true} : vector<16x1xf32> -> vector<16x1xf32>
    %266 = vector.broadcast %265 : vector<16x1xf32> to vector<16x16xf32>
    %267 = arith.mulf %262, %266 : vector<16x16xf32>
    %268 = arith.truncf %267 : vector<16x16xf32> to vector<16x16xbf16>
    %269 = arith.truncf %252 : vector<16x32xf32> to vector<16x32xbf16>
    %cst_172 = arith.constant dense<0.000000e+00> : vector<16x32xf32>
    %270 = tpu.matmul %268, %269, %cst_172 {dimension_numbers = #tpu.dot_dimension_numbers<[1], [0], [0], [1], [0, 0, 1, 1], [], []>} : vector<16x16xbf16>, vector<16x32xbf16>, vector<16x32xf32> -> vector<16x32xf32>
    %271 = arith.truncf %270 : vector<16x32xf32> to vector<16x32xbf16>
    %c0_173 = arith.constant 0 : index
    %c0_174 = arith.constant 0 : index
    %272 = vector.load %arg5[%c0_173, %c0_174] : memref<32x32xbf16, #tpu.memory_space<vmem>>, vector<32x32xbf16>
    %cst_175 = arith.constant dense<0.000000e+00> : vector<16x32xf32>
    %273 = tpu.matmul %271, %272, %cst_175 {dimension_numbers = #tpu.dot_dimension_numbers<[1], [0], [0], [1], [0, 0, 1, 1], [], []>} : vector<16x32xbf16>, vector<32x32xbf16>, vector<16x32xf32> -> vector<16x32xf32>
    %274 = arith.addf %240, %273 : vector<16x32xf32>
    %cst_176 = arith.constant dense<0.000000e+00> : vector<16xf32>
    %275 = vector.multi_reduction <add>, %274, %cst_176 [1] : vector<16x32xf32> to vector<16xf32>
    %276 = vector.shape_cast %275 : vector<16xf32> to vector<16x1xf32>
    %cst_177 = arith.constant 3.200000e+01 : f32
    %277 = vector.broadcast %cst_177 : f32 to vector<16x1xf32>
    %278 = arith.divf %276, %277 : vector<16x1xf32>
    %279 = vector.broadcast %278 : vector<16x1xf32> to vector<16x32xf32>
    %280 = arith.subf %274, %279 : vector<16x32xf32>
    %281 = arith.mulf %280, %280 : vector<16x32xf32>
    %cst_178 = arith.constant dense<0.000000e+00> : vector<16xf32>
    %282 = vector.multi_reduction <add>, %281, %cst_178 [1] : vector<16x32xf32> to vector<16xf32>
    %283 = vector.shape_cast %282 : vector<16xf32> to vector<16x1xf32>
    %cst_179 = arith.constant 3.200000e+01 : f32
    %284 = vector.broadcast %cst_179 : f32 to vector<16x1xf32>
    %285 = arith.divf %283, %284 : vector<16x1xf32>
    %286 = vector.broadcast %278 : vector<16x1xf32> to vector<16x32xf32>
    %287 = arith.subf %274, %286 : vector<16x32xf32>
    %cst_180 = arith.constant 9.99999974E-6 : f32
    %288 = vector.broadcast %cst_180 : f32 to vector<16x1xf32>
    %289 = arith.addf %285, %288 : vector<16x1xf32>
    %290 = math.rsqrt %289 : vector<16x1xf32>
    %291 = vector.broadcast %290 : vector<16x1xf32> to vector<16x32xf32>
    %292 = arith.mulf %287, %291 : vector<16x32xf32>
    %c0_181 = arith.constant 0 : index
    %c0_182 = arith.constant 0 : index
    %293 = vector.load %arg10[%c0_181, %c0_182] : memref<1x32xf32, #tpu.memory_space<vmem>>, vector<1x32xf32>
    %294 = vector.broadcast %293 : vector<1x32xf32> to vector<16x32xf32>
    %295 = arith.mulf %292, %294 : vector<16x32xf32>
    %c0_183 = arith.constant 0 : index
    %c0_184 = arith.constant 0 : index
    %296 = vector.load %arg11[%c0_183, %c0_184] : memref<1x32xf32, #tpu.memory_space<vmem>>, vector<1x32xf32>
    %297 = vector.broadcast %296 : vector<1x32xf32> to vector<16x32xf32>
    %298 = arith.addf %295, %297 : vector<16x32xf32>
    %299 = arith.truncf %298 : vector<16x32xf32> to vector<16x32xbf16>
    %c0_185 = arith.constant 0 : index
    %c0_186 = arith.constant 0 : index
    %300 = vector.load %arg6[%c0_185, %c0_186] : memref<32x64xbf16, #tpu.memory_space<vmem>>, vector<32x64xbf16>
    %cst_187 = arith.constant dense<0.000000e+00> : vector<16x64xf32>
    %301 = tpu.matmul %299, %300, %cst_187 {dimension_numbers = #tpu.dot_dimension_numbers<[1], [0], [0], [1], [0, 0, 1, 1], [], []>} : vector<16x32xbf16>, vector<32x64xbf16>, vector<16x64xf32> -> vector<16x64xf32>
    %c0_188 = arith.constant 0 : index
    %c0_189 = arith.constant 0 : index
    %302 = vector.load %arg7[%c0_188, %c0_189] : memref<1x64xf32, #tpu.memory_space<vmem>>, vector<1x64xf32>
    %303 = vector.broadcast %302 : vector<1x64xf32> to vector<16x64xf32>
    %304 = arith.addf %301, %303 : vector<16x64xf32>
    %305 = arith.mulf %304, %304 : vector<16x64xf32>
    %306 = arith.mulf %304, %305 : vector<16x64xf32>
    %cst_190 = arith.constant 4.471500e-02 : f32
    %307 = vector.broadcast %cst_190 : f32 to vector<16x64xf32>
    %308 = arith.mulf %307, %306 : vector<16x64xf32>
    %309 = arith.addf %304, %308 : vector<16x64xf32>
    %cst_191 = arith.constant 0.797884583 : f32
    %310 = vector.broadcast %cst_191 : f32 to vector<16x64xf32>
    %311 = arith.mulf %310, %309 : vector<16x64xf32>
    %312 = math.tanh %311 : vector<16x64xf32>
    %cst_192 = arith.constant 1.000000e+00 : f32
    %313 = vector.broadcast %cst_192 : f32 to vector<16x64xf32>
    %314 = arith.addf %313, %312 : vector<16x64xf32>
    %cst_193 = arith.constant 5.000000e-01 : f32
    %315 = vector.broadcast %cst_193 : f32 to vector<16x64xf32>
    %316 = arith.mulf %315, %314 : vector<16x64xf32>
    %317 = arith.mulf %304, %316 : vector<16x64xf32>
    %318 = arith.truncf %317 : vector<16x64xf32> to vector<16x64xbf16>
    %c0_194 = arith.constant 0 : index
    %c0_195 = arith.constant 0 : index
    %319 = vector.load %arg8[%c0_194, %c0_195] : memref<64x32xbf16, #tpu.memory_space<vmem>>, vector<64x32xbf16>
    %cst_196 = arith.constant dense<0.000000e+00> : vector<16x32xf32>
    %320 = tpu.matmul %318, %319, %cst_196 {dimension_numbers = #tpu.dot_dimension_numbers<[1], [0], [0], [1], [0, 0, 1, 1], [], []>} : vector<16x64xbf16>, vector<64x32xbf16>, vector<16x32xf32> -> vector<16x32xf32>
    %c0_197 = arith.constant 0 : index
    %c0_198 = arith.constant 0 : index
    %321 = vector.load %arg9[%c0_197, %c0_198] : memref<1x32xf32, #tpu.memory_space<vmem>>, vector<1x32xf32>
    %322 = vector.broadcast %321 : vector<1x32xf32> to vector<16x32xf32>
    %323 = arith.addf %320, %322 : vector<16x32xf32>
    %324 = arith.addf %298, %323 : vector<16x32xf32>
    %cst_199 = arith.constant dense<0.000000e+00> : vector<16xf32>
    %325 = vector.multi_reduction <add>, %324, %cst_199 [1] : vector<16x32xf32> to vector<16xf32>
    %326 = vector.shape_cast %325 : vector<16xf32> to vector<16x1xf32>
    %cst_200 = arith.constant 3.200000e+01 : f32
    %327 = vector.broadcast %cst_200 : f32 to vector<16x1xf32>
    %328 = arith.divf %326, %327 : vector<16x1xf32>
    %329 = vector.broadcast %328 : vector<16x1xf32> to vector<16x32xf32>
    %330 = arith.subf %324, %329 : vector<16x32xf32>
    %331 = arith.mulf %330, %330 : vector<16x32xf32>
    %cst_201 = arith.constant dense<0.000000e+00> : vector<16xf32>
    %332 = vector.multi_reduction <add>, %331, %cst_201 [1] : vector<16x32xf32> to vector<16xf32>
    %333 = vector.shape_cast %332 : vector<16xf32> to vector<16x1xf32>
    %cst_202 = arith.constant 3.200000e+01 : f32
    %334 = vector.broadcast %cst_202 : f32 to vector<16x1xf32>
    %335 = arith.divf %333, %334 : vector<16x1xf32>
    %336 = vector.broadcast %328 : vector<16x1xf32> to vector<16x32xf32>
    %337 = arith.subf %324, %336 : vector<16x32xf32>
    %cst_203 = arith.constant 9.99999974E-6 : f32
    %338 = vector.broadcast %cst_203 : f32 to vector<16x1xf32>
    %339 = arith.addf %335, %338 : vector<16x1xf32>
    %340 = math.rsqrt %339 : vector<16x1xf32>
    %341 = vector.broadcast %340 : vector<16x1xf32> to vector<16x32xf32>
    %342 = arith.mulf %337, %341 : vector<16x32xf32>
    %c0_204 = arith.constant 0 : index
    %c0_205 = arith.constant 0 : index
    %343 = vector.load %arg12[%c0_204, %c0_205] : memref<1x32xf32, #tpu.memory_space<vmem>>, vector<1x32xf32>
    %344 = vector.broadcast %343 : vector<1x32xf32> to vector<16x32xf32>
    %345 = arith.mulf %342, %344 : vector<16x32xf32>
    %c0_206 = arith.constant 0 : index
    %c0_207 = arith.constant 0 : index
    %346 = vector.load %arg13[%c0_206, %c0_207] : memref<1x32xf32, #tpu.memory_space<vmem>>, vector<1x32xf32>
    %347 = vector.broadcast %346 : vector<1x32xf32> to vector<16x32xf32>
    %348 = arith.addf %345, %347 : vector<16x32xf32>
    %c0_208 = arith.constant 0 : index
    %c0_209 = arith.constant 0 : index
    %c0_210 = arith.constant 0 : index
    %349 = vector.load %arg16[%c0_208, %c0_209, %c0_210] : memref<1x16x32xf32, #tpu.memory_space<vmem>>, vector<1x16x32xf32>
    %350 = vector.shape_cast %349 : vector<1x16x32xf32> to vector<16x32xf32>
    %351 = vector.shape_cast %348 : vector<16x32xf32> to vector<1x16x32xf32>
    tpu.vector_store %arg16[%c0_208, %c0_209, %c0_210], %351 {strides = array<i32>} : memref<1x16x32xf32, #tpu.memory_space<vmem>>, vector<1x16x32xf32>,
    %352 = vector.extract_strided_slice %348 {offsets = [0, 0], sizes = [1, 32], strides = [1, 1]} : vector<16x32xf32> to vector<1x32xf32>
    %353 = arith.truncf %352 : vector<1x32xf32> to vector<1x32xbf16>
    %c0_211 = arith.constant 0 : index
    %c0_212 = arith.constant 0 : index
    %354 = vector.load %arg14[%c0_211, %c0_212] : memref<32x3xbf16, #tpu.memory_space<vmem>>, vector<32x3xbf16>
    %cst_213 = arith.constant dense<0.000000e+00> : vector<1x3xf32>
    %355 = tpu.matmul %353, %354, %cst_213 {dimension_numbers = #tpu.dot_dimension_numbers<[1], [0], [0], [1], [0, 0, 1, 1], [], []>} : vector<1x32xbf16>, vector<32x3xbf16>, vector<1x3xf32> -> vector<1x3xf32>
    %c0_214 = arith.constant 0 : index
    %c0_215 = arith.constant 0 : index
    %356 = vector.load %arg15[%c0_214, %c0_215] : memref<1x3xf32, #tpu.memory_space<vmem>>, vector<1x3xf32>
    %357 = arith.addf %355, %356 : vector<1x3xf32>
    %cst_216 = arith.constant dense<0xFF800000> : vector<1xf32>
    %358 = vector.multi_reduction <maximumf>, %357, %cst_216 [1] : vector<1x3xf32> to vector<1xf32>
    %359 = vector.shape_cast %358 : vector<1xf32> to vector<1x1xf32>
    %360 = vector.broadcast %359 : vector<1x1xf32> to vector<1x3xf32>
    %361 = arith.subf %357, %360 : vector<1x3xf32>
    %362 = math.exp %361 : vector<1x3xf32>
    %cst_217 = arith.constant dense<0.000000e+00> : vector<1xf32>
    %363 = vector.multi_reduction <add>, %362, %cst_217 [1] : vector<1x3xf32> to vector<1xf32>
    %364 = vector.shape_cast %363 : vector<1xf32> to vector<1x1xf32>
    %365 = math.log %364 : vector<1x1xf32>
    %366 = arith.addf %365, %359 : vector<1x1xf32>
    %367 = vector.broadcast %366 : vector<1x1xf32> to vector<1x3xf32>
    %368 = arith.subf %357, %367 : vector<1x3xf32>
    %c0_218 = arith.constant 0 : index
    %c0_219 = arith.constant 0 : index
    %c0_220 = arith.constant 0 : index
    %369 = vector.load %arg17[%c0_218, %c0_219, %c0_220] : memref<1x1x3xf32, #tpu.memory_space<vmem>>, vector<1x1x3xf32>
    %370 = vector.shape_cast %369 : vector<1x1x3xf32> to vector<1x3xf32>
    %371 = vector.shape_cast %368 : vector<1x3xf32> to vector<1x1x3xf32>
    tpu.vector_store %arg17[%c0_218, %c0_219, %c0_220], %371 {strides = array<i32>} : memref<1x1x3xf32, #tpu.memory_space<vmem>>, vector<1x1x3xf32>,
    return
  }
  func.func @transform_0(%arg0: i32, %arg1: memref<2x16xi32, #tpu.memory_space<smem>>) -> (i32, i32, i32) {
    %c0_i32 = arith.constant 0 : i32
    %c0_i32_0 = arith.constant 0 : i32
    %c0_i32_1 = arith.constant 0 : i32
    return %arg0, %c0_i32, %c0_i32_0 : i32, i32, i32
  }
  func.func @transform_2(%arg0: i32, %arg1: memref<2x16xi32, #tpu.memory_space<smem>>) -> (i32, i32) {
    %c0_i32 = arith.constant 0 : i32
    %c0_i32_0 = arith.constant 0 : i32
    %c0_i32_1 = arith.constant 0 : i32
    return %c0_i32, %c0_i32_0 : i32, i32
  }
  func.func @transform_3(%arg0: i32, %arg1: memref<2x16xi32, #tpu.memory_space<smem>>) -> (i32, i32) {
    %c0_i32 = arith.constant 0 : i32
    %c0_i32_0 = arith.constant 0 : i32
    %c0_i32_1 = arith.constant 0 : i32
    return %c0_i32, %c0_i32_0 : i32, i32
  }
  func.func @transform_4(%arg0: i32, %arg1: memref<2x16xi32, #tpu.memory_space<smem>>) -> (i32, i32) {
    %c0_i32 = arith.constant 0 : i32
    %c0_i32_0 = arith.constant 0 : i32
    %c0_i32_1 = arith.constant 0 : i32
    return %c0_i32, %c0_i32_0 : i32, i32
  }
  func.func @transform_5(%arg0: i32, %arg1: memref<2x16xi32, #tpu.memory_space<smem>>) -> (i32, i32) {
    %c0_i32 = arith.constant 0 : i32
    %c0_i32_0 = arith.constant 0 : i32
    %c0_i32_1 = arith.constant 0 : i32
    return %c0_i32, %c0_i32_0 : i32, i32
  }
  func.func @transform_6(%arg0: i32, %arg1: memref<2x16xi32, #tpu.memory_space<smem>>) -> (i32, i32) {
    %c0_i32 = arith.constant 0 : i32
    %c0_i32_0 = arith.constant 0 : i32
    %c0_i32_1 = arith.constant 0 : i32
    return %c0_i32, %c0_i32_0 : i32, i32
  }
  func.func @transform_7(%arg0: i32, %arg1: memref<2x16xi32, #tpu.memory_space<smem>>) -> (i32, i32) {
    %c0_i32 = arith.constant 0 : i32
    %c0_i32_0 = arith.constant 0 : i32
    %c0_i32_1 = arith.constant 0 : i32
    return %c0_i32, %c0_i32_0 : i32, i32
  }
  func.func @transform_8(%arg0: i32, %arg1: memref<2x16xi32, #tpu.memory_space<smem>>) -> (i32, i32) {
    %c0_i32 = arith.constant 0 : i32
    %c0_i32_0 = arith.constant 0 : i32
    %c0_i32_1 = arith.constant 0 : i32
    return %c0_i32, %c0_i32_0 : i32, i32
  }
  func.func @transform_9(%arg0: i32, %arg1: memref<2x16xi32, #tpu.memory_space<smem>>) -> (i32, i32) {
    %c0_i32 = arith.constant 0 : i32
    %c0_i32_0 = arith.constant 0 : i32
    %c0_i32_1 = arith.constant 0 : i32
    return %c0_i32, %c0_i32_0 : i32, i32
  }
  func.func @transform_10(%arg0: i32, %arg1: memref<2x16xi32, #tpu.memory_space<smem>>) -> (i32, i32) {
    %c0_i32 = arith.constant 0 : i32
    %c0_i32_0 = arith.constant 0 : i32
    %c0_i32_1 = arith.constant 0 : i32
    return %c0_i32, %c0_i32_0 : i32, i32
  }
  func.func @transform_11(%arg0: i32, %arg1: memref<2x16xi32, #tpu.memory_space<smem>>) -> (i32, i32) {
    %c0_i32 = arith.constant 0 : i32
    %c0_i32_0 = arith.constant 0 : i32
    %c0_i32_1 = arith.constant 0 : i32
    return %c0_i32, %c0_i32_0 : i32, i32
  }
  func.func @transform_12(%arg0: i32, %arg1: memref<2x16xi32, #tpu.memory_space<smem>>) -> (i32, i32) {
    %c0_i32 = arith.constant 0 : i32
    %c0_i32_0 = arith.constant 0 : i32
    %c0_i32_1 = arith.constant 0 : i32
    return %c0_i32, %c0_i32_0 : i32, i32
  }
  func.func @transform_13(%arg0: i32, %arg1: memref<2x16xi32, #tpu.memory_space<smem>>) -> (i32, i32) {
    %c0_i32 = arith.constant 0 : i32
    %c0_i32_0 = arith.constant 0 : i32
    %c0_i32_1 = arith.constant 0 : i32
    return %c0_i32, %c0_i32_0 : i32, i32
  }
  func.func @transform_14(%arg0: i32, %arg1: memref<2x16xi32, #tpu.memory_space<smem>>) -> (i32, i32, i32) {
    %c0_i32 = arith.constant 0 : i32
    %c0_i32_0 = arith.constant 0 : i32
    %c0_i32_1 = arith.constant 0 : i32
    return %arg0, %c0_i32, %c0_i32_0 : i32, i32, i32
  }
  func.func @transform_15(%arg0: i32, %arg1: memref<2x16xi32, #tpu.memory_space<smem>>) -> (i32, i32, i32) {
    %c0_i32 = arith.constant 0 : i32
    %c0_i32_0 = arith.constant 0 : i32
    %c0_i32_1 = arith.constant 0 : i32
    return %arg0, %c0_i32, %c0_i32_0 : i32, i32, i32
  }
}

</mosaic_0001>

<llo_original>
// kernel: tpu_custom_call.1
$region0: #{tpu_custom_call.1}
  #allocation0 [shape = 'u32[]', space=smem, size = 0x4, offset = 0x4, fixed_abs, tag = 'smem constant byte address 0x4 - core index']
  #allocation1 [shape = 'u32[144,128]{1,0:T(1,128)}', space=vmem, size = 0x12000, scoped, tag = 'internal scratch']
  #allocation2 [shape = 'f32[16,32]{1,0:T(8,128)}', space=vmem, size = 0x2000, scoped, tag = 'scratch operand']
  #allocation3 [shape = 's32[16]{0}', space=sflag, size = 0x40, scoped, tag = 'scratch operand']
  #allocation4 [shape = 's32[1]{0}', space=sflag, size = 0x4, scoped, tag = 'scoped memory for tpu_custom_call.1']
  #allocation5 [shape = 'u8[1024]{0}', space=smem, size = 0x400, scoped, tag = 'prefetched SMEM operand 0']
  #allocation10 [shape = 's32[]', space=sflag, size = 0x4, offset = 0, fixed_abs, tag = 'sflag constant byte address 0x0 - dummy sync flag']
  #allocation11 [shape = 's32[]', space=sflag, size = 0x4, offset = 0, fixed_abs, tag = 'sflag constant byte address 0x0 - dummy sync flag']
  #allocation12 [shape = 's32[]', space=sflag, size = 0x4, offset = 0, fixed_abs, tag = 'sflag constant byte address 0x0 - dummy sync flag']
  #allocation13 [shape = 's32[]', space=sflag, size = 0x4, offset = 0, fixed_abs, tag = 'sflag constant byte address 0x0 - dummy sync flag']
  #allocation14 [shape = 's32[]', space=sflag, size = 0x4, offset = 0, fixed_abs, tag = 'sflag constant byte address 0x0 - dummy sync flag']
  #allocation15 [shape = 's32[]', space=sflag, size = 0x4, offset = 0, fixed_abs, tag = 'sflag constant byte address 0x0 - dummy sync flag']
  #allocation16 [shape = 's32[]', space=sflag, size = 0x4, offset = 0, fixed_abs, tag = 'sflag constant byte address 0x0 - dummy sync flag']
  #allocation17 [shape = 's32[]', space=sflag, size = 0x4, offset = 0, fixed_abs, tag = 'sflag constant byte address 0x0 - dummy sync flag']
  #allocation18 [shape = 's32[]', space=sflag, size = 0x4, offset = 0, fixed_abs, tag = 'sflag constant byte address 0x0 - dummy sync flag']
  #allocation19 [shape = 's32[]', space=sflag, size = 0x4, offset = 0, fixed_abs, tag = 'sflag constant byte address 0x0 - dummy sync flag']
  #allocation20 [shape = 's32[]', space=sflag, size = 0x4, offset = 0, fixed_abs, tag = 'sflag constant byte address 0x0 - dummy sync flag']
  #allocation21 [shape = 's32[]', space=sflag, size = 0x4, offset = 0, fixed_abs, tag = 'sflag constant byte address 0x0 - dummy sync flag']
  #allocation22 [shape = 's32[]', space=sflag, size = 0x4, offset = 0, fixed_abs, tag = 'sflag constant byte address 0x0 - dummy sync flag']
  #allocation23 [shape = 's32[]', space=sflag, size = 0x4, offset = 0, fixed_abs, tag = 'sflag constant byte address 0x0 - dummy sync flag']
  #allocation24 [shape = 's32[]', space=sflag, size = 0x4, offset = 0, fixed_abs, tag = 'sflag constant byte address 0x0 - dummy sync flag']
  #allocation25 [shape = 's32[]', space=sflag, size = 0x4, offset = 0, fixed_abs, tag = 'sflag constant byte address 0x0 - dummy sync flag']
  %s0 = inlined_call_operand.vmem [shape: s32[2,16], index: 0, kind: input, shape index: {}]
  %s1 = inlined_call_operand.vmem [shape: f32[2,1,16], index: 1, kind: input, shape index: {}]
  %s2 = inlined_call_operand.vmem [shape: f32[100,32], index: 2, kind: input, shape index: {}]
  %s3 = inlined_call_operand.vmem [shape: bf16[32,96], index: 3, kind: input, shape index: {}]
  %s4 = inlined_call_operand.vmem [shape: bf16[32,32], index: 4, kind: input, shape index: {}]
  %s5 = inlined_call_operand.vmem [shape: bf16[32,64], index: 5, kind: input, shape index: {}]
  %s6 = inlined_call_operand.vmem [shape: f32[1,64], index: 6, kind: input, shape index: {}]
  %s7 = inlined_call_operand.vmem [shape: bf16[64,32], index: 7, kind: input, shape index: {}]
  %s8 = inlined_call_operand.vmem [shape: f32[1,32], index: 8, kind: input, shape index: {}]
  %s9 = inlined_call_operand.vmem [shape: f32[1,32], index: 9, kind: input, shape index: {}]
  %s10 = inlined_call_operand.vmem [shape: f32[1,32], index: 10, kind: input, shape index: {}]
  %s11 = inlined_call_operand.vmem [shape: f32[1,32], index: 11, kind: input, shape index: {}]
  %s12 = inlined_call_operand.vmem [shape: f32[1,32], index: 12, kind: input, shape index: {}]
  %s13 = inlined_call_operand.vmem [shape: bf16[32,3], index: 13, kind: input, shape index: {}]
  %s14 = inlined_call_operand.vmem [shape: f32[1,3], index: 14, kind: input, shape index: {}]
  %s15 = inlined_call_operand.hbm [shape: f32[2,16,32], index: 15, kind: output, shape index: {0}]
  %s16 = inlined_call_operand.hbm [shape: f32[2,1,3], index: 16, kind: output, shape index: {1}]
  %17 = xla_tuple %s15, %s16
  %s18 = sld [smem:[#allocation0]]
  $region573: #{tpu_custom_call.1} parent=0
    _
  %s20 = ssub.s32 1, %s18
  %s21 = scalar_select 0, %s20, %s18
  %s22 = sshll.u32 %s0, 4
  %s23 = int_to_ptr.vmem [resolvable:$true] %s22
  %25 = dma.vmem_to_smem %s23, 32, [#allocation5], [#allocation4]
  %26 = dma.done [#allocation4], 32
  %27 = sfence
  $region1: #{tpu_custom_call.1} parent=0
    #allocation6 [shape = 'u8[16384]{0}', space=vmem, size = 0x4000, scoped, tag = 'output window, operand 0']
    #allocation7 [shape = 's32[2]{0}', space=sflag, size = 0x8, scoped, tag = 'scoped memory for tpu_custom_call.1']
    #allocation8 [shape = 'u8[1024]{0}', space=vmem, size = 0x400, scoped, tag = 'output window, operand 1']
    #allocation9 [shape = 's32[2]{0}', space=sflag, size = 0x8, scoped, tag = 'scoped memory for tpu_custom_call.1']
    %28 = vsyncpa [#allocation7], 0
    %s29 = scalar_lea.sflag [#allocation7], 1
    %30 = vsyncpa %s29, 0
    %31 = vsyncpa [#allocation9], 0
    %s32 = scalar_lea.sflag [#allocation9], 1
    %33 = vsyncpa %s32, 0
    loop: start=0, step=1, limit=4
    $region2: #{tpu_custom_call.1} parent=1 // loop_pre_header
      _
    $region3: #{tpu_custom_call.1} parent=1 // loop_header
      %s35 = sphi 0, %s39
      %p36 = scmp.ge.s32.totalorder %s35, 4
      %s45 = sphi 0, %s47
      %s48 = sphi 0, %s45
      %s49 = sphi 0, %s48
      %s65 = sphi 0, %s49
      %s69 = sphi 0, %s69
      %s71 = sphi 0, %s69
      %s72 = sphi 0, %s71
      %s86 = sphi 0, %s72
      %s90 = sphi 0, %s90
      %s92 = sphi 0, %s90
      %s93 = sphi 0, %s92
      %s107 = sphi 0, %s93
      %s111 = sphi 0, %s111
      %s113 = sphi 0, %s111
      %s114 = sphi 0, %s113
      %s128 = sphi 0, %s114
      %s132 = sphi 0, %s132
      %s134 = sphi 0, %s132
      %s135 = sphi 0, %s134
      %s149 = sphi 0, %s135
      %s153 = sphi 0, %s153
      %s155 = sphi 0, %s153
      %s156 = sphi 0, %s155
      %s170 = sphi 0, %s156
      %s174 = sphi 0, %s174
      %s176 = sphi 0, %s174
      %s177 = sphi 0, %s176
      %s191 = sphi 0, %s177
      %s195 = sphi 0, %s195
      %s197 = sphi 0, %s195
      %s198 = sphi 0, %s197
      %s212 = sphi 0, %s198
      %s216 = sphi 0, %s216
      %s218 = sphi 0, %s216
      %s219 = sphi 0, %s218
      %s233 = sphi 0, %s219
      %s237 = sphi 0, %s237
      %s239 = sphi 0, %s237
      %s240 = sphi 0, %s239
      %s254 = sphi 0, %s240
      %s258 = sphi 0, %s258
      %s260 = sphi 0, %s258
      %s261 = sphi 0, %s260
      %s275 = sphi 0, %s261
      %s279 = sphi 0, %s279
      %s281 = sphi 0, %s279
      %s282 = sphi 0, %s281
      %s296 = sphi 0, %s282
      %s300 = sphi 0, %s300
      %s302 = sphi 0, %s300
      %s303 = sphi 0, %s302
      %s317 = sphi 0, %s303
      %s323 = sphi 0, %s325
      %s326 = sphi 0, %s323
      %s327 = sphi 0, %s326
      %s343 = sphi 0, %s327
      %s349 = sphi 0, %s351
      %s352 = sphi 0, %s349
      %s353 = sphi 0, %s352
      %s369 = sphi 0, %s353
    $region4: #{tpu_custom_call.1} parent=1 // loop_header_branch
      %38 = sbr.rel (%p36) target = $region8
    $region5: #{tpu_custom_call.1} parent=1 // loop_body
      %s40 = ssub.s32 %s35, 1
      %s41 = ssub.s32 %s35, 2
      %s42 = sadd.s32 %s35, 1
      %s43 = ssub.s32 %s35, %s42
      %p44 = scmp.eq.s32.totalorder %s43, 0
      %s46 = sadd.s32 %s45, 1
      %s47 = scalar_select %p44, %s45, %s46
      %p50 = pneg %p44
      %p51 = scmp.eq.s32.totalorder %s35, 1
      %p52 = por %p50, %p51
      %p53 = scmp.ne.s32.totalorder %s45, %s48
      %p54 = scmp.eq.s32.totalorder %s35, 0
      %p55 = por %p53, %p54
      %p56 = scmp.ne.s32.totalorder %s45, %s48
      %p57 = scmp.eq.s32.totalorder %s40, 1
      %p58 = por %p56, %p57
      %p59 = scmp.ne.s32.totalorder %s48, %s49
      %p60 = scmp.eq.s32.totalorder %s40, 0
      %p61 = por %p59, %p60
      %p62 = scmp.ne.s32.totalorder %s48, %s49
      %p63 = scmp.eq.s32.totalorder %s41, 1
      %p64 = por %p62, %p63
      %p66 = scmp.ne.s32.totalorder %s49, %s65
      %p67 = scmp.eq.s32.totalorder %s41, 0
      %p68 = por %p66, %p67
      %s70 = sadd.s32 %s69, 1
      %p73 = scmp.eq.s32.totalorder %s35, 1
      %p74 = scmp.ne.s32.totalorder %s69, %s71
      %p75 = scmp.eq.s32.totalorder %s35, 0
      %p76 = por %p74, %p75
      %p77 = scmp.ne.s32.totalorder %s69, %s71
      %p78 = scmp.eq.s32.totalorder %s40, 1
      %p79 = por %p77, %p78
      %p80 = scmp.ne.s32.totalorder %s71, %s72
      %p81 = scmp.eq.s32.totalorder %s40, 0
      %p82 = por %p80, %p81
      %p83 = scmp.ne.s32.totalorder %s71, %s72
      %p84 = scmp.eq.s32.totalorder %s41, 1
      %p85 = por %p83, %p84
      %p87 = scmp.ne.s32.totalorder %s72, %s86
      %p88 = scmp.eq.s32.totalorder %s41, 0
      %p89 = por %p87, %p88
      %s91 = sadd.s32 %s90, 1
      %p94 = scmp.eq.s32.totalorder %s35, 1
      %p95 = scmp.ne.s32.totalorder %s90, %s92
      %p96 = scmp.eq.s32.totalorder %s35, 0
      %p97 = por %p95, %p96
      %p98 = scmp.ne.s32.totalorder %s90, %s92
      %p99 = scmp.eq.s32.totalorder %s40, 1
      %p100 = por %p98, %p99
      %p101 = scmp.ne.s32.totalorder %s92, %s93
      %p102 = scmp.eq.s32.totalorder %s40, 0
      %p103 = por %p101, %p102
      %p104 = scmp.ne.s32.totalorder %s92, %s93
      %p105 = scmp.eq.s32.totalorder %s41, 1
      %p106 = por %p104, %p105
      %p108 = scmp.ne.s32.totalorder %s93, %s107
      %p109 = scmp.eq.s32.totalorder %s41, 0
      %p110 = por %p108, %p109
      %s112 = sadd.s32 %s111, 1
      %p115 = scmp.eq.s32.totalorder %s35, 1
      %p116 = scmp.ne.s32.totalorder %s111, %s113
      %p117 = scmp.eq.s32.totalorder %s35, 0
      %p118 = por %p116, %p117
      %p119 = scmp.ne.s32.totalorder %s111, %s113
      %p120 = scmp.eq.s32.totalorder %s40, 1
      %p121 = por %p119, %p120
      %p122 = scmp.ne.s32.totalorder %s113, %s114
      %p123 = scmp.eq.s32.totalorder %s40, 0
      %p124 = por %p122, %p123
      %p125 = scmp.ne.s32.totalorder %s113, %s114
      %p126 = scmp.eq.s32.totalorder %s41, 1
      %p127 = por %p125, %p126
      %p129 = scmp.ne.s32.totalorder %s114, %s128
      %p130 = scmp.eq.s32.totalorder %s41, 0
      %p131 = por %p129, %p130
      %s133 = sadd.s32 %s132, 1
      %p136 = scmp.eq.s32.totalorder %s35, 1
      %p137 = scmp.ne.s32.totalorder %s132, %s134
      %p138 = scmp.eq.s32.totalorder %s35, 0
      %p139 = por %p137, %p138
      %p140 = scmp.ne.s32.totalorder %s132, %s134
      %p141 = scmp.eq.s32.totalorder %s40, 1
      %p142 = por %p140, %p141
      %p143 = scmp.ne.s32.totalorder %s134, %s135
      %p144 = scmp.eq.s32.totalorder %s40, 0
      %p145 = por %p143, %p144
      %p146 = scmp.ne.s32.totalorder %s134, %s135
      %p147 = scmp.eq.s32.totalorder %s41, 1
      %p148 = por %p146, %p147
      %p150 = scmp.ne.s32.totalorder %s135, %s149
      %p151 = scmp.eq.s32.totalorder %s41, 0
      %p152 = por %p150, %p151
      %s154 = sadd.s32 %s153, 1
      %p157 = scmp.eq.s32.totalorder %s35, 1
      %p158 = scmp.ne.s32.totalorder %s153, %s155
      %p159 = scmp.eq.s32.totalorder %s35, 0
      %p160 = por %p158, %p159
      %p161 = scmp.ne.s32.totalorder %s153, %s155
      %p162 = scmp.eq.s32.totalorder %s40, 1
      %p163 = por %p161, %p162
      %p164 = scmp.ne.s32.totalorder %s155, %s156
      %p165 = scmp.eq.s32.totalorder %s40, 0
      %p166 = por %p164, %p165
      %p167 = scmp.ne.s32.totalorder %s155, %s156
      %p168 = scmp.eq.s32.totalorder %s41, 1
      %p169 = por %p167, %p168
      %p171 = scmp.ne.s32.totalorder %s156, %s170
      %p172 = scmp.eq.s32.totalorder %s41, 0
      %p173 = por %p171, %p172
      %s175 = sadd.s32 %s174, 1
      %p178 = scmp.eq.s32.totalorder %s35, 1
      %p179 = scmp.ne.s32.totalorder %s174, %s176
      %p180 = scmp.eq.s32.totalorder %s35, 0
      %p181 = por %p179, %p180
      %p182 = scmp.ne.s32.totalorder %s174, %s176
      %p183 = scmp.eq.s32.totalorder %s40, 1
      %p184 = por %p182, %p183
      %p185 = scmp.ne.s32.totalorder %s176, %s177
      %p186 = scmp.eq.s32.totalorder %s40, 0
      %p187 = por %p185, %p186
      %p188 = scmp.ne.s32.totalorder %s176, %s177
      %p189 = scmp.eq.s32.totalorder %s41, 1
      %p190 = por %p188, %p189
      %p192 = scmp.ne.s32.totalorder %s177, %s191
      %p193 = scmp.eq.s32.totalorder %s41, 0
      %p194 = por %p192, %p193
      %s196 = sadd.s32 %s195, 1
      %p199 = scmp.eq.s32.totalorder %s35, 1
      %p200 = scmp.ne.s32.totalorder %s195, %s197
      %p201 = scmp.eq.s32.totalorder %s35, 0
      %p202 = por %p200, %p201
      %p203 = scmp.ne.s32.totalorder %s195, %s197
      %p204 = scmp.eq.s32.totalorder %s40, 1
      %p205 = por %p203, %p204
      %p206 = scmp.ne.s32.totalorder %s197, %s198
      %p207 = scmp.eq.s32.totalorder %s40, 0
      %p208 = por %p206, %p207
      %p209 = scmp.ne.s32.totalorder %s197, %s198
      %p210 = scmp.eq.s32.totalorder %s41, 1
      %p211 = por %p209, %p210
      %p213 = scmp.ne.s32.totalorder %s198, %s212
      %p214 = scmp.eq.s32.totalorder %s41, 0
      %p215 = por %p213, %p214
      %s217 = sadd.s32 %s216, 1
      %p220 = scmp.eq.s32.totalorder %s35, 1
      %p221 = scmp.ne.s32.totalorder %s216, %s218
      %p222 = scmp.eq.s32.totalorder %s35, 0
      %p223 = por %p221, %p222
      %p224 = scmp.ne.s32.totalorder %s216, %s218
      %p225 = scmp.eq.s32.totalorder %s40, 1
      %p226 = por %p224, %p225
      %p227 = scmp.ne.s32.totalorder %s218, %s219
      %p228 = scmp.eq.s32.totalorder %s40, 0
      %p229 = por %p227, %p228
      %p230 = scmp.ne.s32.totalorder %s218, %s219
      %p231 = scmp.eq.s32.totalorder %s41, 1
      %p232 = por %p230, %p231
      %p234 = scmp.ne.s32.totalorder %s219, %s233
      %p235 = scmp.eq.s32.totalorder %s41, 0
      %p236 = por %p234, %p235
      %s238 = sadd.s32 %s237, 1
      %p241 = scmp.eq.s32.totalorder %s35, 1
      %p242 = scmp.ne.s32.totalorder %s237, %s239
      %p243 = scmp.eq.s32.totalorder %s35, 0
      %p244 = por %p242, %p243
      %p245 = scmp.ne.s32.totalorder %s237, %s239
      %p246 = scmp.eq.s32.totalorder %s40, 1
      %p247 = por %p245, %p246
      %p248 = scmp.ne.s32.totalorder %s239, %s240
      %p249 = scmp.eq.s32.totalorder %s40, 0
      %p250 = por %p248, %p249
      %p251 = scmp.ne.s32.totalorder %s239, %s240
      %p252 = scmp.eq.s32.totalorder %s41, 1
      %p253 = por %p251, %p252
      %p255 = scmp.ne.s32.totalorder %s240, %s254
      %p256 = scmp.eq.s32.totalorder %s41, 0
      %p257 = por %p255, %p256
      %s259 = sadd.s32 %s258, 1
      %p262 = scmp.eq.s32.totalorder %s35, 1
      %p263 = scmp.ne.s32.totalorder %s258, %s260
      %p264 = scmp.eq.s32.totalorder %s35, 0
      %p265 = por %p263, %p264
      %p266 = scmp.ne.s32.totalorder %s258, %s260
      %p267 = scmp.eq.s32.totalorder %s40, 1
      %p268 = por %p266, %p267
      %p269 = scmp.ne.s32.totalorder %s260, %s261
      %p270 = scmp.eq.s32.totalorder %s40, 0
      %p271 = por %p269, %p270
      %p272 = scmp.ne.s32.totalorder %s260, %s261
      %p273 = scmp.eq.s32.totalorder %s41, 1
      %p274 = por %p272, %p273
      %p276 = scmp.ne.s32.totalorder %s261, %s275
      %p277 = scmp.eq.s32.totalorder %s41, 0
      %p278 = por %p276, %p277
      %s280 = sadd.s32 %s279, 1
      %p283 = scmp.eq.s32.totalorder %s35, 1
      %p284 = scmp.ne.s32.totalorder %s279, %s281
      %p285 = scmp.eq.s32.totalorder %s35, 0
      %p286 = por %p284, %p285
      %p287 = scmp.ne.s32.totalorder %s279, %s281
      %p288 = scmp.eq.s32.totalorder %s40, 1
      %p289 = por %p287, %p288
      %p290 = scmp.ne.s32.totalorder %s281, %s282
      %p291 = scmp.eq.s32.totalorder %s40, 0
      %p292 = por %p290, %p291
      %p293 = scmp.ne.s32.totalorder %s281, %s282
      %p294 = scmp.eq.s32.totalorder %s41, 1
      %p295 = por %p293, %p294
      %p297 = scmp.ne.s32.totalorder %s282, %s296
      %p298 = scmp.eq.s32.totalorder %s41, 0
      %p299 = por %p297, %p298
      %s301 = sadd.s32 %s300, 1
      %p304 = scmp.eq.s32.totalorder %s35, 1
      %p305 = scmp.ne.s32.totalorder %s300, %s302
      %p306 = scmp.eq.s32.totalorder %s35, 0
      %p307 = por %p305, %p306
      %p308 = scmp.ne.s32.totalorder %s300, %s302
      %p309 = scmp.eq.s32.totalorder %s40, 1
      %p310 = por %p308, %p309
      %p311 = scmp.ne.s32.totalorder %s302, %s303
      %p312 = scmp.eq.s32.totalorder %s40, 0
      %p313 = por %p311, %p312
      %p314 = scmp.ne.s32.totalorder %s302, %s303
      %p315 = scmp.eq.s32.totalorder %s41, 1
      %p316 = por %p314, %p315
      %p318 = scmp.ne.s32.totalorder %s303, %s317
      %p319 = scmp.eq.s32.totalorder %s41, 0
      %p320 = por %p318, %p319
      %s321 = ssub.s32 %s35, %s42
      %p322 = scmp.eq.s32.totalorder %s321, 0
      %s324 = sadd.s32 %s323, 1
      %s325 = scalar_select %p322, %s323, %s324
      %p328 = pneg %p322
      %p329 = scmp.eq.s32.totalorder %s35, 1
      %p330 = por %p328, %p329
      %p331 = scmp.ne.s32.totalorder %s323, %s326
      %p332 = scmp.eq.s32.totalorder %s35, 0
      %p333 = por %p331, %p332
      %p334 = scmp.ne.s32.totalorder %s323, %s326
      %p335 = scmp.eq.s32.totalorder %s40, 1
      %p336 = por %p334, %p335
      %p337 = scmp.ne.s32.totalorder %s326, %s327
      %p338 = scmp.eq.s32.totalorder %s40, 0
      %p339 = por %p337, %p338
      %p340 = scmp.ne.s32.totalorder %s326, %s327
      %p341 = scmp.eq.s32.totalorder %s41, 1
      %p342 = por %p340, %p341
      %p344 = scmp.ne.s32.totalorder %s327, %s343
      %p345 = scmp.eq.s32.totalorder %s41, 0
      %p346 = por %p344, %p345
      %s347 = ssub.s32 %s35, %s42
      %p348 = scmp.eq.s32.totalorder %s347, 0
      %s350 = sadd.s32 %s349, 1
      %s351 = scalar_select %p348, %s349, %s350
      %p354 = pneg %p348
      %p355 = scmp.eq.s32.totalorder %s35, 1
      %p356 = por %p354, %p355
      %p357 = scmp.ne.s32.totalorder %s349, %s352
      %p358 = scmp.eq.s32.totalorder %s35, 0
      %p359 = por %p357, %p358
      %p360 = scmp.ne.s32.totalorder %s349, %s352
      %p361 = scmp.eq.s32.totalorder %s40, 1
      %p362 = por %p360, %p361
      %p363 = scmp.ne.s32.totalorder %s352, %s353
      %p364 = scmp.eq.s32.totalorder %s40, 0
      %p365 = por %p363, %p364
      %p366 = scmp.ne.s32.totalorder %s352, %s353
      %p367 = scmp.eq.s32.totalorder %s41, 1
      %p368 = por %p366, %p367
      %p370 = scmp.ne.s32.totalorder %s353, %s369
      %p371 = scmp.eq.s32.totalorder %s41, 0
      %p372 = por %p370, %p371
      %p373 = scmp.le.s32.totalorder 1, %s35
      %p374 = scmp.lt.s32.totalorder %s35, 3
      %p375 = pnand %p373, %p374
      %p376 = pneg %p375
      // Predicated region
      $region9: #{tpu_custom_call.1} parent=5 // pred_check
        _
      $region10: #{tpu_custom_call.1} parent=5 // pred_check_branch
        %378 = sbr.rel (%p375) target = $region12
      $region11: #{tpu_custom_call.1} parent=5 // pred_region
        %s379 = ssub.s32 %s35, 1
        // Predicated region
        $region13: #{tpu_custom_call.1} parent=11 // pred_check
          %p380 = pneg %p82
        $region14: #{tpu_custom_call.1} parent=11 // pred_check_branch
          %382 = sbr.rel (%p380) target = $region16
        $region15: #{tpu_custom_call.1} parent=11 // pred_region
          _
        $region16: #{tpu_custom_call.1} parent=11 // pred_fallthru
          _
        // Predicated region
        $region17: #{tpu_custom_call.1} parent=11 // pred_check
          %p383 = pneg %p103
        $region18: #{tpu_custom_call.1} parent=11 // pred_check_branch
          %385 = sbr.rel (%p383) target = $region20
        $region19: #{tpu_custom_call.1} parent=11 // pred_region
          _
        $region20: #{tpu_custom_call.1} parent=11 // pred_fallthru
          _
        // Predicated region
        $region21: #{tpu_custom_call.1} parent=11 // pred_check
          %p386 = pneg %p124
        $region22: #{tpu_custom_call.1} parent=11 // pred_check_branch
          %388 = sbr.rel (%p386) target = $region24
        $region23: #{tpu_custom_call.1} parent=11 // pred_region
          _
        $region24: #{tpu_custom_call.1} parent=11 // pred_fallthru
          _
        // Predicated region
        $region25: #{tpu_custom_call.1} parent=11 // pred_check
          %p389 = pneg %p145
        $region26: #{tpu_custom_call.1} parent=11 // pred_check_branch
          %391 = sbr.rel (%p389) target = $region28
        $region27: #{tpu_custom_call.1} parent=11 // pred_region
          _
        $region28: #{tpu_custom_call.1} parent=11 // pred_fallthru
          _
        // Predicated region
        $region29: #{tpu_custom_call.1} parent=11 // pred_check
          %p392 = pneg %p166
        $region30: #{tpu_custom_call.1} parent=11 // pred_check_branch
          %394 = sbr.rel (%p392) target = $region32
        $region31: #{tpu_custom_call.1} parent=11 // pred_region
          _
        $region32: #{tpu_custom_call.1} parent=11 // pred_fallthru
          _
        // Predicated region
        $region33: #{tpu_custom_call.1} parent=11 // pred_check
          %p395 = pneg %p187
        $region34: #{tpu_custom_call.1} parent=11 // pred_check_branch
          %397 = sbr.rel (%p395) target = $region36
        $region35: #{tpu_custom_call.1} parent=11 // pred_region
          _
        $region36: #{tpu_custom_call.1} parent=11 // pred_fallthru
          _
        // Predicated region
        $region37: #{tpu_custom_call.1} parent=11 // pred_check
          %p398 = pneg %p208
        $region38: #{tpu_custom_call.1} parent=11 // pred_check_branch
          %400 = sbr.rel (%p398) target = $region40
        $region39: #{tpu_custom_call.1} parent=11 // pred_region
          _
        $region40: #{tpu_custom_call.1} parent=11 // pred_fallthru
          _
        // Predicated region
        $region41: #{tpu_custom_call.1} parent=11 // pred_check
          %p401 = pneg %p229
        $region42: #{tpu_custom_call.1} parent=11 // pred_check_branch
          %403 = sbr.rel (%p401) target = $region44
        $region43: #{tpu_custom_call.1} parent=11 // pred_region
          _
        $region44: #{tpu_custom_call.1} parent=11 // pred_fallthru
          _
        // Predicated region
        $region45: #{tpu_custom_call.1} parent=11 // pred_check
          %p404 = pneg %p250
        $region46: #{tpu_custom_call.1} parent=11 // pred_check_branch
          %406 = sbr.rel (%p404) target = $region48
        $region47: #{tpu_custom_call.1} parent=11 // pred_region
          _
        $region48: #{tpu_custom_call.1} parent=11 // pred_fallthru
          _
        // Predicated region
        $region49: #{tpu_custom_call.1} parent=11 // pred_check
          %p407 = pneg %p271
        $region50: #{tpu_custom_call.1} parent=11 // pred_check_branch
          %409 = sbr.rel (%p407) target = $region52
        $region51: #{tpu_custom_call.1} parent=11 // pred_region
          _
        $region52: #{tpu_custom_call.1} parent=11 // pred_fallthru
          _
        // Predicated region
        $region53: #{tpu_custom_call.1} parent=11 // pred_check
          %p410 = pneg %p292
        $region54: #{tpu_custom_call.1} parent=11 // pred_check_branch
          %412 = sbr.rel (%p410) target = $region56
        $region55: #{tpu_custom_call.1} parent=11 // pred_region
          _
        $region56: #{tpu_custom_call.1} parent=11 // pred_fallthru
          _
        // Predicated region
        $region57: #{tpu_custom_call.1} parent=11 // pred_check
          %p413 = pneg %p313
        $region58: #{tpu_custom_call.1} parent=11 // pred_check_branch
          %415 = sbr.rel (%p413) target = $region60
        $region59: #{tpu_custom_call.1} parent=11 // pred_region
          _
        $region60: #{tpu_custom_call.1} parent=11 // pred_fallthru
          _
      $region12: #{tpu_custom_call.1} parent=5 // pred_fallthru
        _
      %p416 = scmp.lt.s32.totalorder %s35, 2
      // Predicated region
      $region61: #{tpu_custom_call.1} parent=5 // pred_check
        %p417 = pneg %p416
      $region62: #{tpu_custom_call.1} parent=5 // pred_check_branch
        %419 = sbr.rel (%p417) target = $region64
      $region63: #{tpu_custom_call.1} parent=5 // pred_region
        // Predicated region
        $region65: #{tpu_custom_call.1} parent=63 // pred_check
          %p420 = pneg %p55
        $region66: #{tpu_custom_call.1} parent=63 // pred_check_branch
          %422 = sbr.rel (%p420) target = $region68
        $region67: #{tpu_custom_call.1} parent=63 // pred_region
          %p423 = scmp.lt.s32.totalorder %s35, 1
          %s424 = scalar_select %p423, %s35, 1
          %s425 = scalar_lea.vmem %s1, %s424
        $region68: #{tpu_custom_call.1} parent=63 // pred_fallthru
          _
      $region64: #{tpu_custom_call.1} parent=5 // pred_fallthru
        _
      %p426 = scmp.le.s32.totalorder 1, %s35
      %p427 = scmp.lt.s32.totalorder %s35, 3
      %p428 = pnand %p426, %p427
      %p429 = pneg %p428
      // Predicated region
      $region69: #{tpu_custom_call.1} parent=5 // pred_check
        _
      $region70: #{tpu_custom_call.1} parent=5 // pred_check_branch
        %431 = sbr.rel (%p428) target = $region72
      $region71: #{tpu_custom_call.1} parent=5 // pred_region
        %s432 = ssub.s32 %s35, 1
        %p433 = scmp.lt.s32.totalorder %s40, 1
        %s434 = scalar_select %p433, %s40, 1
        %s435 = scalar_lea.vmem %s1, %s434
        %p436 = pneg %p61
        %p437 = pneg %p58
        %p438 = pneg %p82
        %p439 = pneg %p79
        %p440 = pneg %p103
        %p441 = pneg %p100
        %p442 = pneg %p124
        %p443 = pneg %p121
        %p444 = pneg %p145
        %p445 = pneg %p142
        %p446 = pneg %p166
        %p447 = pneg %p163
        %p448 = pneg %p187
        %p449 = pneg %p184
        %p450 = pneg %p208
        %p451 = pneg %p205
        %p452 = pneg %p229
        %p453 = pneg %p226
        %p454 = pneg %p250
        %p455 = pneg %p247
        %p456 = pneg %p271
        %p457 = pneg %p268
        %p458 = pneg %p292
        %p459 = pneg %p289
        %p460 = pneg %p313
        %p461 = pneg %p310
        %p462 = pneg %p339
        %p463 = pneg %p336
        %s464 = sand.u32 %s326, 1
        %s465 = scalar_lea.sflag [#allocation7], %s464
        %s466 = sand.u32 %s326, 1
        %s467 = smul.addr %s466, 16
        %s468 = scalar_lea.vmem [#allocation6], %s467
        %p469 = pneg %p365
        %p470 = pneg %p362
        %s471 = sand.u32 %s352, 1
        %s472 = scalar_lea.sflag [#allocation9], %s471
        %s473 = sand.u32 %s352, 1
        %s474 = scalar_lea.vmem [#allocation8], %s473
        %p475 = scmp.lt.s32.totalorder %s40, 1
        %s476 = scalar_select %p475, %s40, 1
        %s477 = scalar_lea.vmem %s1, %s476
        %s479 = smul.u32 %s40, 128
        %s480 = sld [smem:[#allocation5 + %s479]]
        %s481 = scalar_lea.vmem %s2, %s480
        %p483 = scmp.lt.u32.totalorder 1, 8
        %p484 = pneg %p483
        // Predicated region
        $region73: #{tpu_custom_call.1} parent=71 // pred_check
          _
        $region74: #{tpu_custom_call.1} parent=71 // pred_check_branch
          %486 = sbr.rel (%p483) target = $region76
        $region75: #{tpu_custom_call.1} parent=71 // pred_region
          %s501 = sand.u32 1, 7
          %p502 = scmp.eq.s32.totalorder %s501, 0
          %p503 = pneg %p502
          // Predicated region
          $region88: #{tpu_custom_call.1} parent=75 // pred_check
            _
          $region89: #{tpu_custom_call.1} parent=75 // pred_check_branch
            %505 = sbr.rel (%p502) target = $region91
          $region90: #{tpu_custom_call.1} parent=75 // pred_region
            %s506 = sand.u32 1, 7
            %s507 = ssub.s32 1, %s506
            %s508 = scalar_lea.vmem %s481, %s507
            %s509 = ssub.s32 1, %s506
            %s510 = scalar_lea.vmem [#allocation2], %s509
            %s511 = sshllo.u32 0, %s506
            loop: start=0, step=1, limit=1
            $region92: #{tpu_custom_call.1} parent=90 // loop_pre_header
              _
            $region93: #{tpu_custom_call.1} parent=90 // loop_header
              %s513 = sphi 0, %s517
              %p514 = scmp.ge.s32.totalorder %s513, 1
              %s518 = sphi %s508, %s508
              %s519 = sphi %s510, %s510
            $region94: #{tpu_custom_call.1} parent=90 // loop_header_branch
              %516 = sbr.rel (%p514) target = $region98
            $region95: #{tpu_custom_call.1} parent=90 // loop_body
              %v520 = vld [vmem:[%s518] sm:%s511]
              %521 = vst [vmem:[%s519] sm:%s511] %v520
            $region96: #{tpu_custom_call.1} parent=90 // loop_footer
              %s517 = sadd.s32 1, %s513
            $region97: #{tpu_custom_call.1} parent=90 // loop_footer_branch
              %512 = sbr.rel target = $region93
            $region98: #{tpu_custom_call.1} parent=90 // loop_exit
              _
          $region91: #{tpu_custom_call.1} parent=75 // pred_fallthru
            _
        $region76: #{tpu_custom_call.1} parent=71 // pred_fallthru
          _
        // Predicated region
        $region77: #{tpu_custom_call.1} parent=71 // pred_check
          %p487 = pneg %p483
        $region78: #{tpu_custom_call.1} parent=71 // pred_check_branch
          %489 = sbr.rel (%p487) target = $region80
        $region79: #{tpu_custom_call.1} parent=71 // pred_region
          %s490 = sshllo.u32 0, 1
          loop: start=0, step=1, limit=1
          $region81: #{tpu_custom_call.1} parent=79 // loop_pre_header
            _
          $region82: #{tpu_custom_call.1} parent=79 // loop_header
            %s492 = sphi 0, %s496
            %p493 = scmp.ge.s32.totalorder %s492, 1
            %s497 = sphi %s481, %s481
            %s498 = sphi [#allocation2], [#allocation2]
          $region83: #{tpu_custom_call.1} parent=79 // loop_header_branch
            %495 = sbr.rel (%p493) target = $region87
          $region84: #{tpu_custom_call.1} parent=79 // loop_body
            %v499 = vld [vmem:[%s497] sm:%s490]
            %500 = vst [vmem:[%s498] sm:%s490] %v499
          $region85: #{tpu_custom_call.1} parent=79 // loop_footer
            %s496 = sadd.s32 1, %s492
          $region86: #{tpu_custom_call.1} parent=79 // loop_footer_branch
            %491 = sbr.rel target = $region82
          $region87: #{tpu_custom_call.1} parent=79 // loop_exit
            _
        $region80: #{tpu_custom_call.1} parent=71 // pred_fallthru
          _
        // Predicated region
        $region99: #{tpu_custom_call.1} parent=71 // pred_check
          _
        $region100: #{tpu_custom_call.1} parent=71 // pred_check_branch
          %524 = sbr.rel (0) target = $region102
        $region101: #{tpu_custom_call.1} parent=71 // pred_region
          %525 = vsyncadd [#allocation3], 16
        $region102: #{tpu_custom_call.1} parent=71 // pred_fallthru
          _
        %s526 = sadd.s32 %s479, 1
        %s527 = sld [smem:[#allocation5 + %s526]]
        %s528 = scalar_lea.vmem %s2, %s527
        %s529 = scalar_lea.vmem [#allocation2], 1
        %s530 = scalar_lea.sflag [#allocation3], 1
        %p532 = scmp.lt.u32.totalorder 1, 8
        %p533 = pneg %p532
        // Predicated region
        $region103: #{tpu_custom_call.1} parent=71 // pred_check
          _
        $region104: #{tpu_custom_call.1} parent=71 // pred_check_branch
          %535 = sbr.rel (%p532) target = $region106
        $region105: #{tpu_custom_call.1} parent=71 // pred_region
          %s550 = sand.u32 1, 7
          %p551 = scmp.eq.s32.totalorder %s550, 0
          %p552 = pneg %p551
          // Predicated region
          $region118: #{tpu_custom_call.1} parent=105 // pred_check
            _
          $region119: #{tpu_custom_call.1} parent=105 // pred_check_branch
            %554 = sbr.rel (%p551) target = $region121
          $region120: #{tpu_custom_call.1} parent=105 // pred_region
            %s555 = sand.u32 1, 7
            %s556 = ssub.s32 1, %s555
            %s557 = scalar_lea.vmem %s528, %s556
            %s558 = ssub.s32 1, %s555
            %s559 = scalar_lea.vmem %s529, %s558 [#allocation2]
            %s560 = sshllo.u32 0, %s555
            loop: start=0, step=1, limit=1
            $region122: #{tpu_custom_call.1} parent=120 // loop_pre_header
              _
            $region123: #{tpu_custom_call.1} parent=120 // loop_header
              %s562 = sphi 0, %s566
              %p563 = scmp.ge.s32.totalorder %s562, 1
              %s567 = sphi %s557, %s557
              %s568 = sphi %s559, %s559
            $region124: #{tpu_custom_call.1} parent=120 // loop_header_branch
              %565 = sbr.rel (%p563) target = $region128
            $region125: #{tpu_custom_call.1} parent=120 // loop_body
              %v569 = vld [vmem:[%s567] sm:%s560]
              %570 = vst [vmem:[%s568] sm:%s560] %v569
            $region126: #{tpu_custom_call.1} parent=120 // loop_footer
              %s566 = sadd.s32 1, %s562
            $region127: #{tpu_custom_call.1} parent=120 // loop_footer_branch
              %561 = sbr.rel target = $region123
            $region128: #{tpu_custom_call.1} parent=120 // loop_exit
              _
          $region121: #{tpu_custom_call.1} parent=105 // pred_fallthru
            _
        $region106: #{tpu_custom_call.1} parent=71 // pred_fallthru
          _
        // Predicated region
        $region107: #{tpu_custom_call.1} parent=71 // pred_check
          %p536 = pneg %p532
        $region108: #{tpu_custom_call.1} parent=71 // pred_check_branch
          %538 = sbr.rel (%p536) target = $region110
        $region109: #{tpu_custom_call.1} parent=71 // pred_region
          %s539 = sshllo.u32 0, 1
          loop: start=0, step=1, limit=1
          $region111: #{tpu_custom_call.1} parent=109 // loop_pre_header
            _
          $region112: #{tpu_custom_call.1} parent=109 // loop_header
            %s541 = sphi 0, %s545
            %p542 = scmp.ge.s32.totalorder %s541, 1
            %s546 = sphi %s528, %s528
            %s547 = sphi %s529, %s529
          $region113: #{tpu_custom_call.1} parent=109 // loop_header_branch
            %544 = sbr.rel (%p542) target = $region117
          $region114: #{tpu_custom_call.1} parent=109 // loop_body
            %v548 = vld [vmem:[%s546] sm:%s539]
            %549 = vst [vmem:[%s547] sm:%s539] %v548
          $region115: #{tpu_custom_call.1} parent=109 // loop_footer
            %s545 = sadd.s32 1, %s541
          $region116: #{tpu_custom_call.1} parent=109 // loop_footer_branch
            %540 = sbr.rel target = $region112
          $region117: #{tpu_custom_call.1} parent=109 // loop_exit
            _
        $region110: #{tpu_custom_call.1} parent=71 // pred_fallthru
          _
        // Predicated region
        $region129: #{tpu_custom_call.1} parent=71 // pred_check
          _
        $region130: #{tpu_custom_call.1} parent=71 // pred_check_branch
          %573 = sbr.rel (0) target = $region132
        $region131: #{tpu_custom_call.1} parent=71 // pred_region
          %574 = vsyncadd %s530, 16
        $region132: #{tpu_custom_call.1} parent=71 // pred_fallthru
          _
        %s575 = sadd.s32 %s479, 2
        %s576 = sld [smem:[#allocation5 + %s575]]
        %s577 = scalar_lea.vmem %s2, %s576
        %s578 = scalar_lea.vmem [#allocation2], 2
        %s579 = scalar_lea.sflag [#allocation3], 2
        %p581 = scmp.lt.u32.totalorder 1, 8
        %p582 = pneg %p581
        // Predicated region
        $region133: #{tpu_custom_call.1} parent=71 // pred_check
          _
        $region134: #{tpu_custom_call.1} parent=71 // pred_check_branch
          %584 = sbr.rel (%p581) target = $region136
        $region135: #{tpu_custom_call.1} parent=71 // pred_region
          %s599 = sand.u32 1, 7
          %p600 = scmp.eq.s32.totalorder %s599, 0
          %p601 = pneg %p600
          // Predicated region
          $region148: #{tpu_custom_call.1} parent=135 // pred_check
            _
          $region149: #{tpu_custom_call.1} parent=135 // pred_check_branch
            %603 = sbr.rel (%p600) target = $region151
          $region150: #{tpu_custom_call.1} parent=135 // pred_region
            %s604 = sand.u32 1, 7
            %s605 = ssub.s32 1, %s604
            %s606 = scalar_lea.vmem %s577, %s605
            %s607 = ssub.s32 1, %s604
            %s608 = scalar_lea.vmem %s578, %s607 [#allocation2]
            %s609 = sshllo.u32 0, %s604
            loop: start=0, step=1, limit=1
            $region152: #{tpu_custom_call.1} parent=150 // loop_pre_header
              _
            $region153: #{tpu_custom_call.1} parent=150 // loop_header
              %s611 = sphi 0, %s615
              %p612 = scmp.ge.s32.totalorder %s611, 1
              %s616 = sphi %s606, %s606
              %s617 = sphi %s608, %s608
            $region154: #{tpu_custom_call.1} parent=150 // loop_header_branch
              %614 = sbr.rel (%p612) target = $region158
            $region155: #{tpu_custom_call.1} parent=150 // loop_body
              %v618 = vld [vmem:[%s616] sm:%s609]
              %619 = vst [vmem:[%s617] sm:%s609] %v618
            $region156: #{tpu_custom_call.1} parent=150 // loop_footer
              %s615 = sadd.s32 1, %s611
            $region157: #{tpu_custom_call.1} parent=150 // loop_footer_branch
              %610 = sbr.rel target = $region153
            $region158: #{tpu_custom_call.1} parent=150 // loop_exit
              _
          $region151: #{tpu_custom_call.1} parent=135 // pred_fallthru
            _
        $region136: #{tpu_custom_call.1} parent=71 // pred_fallthru
          _
        // Predicated region
        $region137: #{tpu_custom_call.1} parent=71 // pred_check
          %p585 = pneg %p581
        $region138: #{tpu_custom_call.1} parent=71 // pred_check_branch
          %587 = sbr.rel (%p585) target = $region140
        $region139: #{tpu_custom_call.1} parent=71 // pred_region
          %s588 = sshllo.u32 0, 1
          loop: start=0, step=1, limit=1
          $region141: #{tpu_custom_call.1} parent=139 // loop_pre_header
            _
          $region142: #{tpu_custom_call.1} parent=139 // loop_header
            %s590 = sphi 0, %s594
            %p591 = scmp.ge.s32.totalorder %s590, 1
            %s595 = sphi %s577, %s577
            %s596 = sphi %s578, %s578
          $region143: #{tpu_custom_call.1} parent=139 // loop_header_branch
            %593 = sbr.rel (%p591) target = $region147
          $region144: #{tpu_custom_call.1} parent=139 // loop_body
            %v597 = vld [vmem:[%s595] sm:%s588]
            %598 = vst [vmem:[%s596] sm:%s588] %v597
          $region145: #{tpu_custom_call.1} parent=139 // loop_footer
            %s594 = sadd.s32 1, %s590
          $region146: #{tpu_custom_call.1} parent=139 // loop_footer_branch
            %589 = sbr.rel target = $region142
          $region147: #{tpu_custom_call.1} parent=139 // loop_exit
            _
        $region140: #{tpu_custom_call.1} parent=71 // pred_fallthru
          _
        // Predicated region
        $region159: #{tpu_custom_call.1} parent=71 // pred_check
          _
        $region160: #{tpu_custom_call.1} parent=71 // pred_check_branch
          %622 = sbr.rel (0) target = $region162
        $region161: #{tpu_custom_call.1} parent=71 // pred_region
          %623 = vsyncadd %s579, 16
        $region162: #{tpu_custom_call.1} parent=71 // pred_fallthru
          _
        %s624 = sadd.s32 %s479, 3
        %s625 = sld [smem:[#allocation5 + %s624]]
        %s626 = scalar_lea.vmem %s2, %s625
        %s627 = scalar_lea.vmem [#allocation2], 3
        %s628 = scalar_lea.sflag [#allocation3], 3
        %p630 = scmp.lt.u32.totalorder 1, 8
        %p631 = pneg %p630
        // Predicated region
        $region163: #{tpu_custom_call.1} parent=71 // pred_check
          _
        $region164: #{tpu_custom_call.1} parent=71 // pred_check_branch
          %633 = sbr.rel (%p630) target = $region166
        $region165: #{tpu_custom_call.1} parent=71 // pred_region
          %s648 = sand.u32 1, 7
          %p649 = scmp.eq.s32.totalorder %s648, 0
          %p650 = pneg %p649
          // Predicated region
          $region178: #{tpu_custom_call.1} parent=165 // pred_check
            _
          $region179: #{tpu_custom_call.1} parent=165 // pred_check_branch
            %652 = sbr.rel (%p649) target = $region181
          $region180: #{tpu_custom_call.1} parent=165 // pred_region
            %s653 = sand.u32 1, 7
            %s654 = ssub.s32 1, %s653
            %s655 = scalar_lea.vmem %s626, %s654
            %s656 = ssub.s32 1, %s653
            %s657 = scalar_lea.vmem %s627, %s656 [#allocation2]
            %s658 = sshllo.u32 0, %s653
            loop: start=0, step=1, limit=1
            $region182: #{tpu_custom_call.1} parent=180 // loop_pre_header
              _
            $region183: #{tpu_custom_call.1} parent=180 // loop_header
              %s660 = sphi 0, %s664
              %p661 = scmp.ge.s32.totalorder %s660, 1
              %s665 = sphi %s655, %s655
              %s666 = sphi %s657, %s657
            $region184: #{tpu_custom_call.1} parent=180 // loop_header_branch
              %663 = sbr.rel (%p661) target = $region188
            $region185: #{tpu_custom_call.1} parent=180 // loop_body
              %v667 = vld [vmem:[%s665] sm:%s658]
              %668 = vst [vmem:[%s666] sm:%s658] %v667
            $region186: #{tpu_custom_call.1} parent=180 // loop_footer
              %s664 = sadd.s32 1, %s660
            $region187: #{tpu_custom_call.1} parent=180 // loop_footer_branch
              %659 = sbr.rel target = $region183
            $region188: #{tpu_custom_call.1} parent=180 // loop_exit
              _
          $region181: #{tpu_custom_call.1} parent=165 // pred_fallthru
            _
        $region166: #{tpu_custom_call.1} parent=71 // pred_fallthru
          _
        // Predicated region
        $region167: #{tpu_custom_call.1} parent=71 // pred_check
          %p634 = pneg %p630
        $region168: #{tpu_custom_call.1} parent=71 // pred_check_branch
          %636 = sbr.rel (%p634) target = $region170
        $region169: #{tpu_custom_call.1} parent=71 // pred_region
          %s637 = sshllo.u32 0, 1
          loop: start=0, step=1, limit=1
          $region171: #{tpu_custom_call.1} parent=169 // loop_pre_header
            _
          $region172: #{tpu_custom_call.1} parent=169 // loop_header
            %s639 = sphi 0, %s643
            %p640 = scmp.ge.s32.totalorder %s639, 1
            %s644 = sphi %s626, %s626
            %s645 = sphi %s627, %s627
          $region173: #{tpu_custom_call.1} parent=169 // loop_header_branch
            %642 = sbr.rel (%p640) target = $region177
          $region174: #{tpu_custom_call.1} parent=169 // loop_body
            %v646 = vld [vmem:[%s644] sm:%s637]
            %647 = vst [vmem:[%s645] sm:%s637] %v646
          $region175: #{tpu_custom_call.1} parent=169 // loop_footer
            %s643 = sadd.s32 1, %s639
          $region176: #{tpu_custom_call.1} parent=169 // loop_footer_branch
            %638 = sbr.rel target = $region172
          $region177: #{tpu_custom_call.1} parent=169 // loop_exit
            _
        $region170: #{tpu_custom_call.1} parent=71 // pred_fallthru
          _
        // Predicated region
        $region189: #{tpu_custom_call.1} parent=71 // pred_check
          _
        $region190: #{tpu_custom_call.1} parent=71 // pred_check_branch
          %671 = sbr.rel (0) target = $region192
        $region191: #{tpu_custom_call.1} parent=71 // pred_region
          %672 = vsyncadd %s628, 16
        $region192: #{tpu_custom_call.1} parent=71 // pred_fallthru
          _
        %s673 = sadd.s32 %s479, 4
        %s674 = sld [smem:[#allocation5 + %s673]]
        %s675 = scalar_lea.vmem %s2, %s674
        %s676 = scalar_lea.vmem [#allocation2], 4
        %s677 = scalar_lea.sflag [#allocation3], 4
        %p679 = scmp.lt.u32.totalorder 1, 8
        %p680 = pneg %p679
        // Predicated region
        $region193: #{tpu_custom_call.1} parent=71 // pred_check
          _
        $region194: #{tpu_custom_call.1} parent=71 // pred_check_branch
          %682 = sbr.rel (%p679) target = $region196
        $region195: #{tpu_custom_call.1} parent=71 // pred_region
          %s697 = sand.u32 1, 7
          %p698 = scmp.eq.s32.totalorder %s697, 0
          %p699 = pneg %p698
          // Predicated region
          $region208: #{tpu_custom_call.1} parent=195 // pred_check
            _
          $region209: #{tpu_custom_call.1} parent=195 // pred_check_branch
            %701 = sbr.rel (%p698) target = $region211
          $region210: #{tpu_custom_call.1} parent=195 // pred_region
            %s702 = sand.u32 1, 7
            %s703 = ssub.s32 1, %s702
            %s704 = scalar_lea.vmem %s675, %s703
            %s705 = ssub.s32 1, %s702
            %s706 = scalar_lea.vmem %s676, %s705 [#allocation2]
            %s707 = sshllo.u32 0, %s702
            loop: start=0, step=1, limit=1
            $region212: #{tpu_custom_call.1} parent=210 // loop_pre_header
              _
            $region213: #{tpu_custom_call.1} parent=210 // loop_header
              %s709 = sphi 0, %s713
              %p710 = scmp.ge.s32.totalorder %s709, 1
              %s714 = sphi %s704, %s704
              %s715 = sphi %s706, %s706
            $region214: #{tpu_custom_call.1} parent=210 // loop_header_branch
              %712 = sbr.rel (%p710) target = $region218
            $region215: #{tpu_custom_call.1} parent=210 // loop_body
              %v716 = vld [vmem:[%s714] sm:%s707]
              %717 = vst [vmem:[%s715] sm:%s707] %v716
            $region216: #{tpu_custom_call.1} parent=210 // loop_footer
              %s713 = sadd.s32 1, %s709
            $region217: #{tpu_custom_call.1} parent=210 // loop_footer_branch
              %708 = sbr.rel target = $region213
            $region218: #{tpu_custom_call.1} parent=210 // loop_exit
              _
          $region211: #{tpu_custom_call.1} parent=195 // pred_fallthru
            _
        $region196: #{tpu_custom_call.1} parent=71 // pred_fallthru
          _
        // Predicated region
        $region197: #{tpu_custom_call.1} parent=71 // pred_check
          %p683 = pneg %p679
        $region198: #{tpu_custom_call.1} parent=71 // pred_check_branch
          %685 = sbr.rel (%p683) target = $region200
        $region199: #{tpu_custom_call.1} parent=71 // pred_region
          %s686 = sshllo.u32 0, 1
          loop: start=0, step=1, limit=1
          $region201: #{tpu_custom_call.1} parent=199 // loop_pre_header
            _
          $region202: #{tpu_custom_call.1} parent=199 // loop_header
            %s688 = sphi 0, %s692
            %p689 = scmp.ge.s32.totalorder %s688, 1
            %s693 = sphi %s675, %s675
            %s694 = sphi %s676, %s676
          $region203: #{tpu_custom_call.1} parent=199 // loop_header_branch
            %691 = sbr.rel (%p689) target = $region207
          $region204: #{tpu_custom_call.1} parent=199 // loop_body
            %v695 = vld [vmem:[%s693] sm:%s686]
            %696 = vst [vmem:[%s694] sm:%s686] %v695
          $region205: #{tpu_custom_call.1} parent=199 // loop_footer
            %s692 = sadd.s32 1, %s688
          $region206: #{tpu_custom_call.1} parent=199 // loop_footer_branch
            %687 = sbr.rel target = $region202
          $region207: #{tpu_custom_call.1} parent=199 // loop_exit
            _
        $region200: #{tpu_custom_call.1} parent=71 // pred_fallthru
          _
        // Predicated region
        $region219: #{tpu_custom_call.1} parent=71 // pred_check
          _
        $region220: #{tpu_custom_call.1} parent=71 // pred_check_branch
          %720 = sbr.rel (0) target = $region222
        $region221: #{tpu_custom_call.1} parent=71 // pred_region
          %721 = vsyncadd %s677, 16
        $region222: #{tpu_custom_call.1} parent=71 // pred_fallthru
          _
        %s722 = sadd.s32 %s479, 5
        %s723 = sld [smem:[#allocation5 + %s722]]
        %s724 = scalar_lea.vmem %s2, %s723
        %s725 = scalar_lea.vmem [#allocation2], 5
        %s726 = scalar_lea.sflag [#allocation3], 5
        %p728 = scmp.lt.u32.totalorder 1, 8
        %p729 = pneg %p728
        // Predicated region
        $region223: #{tpu_custom_call.1} parent=71 // pred_check
          _
        $region224: #{tpu_custom_call.1} parent=71 // pred_check_branch
          %731 = sbr.rel (%p728) target = $region226
        $region225: #{tpu_custom_call.1} parent=71 // pred_region
          %s746 = sand.u32 1, 7
          %p747 = scmp.eq.s32.totalorder %s746, 0
          %p748 = pneg %p747
          // Predicated region
          $region238: #{tpu_custom_call.1} parent=225 // pred_check
            _
          $region239: #{tpu_custom_call.1} parent=225 // pred_check_branch
            %750 = sbr.rel (%p747) target = $region241
          $region240: #{tpu_custom_call.1} parent=225 // pred_region
            %s751 = sand.u32 1, 7
            %s752 = ssub.s32 1, %s751
            %s753 = scalar_lea.vmem %s724, %s752
            %s754 = ssub.s32 1, %s751
            %s755 = scalar_lea.vmem %s725, %s754 [#allocation2]
            %s756 = sshllo.u32 0, %s751
            loop: start=0, step=1, limit=1
            $region242: #{tpu_custom_call.1} parent=240 // loop_pre_header
              _
            $region243: #{tpu_custom_call.1} parent=240 // loop_header
              %s758 = sphi 0, %s762
              %p759 = scmp.ge.s32.totalorder %s758, 1
              %s763 = sphi %s753, %s753
              %s764 = sphi %s755, %s755
            $region244: #{tpu_custom_call.1} parent=240 // loop_header_branch
              %761 = sbr.rel (%p759) target = $region248
            $region245: #{tpu_custom_call.1} parent=240 // loop_body
              %v765 = vld [vmem:[%s763] sm:%s756]
              %766 = vst [vmem:[%s764] sm:%s756] %v765
            $region246: #{tpu_custom_call.1} parent=240 // loop_footer
              %s762 = sadd.s32 1, %s758
            $region247: #{tpu_custom_call.1} parent=240 // loop_footer_branch
              %757 = sbr.rel target = $region243
            $region248: #{tpu_custom_call.1} parent=240 // loop_exit
              _
          $region241: #{tpu_custom_call.1} parent=225 // pred_fallthru
            _
        $region226: #{tpu_custom_call.1} parent=71 // pred_fallthru
          _
        // Predicated region
        $region227: #{tpu_custom_call.1} parent=71 // pred_check
          %p732 = pneg %p728
        $region228: #{tpu_custom_call.1} parent=71 // pred_check_branch
          %734 = sbr.rel (%p732) target = $region230
        $region229: #{tpu_custom_call.1} parent=71 // pred_region
          %s735 = sshllo.u32 0, 1
          loop: start=0, step=1, limit=1
          $region231: #{tpu_custom_call.1} parent=229 // loop_pre_header
            _
          $region232: #{tpu_custom_call.1} parent=229 // loop_header
            %s737 = sphi 0, %s741
            %p738 = scmp.ge.s32.totalorder %s737, 1
            %s742 = sphi %s724, %s724
            %s743 = sphi %s725, %s725
          $region233: #{tpu_custom_call.1} parent=229 // loop_header_branch
            %740 = sbr.rel (%p738) target = $region237
          $region234: #{tpu_custom_call.1} parent=229 // loop_body
            %v744 = vld [vmem:[%s742] sm:%s735]
            %745 = vst [vmem:[%s743] sm:%s735] %v744
          $region235: #{tpu_custom_call.1} parent=229 // loop_footer
            %s741 = sadd.s32 1, %s737
          $region236: #{tpu_custom_call.1} parent=229 // loop_footer_branch
            %736 = sbr.rel target = $region232
          $region237: #{tpu_custom_call.1} parent=229 // loop_exit
            _
        $region230: #{tpu_custom_call.1} parent=71 // pred_fallthru
          _
        // Predicated region
        $region249: #{tpu_custom_call.1} parent=71 // pred_check
          _
        $region250: #{tpu_custom_call.1} parent=71 // pred_check_branch
          %769 = sbr.rel (0) target = $region252
        $region251: #{tpu_custom_call.1} parent=71 // pred_region
          %770 = vsyncadd %s726, 16
        $region252: #{tpu_custom_call.1} parent=71 // pred_fallthru
          _
        %s771 = sadd.s32 %s479, 6
        %s772 = sld [smem:[#allocation5 + %s771]]
        %s773 = scalar_lea.vmem %s2, %s772
        %s774 = scalar_lea.vmem [#allocation2], 6
        %s775 = scalar_lea.sflag [#allocation3], 6
        %p777 = scmp.lt.u32.totalorder 1, 8
        %p778 = pneg %p777
        // Predicated region
        $region253: #{tpu_custom_call.1} parent=71 // pred_check
          _
        $region254: #{tpu_custom_call.1} parent=71 // pred_check_branch
          %780 = sbr.rel (%p777) target = $region256
        $region255: #{tpu_custom_call.1} parent=71 // pred_region
          %s795 = sand.u32 1, 7
          %p796 = scmp.eq.s32.totalorder %s795, 0
          %p797 = pneg %p796
          // Predicated region
          $region268: #{tpu_custom_call.1} parent=255 // pred_check
            _
          $region269: #{tpu_custom_call.1} parent=255 // pred_check_branch
            %799 = sbr.rel (%p796) target = $region271
          $region270: #{tpu_custom_call.1} parent=255 // pred_region
            %s800 = sand.u32 1, 7
            %s801 = ssub.s32 1, %s800
            %s802 = scalar_lea.vmem %s773, %s801
            %s803 = ssub.s32 1, %s800
            %s804 = scalar_lea.vmem %s774, %s803 [#allocation2]
            %s805 = sshllo.u32 0, %s800
            loop: start=0, step=1, limit=1
            $region272: #{tpu_custom_call.1} parent=270 // loop_pre_header
              _
            $region273: #{tpu_custom_call.1} parent=270 // loop_header
              %s807 = sphi 0, %s811
              %p808 = scmp.ge.s32.totalorder %s807, 1
              %s812 = sphi %s802, %s802
              %s813 = sphi %s804, %s804
            $region274: #{tpu_custom_call.1} parent=270 // loop_header_branch
              %810 = sbr.rel (%p808) target = $region278
            $region275: #{tpu_custom_call.1} parent=270 // loop_body
              %v814 = vld [vmem:[%s812] sm:%s805]
              %815 = vst [vmem:[%s813] sm:%s805] %v814
            $region276: #{tpu_custom_call.1} parent=270 // loop_footer
              %s811 = sadd.s32 1, %s807
            $region277: #{tpu_custom_call.1} parent=270 // loop_footer_branch
              %806 = sbr.rel target = $region273
            $region278: #{tpu_custom_call.1} parent=270 // loop_exit
              _
          $region271: #{tpu_custom_call.1} parent=255 // pred_fallthru
            _
        $region256: #{tpu_custom_call.1} parent=71 // pred_fallthru
          _
        // Predicated region
        $region257: #{tpu_custom_call.1} parent=71 // pred_check
          %p781 = pneg %p777
        $region258: #{tpu_custom_call.1} parent=71 // pred_check_branch
          %783 = sbr.rel (%p781) target = $region260
        $region259: #{tpu_custom_call.1} parent=71 // pred_region
          %s784 = sshllo.u32 0, 1
          loop: start=0, step=1, limit=1
          $region261: #{tpu_custom_call.1} parent=259 // loop_pre_header
            _
          $region262: #{tpu_custom_call.1} parent=259 // loop_header
            %s786 = sphi 0, %s790
            %p787 = scmp.ge.s32.totalorder %s786, 1
            %s791 = sphi %s773, %s773
            %s792 = sphi %s774, %s774
          $region263: #{tpu_custom_call.1} parent=259 // loop_header_branch
            %789 = sbr.rel (%p787) target = $region267
          $region264: #{tpu_custom_call.1} parent=259 // loop_body
            %v793 = vld [vmem:[%s791] sm:%s784]
            %794 = vst [vmem:[%s792] sm:%s784] %v793
          $region265: #{tpu_custom_call.1} parent=259 // loop_footer
            %s790 = sadd.s32 1, %s786
          $region266: #{tpu_custom_call.1} parent=259 // loop_footer_branch
            %785 = sbr.rel target = $region262
          $region267: #{tpu_custom_call.1} parent=259 // loop_exit
            _
        $region260: #{tpu_custom_call.1} parent=71 // pred_fallthru
          _
        // Predicated region
        $region279: #{tpu_custom_call.1} parent=71 // pred_check
          _
        $region280: #{tpu_custom_call.1} parent=71 // pred_check_branch
          %818 = sbr.rel (0) target = $region282
        $region281: #{tpu_custom_call.1} parent=71 // pred_region
          %819 = vsyncadd %s775, 16
        $region282: #{tpu_custom_call.1} parent=71 // pred_fallthru
          _
        %s820 = sadd.s32 %s479, 7
        %s821 = sld [smem:[#allocation5 + %s820]]
        %s822 = scalar_lea.vmem %s2, %s821
        %s823 = scalar_lea.vmem [#allocation2], 7
        %s824 = scalar_lea.sflag [#allocation3], 7
        %p826 = scmp.lt.u32.totalorder 1, 8
        %p827 = pneg %p826
        // Predicated region
        $region283: #{tpu_custom_call.1} parent=71 // pred_check
          _
        $region284: #{tpu_custom_call.1} parent=71 // pred_check_branch
          %829 = sbr.rel (%p826) target = $region286
        $region285: #{tpu_custom_call.1} parent=71 // pred_region
          %s844 = sand.u32 1, 7
          %p845 = scmp.eq.s32.totalorder %s844, 0
          %p846 = pneg %p845
          // Predicated region
          $region298: #{tpu_custom_call.1} parent=285 // pred_check
            _
          $region299: #{tpu_custom_call.1} parent=285 // pred_check_branch
            %848 = sbr.rel (%p845) target = $region301
          $region300: #{tpu_custom_call.1} parent=285 // pred_region
            %s849 = sand.u32 1, 7
            %s850 = ssub.s32 1, %s849
            %s851 = scalar_lea.vmem %s822, %s850
            %s852 = ssub.s32 1, %s849
            %s853 = scalar_lea.vmem %s823, %s852 [#allocation2]
            %s854 = sshllo.u32 0, %s849
            loop: start=0, step=1, limit=1
            $region302: #{tpu_custom_call.1} parent=300 // loop_pre_header
              _
            $region303: #{tpu_custom_call.1} parent=300 // loop_header
              %s856 = sphi 0, %s860
              %p857 = scmp.ge.s32.totalorder %s856, 1
              %s861 = sphi %s851, %s851
              %s862 = sphi %s853, %s853
            $region304: #{tpu_custom_call.1} parent=300 // loop_header_branch
              %859 = sbr.rel (%p857) target = $region308
            $region305: #{tpu_custom_call.1} parent=300 // loop_body
              %v863 = vld [vmem:[%s861] sm:%s854]
              %864 = vst [vmem:[%s862] sm:%s854] %v863
            $region306: #{tpu_custom_call.1} parent=300 // loop_footer
              %s860 = sadd.s32 1, %s856
            $region307: #{tpu_custom_call.1} parent=300 // loop_footer_branch
              %855 = sbr.rel target = $region303
            $region308: #{tpu_custom_call.1} parent=300 // loop_exit
              _
          $region301: #{tpu_custom_call.1} parent=285 // pred_fallthru
            _
        $region286: #{tpu_custom_call.1} parent=71 // pred_fallthru
          _
        // Predicated region
        $region287: #{tpu_custom_call.1} parent=71 // pred_check
          %p830 = pneg %p826
        $region288: #{tpu_custom_call.1} parent=71 // pred_check_branch
          %832 = sbr.rel (%p830) target = $region290
        $region289: #{tpu_custom_call.1} parent=71 // pred_region
          %s833 = sshllo.u32 0, 1
          loop: start=0, step=1, limit=1
          $region291: #{tpu_custom_call.1} parent=289 // loop_pre_header
            _
          $region292: #{tpu_custom_call.1} parent=289 // loop_header
            %s835 = sphi 0, %s839
            %p836 = scmp.ge.s32.totalorder %s835, 1
            %s840 = sphi %s822, %s822
            %s841 = sphi %s823, %s823
          $region293: #{tpu_custom_call.1} parent=289 // loop_header_branch
            %838 = sbr.rel (%p836) target = $region297
          $region294: #{tpu_custom_call.1} parent=289 // loop_body
            %v842 = vld [vmem:[%s840] sm:%s833]
            %843 = vst [vmem:[%s841] sm:%s833] %v842
          $region295: #{tpu_custom_call.1} parent=289 // loop_footer
            %s839 = sadd.s32 1, %s835
          $region296: #{tpu_custom_call.1} parent=289 // loop_footer_branch
            %834 = sbr.rel target = $region292
          $region297: #{tpu_custom_call.1} parent=289 // loop_exit
            _
        $region290: #{tpu_custom_call.1} parent=71 // pred_fallthru
          _
        // Predicated region
        $region309: #{tpu_custom_call.1} parent=71 // pred_check
          _
        $region310: #{tpu_custom_call.1} parent=71 // pred_check_branch
          %867 = sbr.rel (0) target = $region312
        $region311: #{tpu_custom_call.1} parent=71 // pred_region
          %868 = vsyncadd %s824, 16
        $region312: #{tpu_custom_call.1} parent=71 // pred_fallthru
          _
        %s869 = sadd.s32 %s479, 8
        %s870 = sld [smem:[#allocation5 + %s869]]
        %s871 = scalar_lea.vmem %s2, %s870
        %s872 = scalar_lea.vmem [#allocation2], 8
        %s873 = scalar_lea.sflag [#allocation3], 8
        %p875 = scmp.lt.u32.totalorder 1, 8
        %p876 = pneg %p875
        // Predicated region
        $region313: #{tpu_custom_call.1} parent=71 // pred_check
          _
        $region314: #{tpu_custom_call.1} parent=71 // pred_check_branch
          %878 = sbr.rel (%p875) target = $region316
        $region315: #{tpu_custom_call.1} parent=71 // pred_region
          %s893 = sand.u32 1, 7
          %p894 = scmp.eq.s32.totalorder %s893, 0
          %p895 = pneg %p894
          // Predicated region
          $region328: #{tpu_custom_call.1} parent=315 // pred_check
            _
          $region329: #{tpu_custom_call.1} parent=315 // pred_check_branch
            %897 = sbr.rel (%p894) target = $region331
          $region330: #{tpu_custom_call.1} parent=315 // pred_region
            %s898 = sand.u32 1, 7
            %s899 = ssub.s32 1, %s898
            %s900 = scalar_lea.vmem %s871, %s899
            %s901 = ssub.s32 1, %s898
            %s902 = scalar_lea.vmem %s872, %s901 [#allocation2]
            %s903 = sshllo.u32 0, %s898
            loop: start=0, step=1, limit=1
            $region332: #{tpu_custom_call.1} parent=330 // loop_pre_header
              _
            $region333: #{tpu_custom_call.1} parent=330 // loop_header
              %s905 = sphi 0, %s909
              %p906 = scmp.ge.s32.totalorder %s905, 1
              %s910 = sphi %s900, %s900
              %s911 = sphi %s902, %s902
            $region334: #{tpu_custom_call.1} parent=330 // loop_header_branch
              %908 = sbr.rel (%p906) target = $region338
            $region335: #{tpu_custom_call.1} parent=330 // loop_body
              %v912 = vld [vmem:[%s910] sm:%s903]
              %913 = vst [vmem:[%s911] sm:%s903] %v912
            $region336: #{tpu_custom_call.1} parent=330 // loop_footer
              %s909 = sadd.s32 1, %s905
            $region337: #{tpu_custom_call.1} parent=330 // loop_footer_branch
              %904 = sbr.rel target = $region333
            $region338: #{tpu_custom_call.1} parent=330 // loop_exit
              _
          $region331: #{tpu_custom_call.1} parent=315 // pred_fallthru
            _
        $region316: #{tpu_custom_call.1} parent=71 // pred_fallthru
          _
        // Predicated region
        $region317: #{tpu_custom_call.1} parent=71 // pred_check
          %p879 = pneg %p875
        $region318: #{tpu_custom_call.1} parent=71 // pred_check_branch
          %881 = sbr.rel (%p879) target = $region320
        $region319: #{tpu_custom_call.1} parent=71 // pred_region
          %s882 = sshllo.u32 0, 1
          loop: start=0, step=1, limit=1
          $region321: #{tpu_custom_call.1} parent=319 // loop_pre_header
            _
          $region322: #{tpu_custom_call.1} parent=319 // loop_header
            %s884 = sphi 0, %s888
            %p885 = scmp.ge.s32.totalorder %s884, 1
            %s889 = sphi %s871, %s871
            %s890 = sphi %s872, %s872
          $region323: #{tpu_custom_call.1} parent=319 // loop_header_branch
            %887 = sbr.rel (%p885) target = $region327
          $region324: #{tpu_custom_call.1} parent=319 // loop_body
            %v891 = vld [vmem:[%s889] sm:%s882]
            %892 = vst [vmem:[%s890] sm:%s882] %v891
          $region325: #{tpu_custom_call.1} parent=319 // loop_footer
            %s888 = sadd.s32 1, %s884
          $region326: #{tpu_custom_call.1} parent=319 // loop_footer_branch
            %883 = sbr.rel target = $region322
          $region327: #{tpu_custom_call.1} parent=319 // loop_exit
            _
        $region320: #{tpu_custom_call.1} parent=71 // pred_fallthru
          _
        // Predicated region
        $region339: #{tpu_custom_call.1} parent=71 // pred_check
          _
        $region340: #{tpu_custom_call.1} parent=71 // pred_check_branch
          %916 = sbr.rel (0) target = $region342
        $region341: #{tpu_custom_call.1} parent=71 // pred_region
          %917 = vsyncadd %s873, 16
        $region342: #{tpu_custom_call.1} parent=71 // pred_fallthru
          _
        %s918 = sadd.s32 %s479, 9
        %s919 = sld [smem:[#allocation5 + %s918]]
        %s920 = scalar_lea.vmem %s2, %s919
        %s921 = scalar_lea.vmem [#allocation2], 9
        %s922 = scalar_lea.sflag [#allocation3], 9
        %p924 = scmp.lt.u32.totalorder 1, 8
        %p925 = pneg %p924
        // Predicated region
        $region343: #{tpu_custom_call.1} parent=71 // pred_check
          _
        $region344: #{tpu_custom_call.1} parent=71 // pred_check_branch
          %927 = sbr.rel (%p924) target = $region346
        $region345: #{tpu_custom_call.1} parent=71 // pred_region
          %s942 = sand.u32 1, 7
          %p943 = scmp.eq.s32.totalorder %s942, 0
          %p944 = pneg %p943
          // Predicated region
          $region358: #{tpu_custom_call.1} parent=345 // pred_check
            _
          $region359: #{tpu_custom_call.1} parent=345 // pred_check_branch
            %946 = sbr.rel (%p943) target = $region361
          $region360: #{tpu_custom_call.1} parent=345 // pred_region
            %s947 = sand.u32 1, 7
            %s948 = ssub.s32 1, %s947
            %s949 = scalar_lea.vmem %s920, %s948
            %s950 = ssub.s32 1, %s947
            %s951 = scalar_lea.vmem %s921, %s950 [#allocation2]
            %s952 = sshllo.u32 0, %s947
            loop: start=0, step=1, limit=1
            $region362: #{tpu_custom_call.1} parent=360 // loop_pre_header
              _
            $region363: #{tpu_custom_call.1} parent=360 // loop_header
              %s954 = sphi 0, %s958
              %p955 = scmp.ge.s32.totalorder %s954, 1
              %s959 = sphi %s949, %s949
              %s960 = sphi %s951, %s951
            $region364: #{tpu_custom_call.1} parent=360 // loop_header_branch
              %957 = sbr.rel (%p955) target = $region368
            $region365: #{tpu_custom_call.1} parent=360 // loop_body
              %v961 = vld [vmem:[%s959] sm:%s952]
              %962 = vst [vmem:[%s960] sm:%s952] %v961
            $region366: #{tpu_custom_call.1} parent=360 // loop_footer
              %s958 = sadd.s32 1, %s954
            $region367: #{tpu_custom_call.1} parent=360 // loop_footer_branch
              %953 = sbr.rel target = $region363
            $region368: #{tpu_custom_call.1} parent=360 // loop_exit
              _
          $region361: #{tpu_custom_call.1} parent=345 // pred_fallthru
            _
        $region346: #{tpu_custom_call.1} parent=71 // pred_fallthru
          _
        // Predicated region
        $region347: #{tpu_custom_call.1} parent=71 // pred_check
          %p928 = pneg %p924
        $region348: #{tpu_custom_call.1} parent=71 // pred_check_branch
          %930 = sbr.rel (%p928) target = $region350
        $region349: #{tpu_custom_call.1} parent=71 // pred_region
          %s931 = sshllo.u32 0, 1
          loop: start=0, step=1, limit=1
          $region351: #{tpu_custom_call.1} parent=349 // loop_pre_header
            _
          $region352: #{tpu_custom_call.1} parent=349 // loop_header
            %s933 = sphi 0, %s937
            %p934 = scmp.ge.s32.totalorder %s933, 1
            %s938 = sphi %s920, %s920
            %s939 = sphi %s921, %s921
          $region353: #{tpu_custom_call.1} parent=349 // loop_header_branch
            %936 = sbr.rel (%p934) target = $region357
          $region354: #{tpu_custom_call.1} parent=349 // loop_body
            %v940 = vld [vmem:[%s938] sm:%s931]
            %941 = vst [vmem:[%s939] sm:%s931] %v940
          $region355: #{tpu_custom_call.1} parent=349 // loop_footer
            %s937 = sadd.s32 1, %s933
          $region356: #{tpu_custom_call.1} parent=349 // loop_footer_branch
            %932 = sbr.rel target = $region352
          $region357: #{tpu_custom_call.1} parent=349 // loop_exit
            _
        $region350: #{tpu_custom_call.1} parent=71 // pred_fallthru
          _
        // Predicated region
        $region369: #{tpu_custom_call.1} parent=71 // pred_check
          _
        $region370: #{tpu_custom_call.1} parent=71 // pred_check_branch
          %965 = sbr.rel (0) target = $region372
        $region371: #{tpu_custom_call.1} parent=71 // pred_region
          %966 = vsyncadd %s922, 16
        $region372: #{tpu_custom_call.1} parent=71 // pred_fallthru
          _
        %s967 = sadd.s32 %s479, 10
        %s968 = sld [smem:[#allocation5 + %s967]]
        %s969 = scalar_lea.vmem %s2, %s968
        %s970 = scalar_lea.vmem [#allocation2], 10
        %s971 = scalar_lea.sflag [#allocation3], 10
        %p973 = scmp.lt.u32.totalorder 1, 8
        %p974 = pneg %p973
        // Predicated region
        $region373: #{tpu_custom_call.1} parent=71 // pred_check
          _
        $region374: #{tpu_custom_call.1} parent=71 // pred_check_branch
          %976 = sbr.rel (%p973) target = $region376
        $region375: #{tpu_custom_call.1} parent=71 // pred_region
          %s991 = sand.u32 1, 7
          %p992 = scmp.eq.s32.totalorder %s991, 0
          %p993 = pneg %p992
          // Predicated region
          $region388: #{tpu_custom_call.1} parent=375 // pred_check
            _
          $region389: #{tpu_custom_call.1} parent=375 // pred_check_branch
            %995 = sbr.rel (%p992) target = $region391
          $region390: #{tpu_custom_call.1} parent=375 // pred_region
            %s996 = sand.u32 1, 7
            %s997 = ssub.s32 1, %s996
            %s998 = scalar_lea.vmem %s969, %s997
            %s999 = ssub.s32 1, %s996
            %s1000 = scalar_lea.vmem %s970, %s999 [#allocation2]
            %s1001 = sshllo.u32 0, %s996
            loop: start=0, step=1, limit=1
            $region392: #{tpu_custom_call.1} parent=390 // loop_pre_header
              _
            $region393: #{tpu_custom_call.1} parent=390 // loop_header
              %s1003 = sphi 0, %s1007
              %p1004 = scmp.ge.s32.totalorder %s1003, 1
              %s1008 = sphi %s998, %s998
              %s1009 = sphi %s1000, %s1000
            $region394: #{tpu_custom_call.1} parent=390 // loop_header_branch
              %1006 = sbr.rel (%p1004) target = $region398
            $region395: #{tpu_custom_call.1} parent=390 // loop_body
              %v1010 = vld [vmem:[%s1008] sm:%s1001]
              %1011 = vst [vmem:[%s1009] sm:%s1001] %v1010
            $region396: #{tpu_custom_call.1} parent=390 // loop_footer
              %s1007 = sadd.s32 1, %s1003
            $region397: #{tpu_custom_call.1} parent=390 // loop_footer_branch
              %1002 = sbr.rel target = $region393
            $region398: #{tpu_custom_call.1} parent=390 // loop_exit
              _
          $region391: #{tpu_custom_call.1} parent=375 // pred_fallthru
            _
        $region376: #{tpu_custom_call.1} parent=71 // pred_fallthru
          _
        // Predicated region
        $region377: #{tpu_custom_call.1} parent=71 // pred_check
          %p977 = pneg %p973
        $region378: #{tpu_custom_call.1} parent=71 // pred_check_branch
          %979 = sbr.rel (%p977) target = $region380
        $region379: #{tpu_custom_call.1} parent=71 // pred_region
          %s980 = sshllo.u32 0, 1
          loop: start=0, step=1, limit=1
          $region381: #{tpu_custom_call.1} parent=379 // loop_pre_header
            _
          $region382: #{tpu_custom_call.1} parent=379 // loop_header
            %s982 = sphi 0, %s986
            %p983 = scmp.ge.s32.totalorder %s982, 1
            %s987 = sphi %s969, %s969
            %s988 = sphi %s970, %s970
          $region383: #{tpu_custom_call.1} parent=379 // loop_header_branch
            %985 = sbr.rel (%p983) target = $region387
          $region384: #{tpu_custom_call.1} parent=379 // loop_body
            %v989 = vld [vmem:[%s987] sm:%s980]
            %990 = vst [vmem:[%s988] sm:%s980] %v989
          $region385: #{tpu_custom_call.1} parent=379 // loop_footer
            %s986 = sadd.s32 1, %s982
          $region386: #{tpu_custom_call.1} parent=379 // loop_footer_branch
            %981 = sbr.rel target = $region382
          $region387: #{tpu_custom_call.1} parent=379 // loop_exit
            _
        $region380: #{tpu_custom_call.1} parent=71 // pred_fallthru
          _
        // Predicated region
        $region399: #{tpu_custom_call.1} parent=71 // pred_check
          _
        $region400: #{tpu_custom_call.1} parent=71 // pred_check_branch
          %1014 = sbr.rel (0) target = $region402
        $region401: #{tpu_custom_call.1} parent=71 // pred_region
          %1015 = vsyncadd %s971, 16
        $region402: #{tpu_custom_call.1} parent=71 // pred_fallthru
          _
        %s1016 = sadd.s32 %s479, 11
        %s1017 = sld [smem:[#allocation5 + %s1016]]
        %s1018 = scalar_lea.vmem %s2, %s1017
        %s1019 = scalar_lea.vmem [#allocation2], 11
        %s1020 = scalar_lea.sflag [#allocation3], 11
        %p1022 = scmp.lt.u32.totalorder 1, 8
        %p1023 = pneg %p1022
        // Predicated region
        $region403: #{tpu_custom_call.1} parent=71 // pred_check
          _
        $region404: #{tpu_custom_call.1} parent=71 // pred_check_branch
          %1025 = sbr.rel (%p1022) target = $region406
        $region405: #{tpu_custom_call.1} parent=71 // pred_region
          %s1040 = sand.u32 1, 7
          %p1041 = scmp.eq.s32.totalorder %s1040, 0
          %p1042 = pneg %p1041
          // Predicated region
          $region418: #{tpu_custom_call.1} parent=405 // pred_check
            _
          $region419: #{tpu_custom_call.1} parent=405 // pred_check_branch
            %1044 = sbr.rel (%p1041) target = $region421
          $region420: #{tpu_custom_call.1} parent=405 // pred_region
            %s1045 = sand.u32 1, 7
            %s1046 = ssub.s32 1, %s1045
            %s1047 = scalar_lea.vmem %s1018, %s1046
            %s1048 = ssub.s32 1, %s1045
            %s1049 = scalar_lea.vmem %s1019, %s1048 [#allocation2]
            %s1050 = sshllo.u32 0, %s1045
            loop: start=0, step=1, limit=1
            $region422: #{tpu_custom_call.1} parent=420 // loop_pre_header
              _
            $region423: #{tpu_custom_call.1} parent=420 // loop_header
              %s1052 = sphi 0, %s1056
              %p1053 = scmp.ge.s32.totalorder %s1052, 1
              %s1057 = sphi %s1047, %s1047
              %s1058 = sphi %s1049, %s1049
            $region424: #{tpu_custom_call.1} parent=420 // loop_header_branch
              %1055 = sbr.rel (%p1053) target = $region428
            $region425: #{tpu_custom_call.1} parent=420 // loop_body
              %v1059 = vld [vmem:[%s1057] sm:%s1050]
              %1060 = vst [vmem:[%s1058] sm:%s1050] %v1059
            $region426: #{tpu_custom_call.1} parent=420 // loop_footer
              %s1056 = sadd.s32 1, %s1052
            $region427: #{tpu_custom_call.1} parent=420 // loop_footer_branch
              %1051 = sbr.rel target = $region423
            $region428: #{tpu_custom_call.1} parent=420 // loop_exit
              _
          $region421: #{tpu_custom_call.1} parent=405 // pred_fallthru
            _
        $region406: #{tpu_custom_call.1} parent=71 // pred_fallthru
          _
        // Predicated region
        $region407: #{tpu_custom_call.1} parent=71 // pred_check
          %p1026 = pneg %p1022
        $region408: #{tpu_custom_call.1} parent=71 // pred_check_branch
          %1028 = sbr.rel (%p1026) target = $region410
        $region409: #{tpu_custom_call.1} parent=71 // pred_region
          %s1029 = sshllo.u32 0, 1
          loop: start=0, step=1, limit=1
          $region411: #{tpu_custom_call.1} parent=409 // loop_pre_header
            _
          $region412: #{tpu_custom_call.1} parent=409 // loop_header
            %s1031 = sphi 0, %s1035
            %p1032 = scmp.ge.s32.totalorder %s1031, 1
            %s1036 = sphi %s1018, %s1018
            %s1037 = sphi %s1019, %s1019
          $region413: #{tpu_custom_call.1} parent=409 // loop_header_branch
            %1034 = sbr.rel (%p1032) target = $region417
          $region414: #{tpu_custom_call.1} parent=409 // loop_body
            %v1038 = vld [vmem:[%s1036] sm:%s1029]
            %1039 = vst [vmem:[%s1037] sm:%s1029] %v1038
          $region415: #{tpu_custom_call.1} parent=409 // loop_footer
            %s1035 = sadd.s32 1, %s1031
          $region416: #{tpu_custom_call.1} parent=409 // loop_footer_branch
            %1030 = sbr.rel target = $region412
          $region417: #{tpu_custom_call.1} parent=409 // loop_exit
            _
        $region410: #{tpu_custom_call.1} parent=71 // pred_fallthru
          _
        // Predicated region
        $region429: #{tpu_custom_call.1} parent=71 // pred_check
          _
        $region430: #{tpu_custom_call.1} parent=71 // pred_check_branch
          %1063 = sbr.rel (0) target = $region432
        $region431: #{tpu_custom_call.1} parent=71 // pred_region
          %1064 = vsyncadd %s1020, 16
        $region432: #{tpu_custom_call.1} parent=71 // pred_fallthru
          _
        %s1065 = sadd.s32 %s479, 12
        %s1066 = sld [smem:[#allocation5 + %s1065]]
        %s1067 = scalar_lea.vmem %s2, %s1066
        %s1068 = scalar_lea.vmem [#allocation2], 12
        %s1069 = scalar_lea.sflag [#allocation3], 12
        %p1071 = scmp.lt.u32.totalorder 1, 8
        %p1072 = pneg %p1071
        // Predicated region
        $region433: #{tpu_custom_call.1} parent=71 // pred_check
          _
        $region434: #{tpu_custom_call.1} parent=71 // pred_check_branch
          %1074 = sbr.rel (%p1071) target = $region436
        $region435: #{tpu_custom_call.1} parent=71 // pred_region
          %s1089 = sand.u32 1, 7
          %p1090 = scmp.eq.s32.totalorder %s1089, 0
          %p1091 = pneg %p1090
          // Predicated region
          $region448: #{tpu_custom_call.1} parent=435 // pred_check
            _
          $region449: #{tpu_custom_call.1} parent=435 // pred_check_branch
            %1093 = sbr.rel (%p1090) target = $region451
          $region450: #{tpu_custom_call.1} parent=435 // pred_region
            %s1094 = sand.u32 1, 7
            %s1095 = ssub.s32 1, %s1094
            %s1096 = scalar_lea.vmem %s1067, %s1095
            %s1097 = ssub.s32 1, %s1094
            %s1098 = scalar_lea.vmem %s1068, %s1097 [#allocation2]
            %s1099 = sshllo.u32 0, %s1094
            loop: start=0, step=1, limit=1
            $region452: #{tpu_custom_call.1} parent=450 // loop_pre_header
              _
            $region453: #{tpu_custom_call.1} parent=450 // loop_header
              %s1101 = sphi 0, %s1105
              %p1102 = scmp.ge.s32.totalorder %s1101, 1
              %s1106 = sphi %s1096, %s1096
              %s1107 = sphi %s1098, %s1098
            $region454: #{tpu_custom_call.1} parent=450 // loop_header_branch
              %1104 = sbr.rel (%p1102) target = $region458
            $region455: #{tpu_custom_call.1} parent=450 // loop_body
              %v1108 = vld [vmem:[%s1106] sm:%s1099]
              %1109 = vst [vmem:[%s1107] sm:%s1099] %v1108
            $region456: #{tpu_custom_call.1} parent=450 // loop_footer
              %s1105 = sadd.s32 1, %s1101
            $region457: #{tpu_custom_call.1} parent=450 // loop_footer_branch
              %1100 = sbr.rel target = $region453
            $region458: #{tpu_custom_call.1} parent=450 // loop_exit
              _
          $region451: #{tpu_custom_call.1} parent=435 // pred_fallthru
            _
        $region436: #{tpu_custom_call.1} parent=71 // pred_fallthru
          _
        // Predicated region
        $region437: #{tpu_custom_call.1} parent=71 // pred_check
          %p1075 = pneg %p1071
        $region438: #{tpu_custom_call.1} parent=71 // pred_check_branch
          %1077 = sbr.rel (%p1075) target = $region440
        $region439: #{tpu_custom_call.1} parent=71 // pred_region
          %s1078 = sshllo.u32 0, 1
          loop: start=0, step=1, limit=1
          $region441: #{tpu_custom_call.1} parent=439 // loop_pre_header
            _
          $region442: #{tpu_custom_call.1} parent=439 // loop_header
            %s1080 = sphi 0, %s1084
            %p1081 = scmp.ge.s32.totalorder %s1080, 1
            %s1085 = sphi %s1067, %s1067
            %s1086 = sphi %s1068, %s1068
          $region443: #{tpu_custom_call.1} parent=439 // loop_header_branch
            %1083 = sbr.rel (%p1081) target = $region447
          $region444: #{tpu_custom_call.1} parent=439 // loop_body
            %v1087 = vld [vmem:[%s1085] sm:%s1078]
            %1088 = vst [vmem:[%s1086] sm:%s1078] %v1087
          $region445: #{tpu_custom_call.1} parent=439 // loop_footer
            %s1084 = sadd.s32 1, %s1080
          $region446: #{tpu_custom_call.1} parent=439 // loop_footer_branch
            %1079 = sbr.rel target = $region442
          $region447: #{tpu_custom_call.1} parent=439 // loop_exit
            _
        $region440: #{tpu_custom_call.1} parent=71 // pred_fallthru
          _
        // Predicated region
        $region459: #{tpu_custom_call.1} parent=71 // pred_check
          _
        $region460: #{tpu_custom_call.1} parent=71 // pred_check_branch
          %1112 = sbr.rel (0) target = $region462
        $region461: #{tpu_custom_call.1} parent=71 // pred_region
          %1113 = vsyncadd %s1069, 16
        $region462: #{tpu_custom_call.1} parent=71 // pred_fallthru
          _
        %s1114 = sadd.s32 %s479, 13
        %s1115 = sld [smem:[#allocation5 + %s1114]]
        %s1116 = scalar_lea.vmem %s2, %s1115
        %s1117 = scalar_lea.vmem [#allocation2], 13
        %s1118 = scalar_lea.sflag [#allocation3], 13
        %p1120 = scmp.lt.u32.totalorder 1, 8
        %p1121 = pneg %p1120
        // Predicated region
        $region463: #{tpu_custom_call.1} parent=71 // pred_check
          _
        $region464: #{tpu_custom_call.1} parent=71 // pred_check_branch
          %1123 = sbr.rel (%p1120) target = $region466
        $region465: #{tpu_custom_call.1} parent=71 // pred_region
          %s1138 = sand.u32 1, 7
          %p1139 = scmp.eq.s32.totalorder %s1138, 0
          %p1140 = pneg %p1139
          // Predicated region
          $region478: #{tpu_custom_call.1} parent=465 // pred_check
            _
          $region479: #{tpu_custom_call.1} parent=465 // pred_check_branch
            %1142 = sbr.rel (%p1139) target = $region481
          $region480: #{tpu_custom_call.1} parent=465 // pred_region
            %s1143 = sand.u32 1, 7
            %s1144 = ssub.s32 1, %s1143
            %s1145 = scalar_lea.vmem %s1116, %s1144
            %s1146 = ssub.s32 1, %s1143
            %s1147 = scalar_lea.vmem %s1117, %s1146 [#allocation2]
            %s1148 = sshllo.u32 0, %s1143
            loop: start=0, step=1, limit=1
            $region482: #{tpu_custom_call.1} parent=480 // loop_pre_header
              _
            $region483: #{tpu_custom_call.1} parent=480 // loop_header
              %s1150 = sphi 0, %s1154
              %p1151 = scmp.ge.s32.totalorder %s1150, 1
              %s1155 = sphi %s1145, %s1145
              %s1156 = sphi %s1147, %s1147
            $region484: #{tpu_custom_call.1} parent=480 // loop_header_branch
              %1153 = sbr.rel (%p1151) target = $region488
            $region485: #{tpu_custom_call.1} parent=480 // loop_body
              %v1157 = vld [vmem:[%s1155] sm:%s1148]
              %1158 = vst [vmem:[%s1156] sm:%s1148] %v1157
            $region486: #{tpu_custom_call.1} parent=480 // loop_footer
              %s1154 = sadd.s32 1, %s1150
            $region487: #{tpu_custom_call.1} parent=480 // loop_footer_branch
              %1149 = sbr.rel target = $region483
            $region488: #{tpu_custom_call.1} parent=480 // loop_exit
              _
          $region481: #{tpu_custom_call.1} parent=465 // pred_fallthru
            _
        $region466: #{tpu_custom_call.1} parent=71 // pred_fallthru
          _
        // Predicated region
        $region467: #{tpu_custom_call.1} parent=71 // pred_check
          %p1124 = pneg %p1120
        $region468: #{tpu_custom_call.1} parent=71 // pred_check_branch
          %1126 = sbr.rel (%p1124) target = $region470
        $region469: #{tpu_custom_call.1} parent=71 // pred_region
          %s1127 = sshllo.u32 0, 1
          loop: start=0, step=1, limit=1
          $region471: #{tpu_custom_call.1} parent=469 // loop_pre_header
            _
          $region472: #{tpu_custom_call.1} parent=469 // loop_header
            %s1129 = sphi 0, %s1133
            %p1130 = scmp.ge.s32.totalorder %s1129, 1
            %s1134 = sphi %s1116, %s1116
            %s1135 = sphi %s1117, %s1117
          $region473: #{tpu_custom_call.1} parent=469 // loop_header_branch
            %1132 = sbr.rel (%p1130) target = $region477
          $region474: #{tpu_custom_call.1} parent=469 // loop_body
            %v1136 = vld [vmem:[%s1134] sm:%s1127]
            %1137 = vst [vmem:[%s1135] sm:%s1127] %v1136
          $region475: #{tpu_custom_call.1} parent=469 // loop_footer
            %s1133 = sadd.s32 1, %s1129
          $region476: #{tpu_custom_call.1} parent=469 // loop_footer_branch
            %1128 = sbr.rel target = $region472
          $region477: #{tpu_custom_call.1} parent=469 // loop_exit
            _
        $region470: #{tpu_custom_call.1} parent=71 // pred_fallthru
          _
        // Predicated region
        $region489: #{tpu_custom_call.1} parent=71 // pred_check
          _
        $region490: #{tpu_custom_call.1} parent=71 // pred_check_branch
          %1161 = sbr.rel (0) target = $region492
        $region491: #{tpu_custom_call.1} parent=71 // pred_region
          %1162 = vsyncadd %s1118, 16
        $region492: #{tpu_custom_call.1} parent=71 // pred_fallthru
          _
        %s1163 = sadd.s32 %s479, 14
        %s1164 = sld [smem:[#allocation5 + %s1163]]
        %s1165 = scalar_lea.vmem %s2, %s1164
        %s1166 = scalar_lea.vmem [#allocation2], 14
        %s1167 = scalar_lea.sflag [#allocation3], 14
        %p1169 = scmp.lt.u32.totalorder 1, 8
        %p1170 = pneg %p1169
        // Predicated region
        $region493: #{tpu_custom_call.1} parent=71 // pred_check
          _
        $region494: #{tpu_custom_call.1} parent=71 // pred_check_branch
          %1172 = sbr.rel (%p1169) target = $region496
        $region495: #{tpu_custom_call.1} parent=71 // pred_region
          %s1187 = sand.u32 1, 7
          %p1188 = scmp.eq.s32.totalorder %s1187, 0
          %p1189 = pneg %p1188
          // Predicated region
          $region508: #{tpu_custom_call.1} parent=495 // pred_check
            _
          $region509: #{tpu_custom_call.1} parent=495 // pred_check_branch
            %1191 = sbr.rel (%p1188) target = $region511
          $region510: #{tpu_custom_call.1} parent=495 // pred_region
            %s1192 = sand.u32 1, 7
            %s1193 = ssub.s32 1, %s1192
            %s1194 = scalar_lea.vmem %s1165, %s1193
            %s1195 = ssub.s32 1, %s1192
            %s1196 = scalar_lea.vmem %s1166, %s1195 [#allocation2]
            %s1197 = sshllo.u32 0, %s1192
            loop: start=0, step=1, limit=1
            $region512: #{tpu_custom_call.1} parent=510 // loop_pre_header
              _
            $region513: #{tpu_custom_call.1} parent=510 // loop_header
              %s1199 = sphi 0, %s1203
              %p1200 = scmp.ge.s32.totalorder %s1199, 1
              %s1204 = sphi %s1194, %s1194
              %s1205 = sphi %s1196, %s1196
            $region514: #{tpu_custom_call.1} parent=510 // loop_header_branch
              %1202 = sbr.rel (%p1200) target = $region518
            $region515: #{tpu_custom_call.1} parent=510 // loop_body
              %v1206 = vld [vmem:[%s1204] sm:%s1197]
              %1207 = vst [vmem:[%s1205] sm:%s1197] %v1206
            $region516: #{tpu_custom_call.1} parent=510 // loop_footer
              %s1203 = sadd.s32 1, %s1199
            $region517: #{tpu_custom_call.1} parent=510 // loop_footer_branch
              %1198 = sbr.rel target = $region513
            $region518: #{tpu_custom_call.1} parent=510 // loop_exit
              _
          $region511: #{tpu_custom_call.1} parent=495 // pred_fallthru
            _
        $region496: #{tpu_custom_call.1} parent=71 // pred_fallthru
          _
        // Predicated region
        $region497: #{tpu_custom_call.1} parent=71 // pred_check
          %p1173 = pneg %p1169
        $region498: #{tpu_custom_call.1} parent=71 // pred_check_branch
          %1175 = sbr.rel (%p1173) target = $region500
        $region499: #{tpu_custom_call.1} parent=71 // pred_region
          %s1176 = sshllo.u32 0, 1
          loop: start=0, step=1, limit=1
          $region501: #{tpu_custom_call.1} parent=499 // loop_pre_header
            _
          $region502: #{tpu_custom_call.1} parent=499 // loop_header
            %s1178 = sphi 0, %s1182
            %p1179 = scmp.ge.s32.totalorder %s1178, 1
            %s1183 = sphi %s1165, %s1165
            %s1184 = sphi %s1166, %s1166
          $region503: #{tpu_custom_call.1} parent=499 // loop_header_branch
            %1181 = sbr.rel (%p1179) target = $region507
          $region504: #{tpu_custom_call.1} parent=499 // loop_body
            %v1185 = vld [vmem:[%s1183] sm:%s1176]
            %1186 = vst [vmem:[%s1184] sm:%s1176] %v1185
          $region505: #{tpu_custom_call.1} parent=499 // loop_footer
            %s1182 = sadd.s32 1, %s1178
          $region506: #{tpu_custom_call.1} parent=499 // loop_footer_branch
            %1177 = sbr.rel target = $region502
          $region507: #{tpu_custom_call.1} parent=499 // loop_exit
            _
        $region500: #{tpu_custom_call.1} parent=71 // pred_fallthru
          _
        // Predicated region
        $region519: #{tpu_custom_call.1} parent=71 // pred_check
          _
        $region520: #{tpu_custom_call.1} parent=71 // pred_check_branch
          %1210 = sbr.rel (0) target = $region522
        $region521: #{tpu_custom_call.1} parent=71 // pred_region
          %1211 = vsyncadd %s1167, 16
        $region522: #{tpu_custom_call.1} parent=71 // pred_fallthru
          _
        %s1212 = sadd.s32 %s479, 15
        %s1213 = sld [smem:[#allocation5 + %s1212]]
        %s1214 = scalar_lea.vmem %s2, %s1213
        %s1215 = scalar_lea.vmem [#allocation2], 15
        %s1216 = scalar_lea.sflag [#allocation3], 15
        %p1218 = scmp.lt.u32.totalorder 1, 8
        %p1219 = pneg %p1218
        // Predicated region
        $region523: #{tpu_custom_call.1} parent=71 // pred_check
          _
        $region524: #{tpu_custom_call.1} parent=71 // pred_check_branch
          %1221 = sbr.rel (%p1218) target = $region526
        $region525: #{tpu_custom_call.1} parent=71 // pred_region
          %s1236 = sand.u32 1, 7
          %p1237 = scmp.eq.s32.totalorder %s1236, 0
          %p1238 = pneg %p1237
          // Predicated region
          $region538: #{tpu_custom_call.1} parent=525 // pred_check
            _
          $region539: #{tpu_custom_call.1} parent=525 // pred_check_branch
            %1240 = sbr.rel (%p1237) target = $region541
          $region540: #{tpu_custom_call.1} parent=525 // pred_region
            %s1241 = sand.u32 1, 7
            %s1242 = ssub.s32 1, %s1241
            %s1243 = scalar_lea.vmem %s1214, %s1242
            %s1244 = ssub.s32 1, %s1241
            %s1245 = scalar_lea.vmem %s1215, %s1244 [#allocation2]
            %s1246 = sshllo.u32 0, %s1241
            loop: start=0, step=1, limit=1
            $region542: #{tpu_custom_call.1} parent=540 // loop_pre_header
              _
            $region543: #{tpu_custom_call.1} parent=540 // loop_header
              %s1248 = sphi 0, %s1252
              %p1249 = scmp.ge.s32.totalorder %s1248, 1
              %s1253 = sphi %s1243, %s1243
              %s1254 = sphi %s1245, %s1245
            $region544: #{tpu_custom_call.1} parent=540 // loop_header_branch
              %1251 = sbr.rel (%p1249) target = $region548
            $region545: #{tpu_custom_call.1} parent=540 // loop_body
              %v1255 = vld [vmem:[%s1253] sm:%s1246]
              %1256 = vst [vmem:[%s1254] sm:%s1246] %v1255
            $region546: #{tpu_custom_call.1} parent=540 // loop_footer
              %s1252 = sadd.s32 1, %s1248
            $region547: #{tpu_custom_call.1} parent=540 // loop_footer_branch
              %1247 = sbr.rel target = $region543
            $region548: #{tpu_custom_call.1} parent=540 // loop_exit
              _
          $region541: #{tpu_custom_call.1} parent=525 // pred_fallthru
            _
        $region526: #{tpu_custom_call.1} parent=71 // pred_fallthru
          _
        // Predicated region
        $region527: #{tpu_custom_call.1} parent=71 // pred_check
          %p1222 = pneg %p1218
        $region528: #{tpu_custom_call.1} parent=71 // pred_check_branch
          %1224 = sbr.rel (%p1222) target = $region530
        $region529: #{tpu_custom_call.1} parent=71 // pred_region
          %s1225 = sshllo.u32 0, 1
          loop: start=0, step=1, limit=1
          $region531: #{tpu_custom_call.1} parent=529 // loop_pre_header
            _
          $region532: #{tpu_custom_call.1} parent=529 // loop_header
            %s1227 = sphi 0, %s1231
            %p1228 = scmp.ge.s32.totalorder %s1227, 1
            %s1232 = sphi %s1214, %s1214
            %s1233 = sphi %s1215, %s1215
          $region533: #{tpu_custom_call.1} parent=529 // loop_header_branch
            %1230 = sbr.rel (%p1228) target = $region537
          $region534: #{tpu_custom_call.1} parent=529 // loop_body
            %v1234 = vld [vmem:[%s1232] sm:%s1225]
            %1235 = vst [vmem:[%s1233] sm:%s1225] %v1234
          $region535: #{tpu_custom_call.1} parent=529 // loop_footer
            %s1231 = sadd.s32 1, %s1227
          $region536: #{tpu_custom_call.1} parent=529 // loop_footer_branch
            %1226 = sbr.rel target = $region532
          $region537: #{tpu_custom_call.1} parent=529 // loop_exit
            _
        $region530: #{tpu_custom_call.1} parent=71 // pred_fallthru
          _
        // Predicated region
        $region549: #{tpu_custom_call.1} parent=71 // pred_check
          _
        $region550: #{tpu_custom_call.1} parent=71 // pred_check_branch
          %1259 = sbr.rel (0) target = $region552
        $region551: #{tpu_custom_call.1} parent=71 // pred_region
          %1260 = vsyncadd %s1216, 16
        $region552: #{tpu_custom_call.1} parent=71 // pred_fallthru
          _
        %s1261 = smul.u32 1, 1
        %s1262 = sshll.u32 %s1261, 4
        %1263 = dma.done [#allocation3], %s1262
        %s1264 = sshll.u32 %s1261, 4
        %1265 = dma.done %s530, %s1264
        %s1266 = sshll.u32 %s1261, 4
        %1267 = dma.done %s579, %s1266
        %s1268 = sshll.u32 %s1261, 4
        %1269 = dma.done %s628, %s1268
        %s1270 = sshll.u32 %s1261, 4
        %1271 = dma.done %s677, %s1270
        %s1272 = sshll.u32 %s1261, 4
        %1273 = dma.done %s726, %s1272
        %s1274 = sshll.u32 %s1261, 4
        %1275 = dma.done %s775, %s1274
        %s1276 = sshll.u32 %s1261, 4
        %1277 = dma.done %s824, %s1276
        %s1278 = sshll.u32 %s1261, 4
        %1279 = dma.done %s873, %s1278
        %s1280 = sshll.u32 %s1261, 4
        %1281 = dma.done %s922, %s1280
        %s1282 = sshll.u32 %s1261, 4
        %1283 = dma.done %s971, %s1282
        %s1284 = sshll.u32 %s1261, 4
        %1285 = dma.done %s1020, %s1284
        %s1286 = sshll.u32 %s1261, 4
        %1287 = dma.done %s1069, %s1286
        %s1288 = sshll.u32 %s1261, 4
        %1289 = dma.done %s1118, %s1288
        %s1290 = sshll.u32 %s1261, 4
        %1291 = dma.done %s1167, %s1290
        %s1292 = sshll.u32 %s1261, 4
        %1293 = dma.done %s1216, %s1292
        %v1294 = vld [vmem:[#allocation2] sm:$0xff]
        %v1295 = vld [vmem:[#allocation2 + $0x8] sm:$0xff]
        %v1296 = vld [vmem:[%s477] sm:$0x1]
        %v1297 = vsub.f32 1.0, %v1296
        %v1298 = vmul.f32 %v1297, -1e+09
        %v1299 = vpack.c.bf16 %v1295, %v1294
        %v1300 = vld [vmem:[%s3] sm:$0xf]
        %v1301 = vld [vmem:[%s3 + $0x4] sm:$0xf]
        %v1302 = vld [vmem:[%s3 + $0x8] sm:$0xf]
        %v1303 = vld [vmem:[%s3 + $0xc] sm:$0xf]
        %v1308 = vunpack.c.l.b16 %v1300
        %v1309 = vunpack.c.l.b16 %v1301
        %v1310 = vunpack.c.l.b16 %v1302
        %v1311 = vunpack.c.l.b16 %v1303
        %v1312 = vpack.c.b16 %v1309, %v1308
        %v1313 = vpack.c.b16 %v1311, %v1310
        %vm1316 = vcmask 261120
        %v1318 = vsel %vm1316, %v1299, 0
        %1320 = vmatprep.subr.bf16.mxu0 0
        %1321 = vmatpush1.bf16.msra.mxu0 %v1312
        %1322 = vmatprep.subr.bf16.mxu0 0
        %1323 = vmatpush1.bf16.msra.mxu0 %v1313
        %1324 = vmatprep.subr.bf16.mxu0 0
        %1325 = vmatpush1.bf16.msra.mxu0 0
        %1326 = vmatprep.subr.bf16.mxu0 0
        %1327 = vmatpush1.bf16.msra.mxu0 0
        %1328 = vmatprep.subr.bf16.mxu0 0
        %1329 = vmatpush1.bf16.msra.mxu0 0
        %1330 = vmatprep.subr.bf16.mxu0 0
        %1331 = vmatpush1.bf16.msra.mxu0 0
        %1332 = vmatprep.subr.bf16.mxu0 0
        %1333 = vmatpush1.bf16.msra.mxu0 0
        %1334 = vmatprep.subr.bf16.mxu0 0
        %1335 = vmatpush1.bf16.msra.mxu0 0
        %1336 = vmatprep.subr.bf16.mxu0 0
        %1337 = vmatpush1.bf16.msra.mxu0 0
        %1338 = vmatprep.subr.bf16.mxu0 0
        %1339 = vmatpush1.bf16.msra.mxu0 0
        %1340 = vmatprep.subr.bf16.mxu0 0
        %1341 = vmatpush1.bf16.msra.mxu0 0
        %1342 = vmatprep.subr.bf16.mxu0 0
        %1343 = vmatpush1.bf16.msra.mxu0 0
        %1344 = vmatprep.subr.bf16.mxu0 0
        %1345 = vmatpush1.bf16.msra.mxu0 0
        %1346 = vmatprep.subr.bf16.mxu0 0
        %1347 = vmatpush1.bf16.msra.mxu0 0
        %1348 = vmatprep.subr.bf16.mxu0 0
        %1349 = vmatpush1.bf16.msra.mxu0 0
        %1350 = vmatprep.subr.bf16.mxu0 0
        %1351 = vmatpush1.bf16.msra.mxu0 0
        %1352 = vmatprep.mubr.bf16.mxu0 0
        %1353 = vmatmul.mubr.bf16.gmra.mrb[0].mxu0 %v1318
        %v1354 = vpop.f32.mrb[0].mxu0
        %v1355 = vadd.f32 0.0, %v1354
        %v1356 = vpop.f32.mrb[0].mxu0
        %v1357 = vpop.f32.mrb[0].mxu0
        %v1358 = vadd.f32 0.0, %v1357
        %v1359 = vpop.f32.mrb[0].mxu0
        %1360 = vdwg.mxu0
        %v1361 = vpack.c.bf16 %v1358, %v1355
        %v1363 = vlaneseq
        %v1364 = vshrl.u32 %v1363, 7
        %v1365 = vsub.s32 0, %v1364
        %v1366 = vrot.slane %v1298, %v1365
        %1369 = vrot.lane.b32.xlu0 %v1361, 96
        %v1370 = vpop.permute.xlu0 %1369
        %v1372 = vsel %vm1316, %v1361, 0
        %v1375 = vsel %vm1316, %v1370, 0
        %1377 = vmatprep.subr.bf16.mxu0 0
        %1378 = vmatpush1.bf16.xpose.msra.mxu0 %v1375
        %1379 = vmatprep.subr.bf16.mxu0 0
        %1380 = vmatpush1.bf16.xpose.msra.mxu0 0
        %1381 = vmatprep.subr.bf16.mxu0 0
        %1382 = vmatpush1.bf16.xpose.msra.mxu0 0
        %1383 = vmatprep.subr.bf16.mxu0 0
        %1384 = vmatpush1.bf16.xpose.msra.mxu0 0
        %1385 = vmatprep.subr.bf16.mxu0 0
        %1386 = vmatpush1.bf16.xpose.msra.mxu0 0
        %1387 = vmatprep.subr.bf16.mxu0 0
        %1388 = vmatpush1.bf16.xpose.msra.mxu0 0
        %1389 = vmatprep.subr.bf16.mxu0 0
        %1390 = vmatpush1.bf16.xpose.msra.mxu0 0
        %1391 = vmatprep.subr.bf16.mxu0 0
        %1392 = vmatpush1.bf16.xpose.msra.mxu0 0
        %1393 = vmatprep.subr.bf16.mxu0 0
        %1394 = vmatpush1.bf16.xpose.msra.mxu0 0
        %1395 = vmatprep.subr.bf16.mxu0 0
        %1396 = vmatpush1.bf16.xpose.msra.mxu0 0
        %1397 = vmatprep.subr.bf16.mxu0 0
        %1398 = vmatpush1.bf16.xpose.msra.mxu0 0
        %1399 = vmatprep.subr.bf16.mxu0 0
        %1400 = vmatpush1.bf16.xpose.msra.mxu0 0
        %1401 = vmatprep.subr.bf16.mxu0 0
        %1402 = vmatpush1.bf16.xpose.msra.mxu0 0
        %1403 = vmatprep.subr.bf16.mxu0 0
        %1404 = vmatpush1.bf16.xpose.msra.mxu0 0
        %1405 = vmatprep.subr.bf16.mxu0 0
        %1406 = vmatpush1.bf16.xpose.msra.mxu0 0
        %1407 = vmatprep.subr.bf16.mxu0 0
        %1408 = vmatpush1.bf16.xpose.msra.mxu0 0
        %1409 = vmatprep.mubr.bf16.mxu0 0
        %1410 = vmatmul.mubr.bf16.gmra.mrb[0].mxu0 %v1372
        %v1411 = vpop.f32.mrb[0].mxu0
        %v1412 = vadd.f32 %v1366, %v1411
        %v1413 = vpop.f32.mrb[0].mxu0
        %v1414 = vpop.f32.mrb[0].mxu0
        %v1415 = vadd.f32 %v1366, %v1414
        %v1416 = vpop.f32.mrb[0].mxu0
        %1417 = vdwg.mxu0
        %vm1418 = vcmask 130048
        %v1419 = vsel %vm1418, %v1412, -inf
        %1420 = vmax.xlane.f32.xlu0 %v1419
        %v1421 = vpop.xlane.xlu0 %1420
        %v1422 = vsel %vm1418, %v1415, -inf
        %1423 = vmax.xlane.f32.xlu0 %v1422
        %v1424 = vpop.xlane.xlu0 %1423
        %v1425 = vsub.f32 %v1412, %v1421
        %v1426 = vsub.f32 %v1415, %v1424
        %v1427 = vmul.f32 %v1425, 1.442695
        %v1428 = vpow.pop %v1427
        %v1429 = vmul.f32 %v1426, 1.442695
        %v1430 = vpow.pop %v1429
        %v1431 = vsel %vm1418, %v1428, 0.0
        %1432 = vadd.xlane.f32.xlu0 %v1431
        %v1433 = vpop.xlane.xlu0 %1432
        %v1434 = vsel %vm1418, %v1430, 0.0
        %1435 = vadd.xlane.f32.xlu0 %v1434
        %v1436 = vpop.xlane.xlu0 %1435
        %v1437 = vrcp.pop %v1433
        %v1438 = vrcp.pop %v1436
        %v1439 = vmul.f32 %v1428, %v1437
        %v1440 = vmul.f32 %v1430, %v1438
        %v1441 = vpack.c.bf16 %v1440, %v1439
        %1442 = vrot.lane.b32.xlu0 %v1361, 64
        %v1443 = vpop.permute.xlu0 %1442
        %v1446 = vsel %vm1418, %v1441, 0
        %1448 = vmatprep.subr.bf16.mxu0 0
        %1449 = vmatpush1.bf16.msra.mxu0 %v1443
        %1450 = vmatprep.subr.bf16.mxu0 0
        %1451 = vmatpush1.bf16.msra.mxu0 0
        %1452 = vmatprep.subr.bf16.mxu0 0
        %1453 = vmatpush1.bf16.msra.mxu0 0
        %1454 = vmatprep.subr.bf16.mxu0 0
        %1455 = vmatpush1.bf16.msra.mxu0 0
        %1456 = vmatprep.subr.bf16.mxu0 0
        %1457 = vmatpush1.bf16.msra.mxu0 0
        %1458 = vmatprep.subr.bf16.mxu0 0
        %1459 = vmatpush1.bf16.msra.mxu0 0
        %1460 = vmatprep.subr.bf16.mxu0 0
        %1461 = vmatpush1.bf16.msra.mxu0 0
        %1462 = vmatprep.subr.bf16.mxu0 0
        %1463 = vmatpush1.bf16.msra.mxu0 0
        %1464 = vmatprep.subr.bf16.mxu0 0
        %1465 = vmatpush1.bf16.msra.mxu0 0
        %1466 = vmatprep.subr.bf16.mxu0 0
        %1467 = vmatpush1.bf16.msra.mxu0 0
        %1468 = vmatprep.subr.bf16.mxu0 0
        %1469 = vmatpush1.bf16.msra.mxu0 0
        %1470 = vmatprep.subr.bf16.mxu0 0
        %1471 = vmatpush1.bf16.msra.mxu0 0
        %1472 = vmatprep.subr.bf16.mxu0 0
        %1473 = vmatpush1.bf16.msra.mxu0 0
        %1474 = vmatprep.subr.bf16.mxu0 0
        %1475 = vmatpush1.bf16.msra.mxu0 0
        %1476 = vmatprep.subr.bf16.mxu0 0
        %1477 = vmatpush1.bf16.msra.mxu0 0
        %1478 = vmatprep.subr.bf16.mxu0 0
        %1479 = vmatpush1.bf16.msra.mxu0 0
        %1480 = vmatprep.mubr.bf16.mxu0 0
        %1481 = vmatmul.mubr.bf16.gmra.mrb[0].mxu0 %v1446
        %v1482 = vpop.f32.mrb[0].mxu0
        %v1483 = vadd.f32 0.0, %v1482
        %v1484 = vpop.f32.mrb[0].mxu0
        %v1485 = vpop.f32.mrb[0].mxu0
        %v1486 = vadd.f32 0.0, %v1485
        %v1487 = vpop.f32.mrb[0].mxu0
        %1488 = vdwg.mxu0
        %v1489 = vpack.c.bf16 %v1486, %v1483
        %v1490 = vld [vmem:[%s4] sm:$0xf]
        %v1491 = vld [vmem:[%s4 + $0x4] sm:$0xf]
        %v1492 = vld [vmem:[%s4 + $0x8] sm:$0xf]
        %v1493 = vld [vmem:[%s4 + $0xc] sm:$0xf]
        %v1498 = vunpack.c.l.b16 %v1490
        %v1499 = vunpack.c.l.b16 %v1491
        %v1500 = vunpack.c.l.b16 %v1492
        %v1501 = vunpack.c.l.b16 %v1493
        %v1502 = vpack.c.b16 %v1499, %v1498
        %v1503 = vpack.c.b16 %v1501, %v1500
        %v1507 = vsel %vm1316, %v1489, 0
        %1509 = vmatprep.subr.bf16.mxu0 0
        %1510 = vmatpush1.bf16.msra.mxu0 %v1502
        %1511 = vmatprep.subr.bf16.mxu0 0
        %1512 = vmatpush1.bf16.msra.mxu0 %v1503
        %1513 = vmatprep.subr.bf16.mxu0 0
        %1514 = vmatpush1.bf16.msra.mxu0 0
        %1515 = vmatprep.subr.bf16.mxu0 0
        %1516 = vmatpush1.bf16.msra.mxu0 0
        %1517 = vmatprep.subr.bf16.mxu0 0
        %1518 = vmatpush1.bf16.msra.mxu0 0
        %1519 = vmatprep.subr.bf16.mxu0 0
        %1520 = vmatpush1.bf16.msra.mxu0 0
        %1521 = vmatprep.subr.bf16.mxu0 0
        %1522 = vmatpush1.bf16.msra.mxu0 0
        %1523 = vmatprep.subr.bf16.mxu0 0
        %1524 = vmatpush1.bf16.msra.mxu0 0
        %1525 = vmatprep.subr.bf16.mxu0 0
        %1526 = vmatpush1.bf16.msra.mxu0 0
        %1527 = vmatprep.subr.bf16.mxu0 0
        %1528 = vmatpush1.bf16.msra.mxu0 0
        %1529 = vmatprep.subr.bf16.mxu0 0
        %1530 = vmatpush1.bf16.msra.mxu0 0
        %1531 = vmatprep.subr.bf16.mxu0 0
        %1532 = vmatpush1.bf16.msra.mxu0 0
        %1533 = vmatprep.subr.bf16.mxu0 0
        %1534 = vmatpush1.bf16.msra.mxu0 0
        %1535 = vmatprep.subr.bf16.mxu0 0
        %1536 = vmatpush1.bf16.msra.mxu0 0
        %1537 = vmatprep.subr.bf16.mxu0 0
        %1538 = vmatpush1.bf16.msra.mxu0 0
        %1539 = vmatprep.subr.bf16.mxu0 0
        %1540 = vmatpush1.bf16.msra.mxu0 0
        %1541 = vmatprep.mubr.bf16.mxu0 0
        %1542 = vmatmul.mubr.bf16.gmra.mrb[0].mxu0 %v1507
        %v1543 = vpop.f32.mrb[0].mxu0
        %v1544 = vadd.f32 0.0, %v1543
        %v1545 = vpop.f32.mrb[0].mxu0
        %v1546 = vpop.f32.mrb[0].mxu0
        %v1547 = vadd.f32 0.0, %v1546
        %v1548 = vpop.f32.mrb[0].mxu0
        %1549 = vdwg.mxu0
        %v1550 = vadd.f32 %v1294, %v1544
        %v1551 = vadd.f32 %v1295, %v1547
        %v1552 = vsel %vm1316, %v1550, 0.0
        %1553 = vadd.xlane.f32.xlu0 %v1552
        %v1554 = vpop.xlane.xlu0 %1553
        %v1555 = vsel %vm1316, %v1551, 0.0
        %1556 = vadd.xlane.f32.xlu0 %v1555
        %v1557 = vpop.xlane.xlu0 %1556
        %v1558 = vrcp.pop 32.0
        %v1559 = vmul.f32 %v1554, %v1558
        %v1560 = vmul.f32 %v1557, %v1558
        %v1561 = vsub.f32 %v1550, %v1559
        %v1562 = vsub.f32 %v1551, %v1560
        %v1563 = vmul.f32 %v1561, %v1561
        %v1564 = vmul.f32 %v1562, %v1562
        %v1565 = vsel %vm1316, %v1563, 0.0
        %1566 = vadd.xlane.f32.xlu0 %v1565
        %v1567 = vpop.xlane.xlu0 %1566
        %v1568 = vsel %vm1316, %v1564, 0.0
        %1569 = vadd.xlane.f32.xlu0 %v1568
        %v1570 = vpop.xlane.xlu0 %1569
        %v1571 = vmul.f32 %v1567, %v1558
        %v1572 = vmul.f32 %v1570, %v1558
        %v1573 = vadd.f32 %v1571, 1e-05
        %v1574 = vadd.f32 %v1572, 1e-05
        %v1575 = vrsqrt.pop %v1573
        %v1576 = vrsqrt.pop %v1574
        %v1577 = vmul.f32 %v1561, %v1575
        %v1578 = vmul.f32 %v1562, %v1576
        %v1579 = vld [vmem:[%s9] sm:$0x1]
        %v1581 = vlaneseq
        %v1582 = vshrl.u32 %v1581, 7
        %v1583 = vsub.s32 0, %v1582
        %v1584 = vrot.slane %v1579, %v1583
        %v1586 = vmul.f32 %v1577, %v1584
        %v1587 = vmul.f32 %v1578, %v1584
        %v1588 = vld [vmem:[%s10] sm:$0x1]
        %v1590 = vlaneseq
        %v1591 = vshrl.u32 %v1590, 7
        %v1592 = vsub.s32 0, %v1591
        %v1593 = vrot.slane %v1588, %v1592
        %v1595 = vadd.f32 %v1586, %v1593
        %v1596 = vadd.f32 %v1587, %v1593
        %v1597 = vpack.c.bf16 %v1596, %v1595
        %v1598 = vld [vmem:[%s5] sm:$0xf]
        %v1599 = vld [vmem:[%s5 + $0x4] sm:$0xf]
        %v1600 = vld [vmem:[%s5 + $0x8] sm:$0xf]
        %v1601 = vld [vmem:[%s5 + $0xc] sm:$0xf]
        %v1602 = vld [vmem:[%s6] sm:$0x1]
        %v1604 = vlaneseq
        %v1605 = vshrl.u32 %v1604, 7
        %v1606 = vsub.s32 0, %v1605
        %v1607 = vrot.slane %v1602, %v1606
        %v1613 = vunpack.c.l.b16 %v1598
        %v1614 = vunpack.c.l.b16 %v1599
        %v1615 = vunpack.c.l.b16 %v1600
        %v1616 = vunpack.c.l.b16 %v1601
        %v1617 = vpack.c.b16 %v1614, %v1613
        %v1618 = vpack.c.b16 %v1616, %v1615
        %v1622 = vsel %vm1316, %v1597, 0
        %1624 = vmatprep.subr.bf16.mxu0 0
        %1625 = vmatpush1.bf16.msra.mxu0 %v1617
        %1626 = vmatprep.subr.bf16.mxu0 0
        %1627 = vmatpush1.bf16.msra.mxu0 %v1618
        %1628 = vmatprep.subr.bf16.mxu0 0
        %1629 = vmatpush1.bf16.msra.mxu0 0
        %1630 = vmatprep.subr.bf16.mxu0 0
        %1631 = vmatpush1.bf16.msra.mxu0 0
        %1632 = vmatprep.subr.bf16.mxu0 0
        %1633 = vmatpush1.bf16.msra.mxu0 0
        %1634 = vmatprep.subr.bf16.mxu0 0
        %1635 = vmatpush1.bf16.msra.mxu0 0
        %1636 = vmatprep.subr.bf16.mxu0 0
        %1637 = vmatpush1.bf16.msra.mxu0 0
        %1638 = vmatprep.subr.bf16.mxu0 0
        %1639 = vmatpush1.bf16.msra.mxu0 0
        %1640 = vmatprep.subr.bf16.mxu0 0
        %1641 = vmatpush1.bf16.msra.mxu0 0
        %1642 = vmatprep.subr.bf16.mxu0 0
        %1643 = vmatpush1.bf16.msra.mxu0 0
        %1644 = vmatprep.subr.bf16.mxu0 0
        %1645 = vmatpush1.bf16.msra.mxu0 0
        %1646 = vmatprep.subr.bf16.mxu0 0
        %1647 = vmatpush1.bf16.msra.mxu0 0
        %1648 = vmatprep.subr.bf16.mxu0 0
        %1649 = vmatpush1.bf16.msra.mxu0 0
        %1650 = vmatprep.subr.bf16.mxu0 0
        %1651 = vmatpush1.bf16.msra.mxu0 0
        %1652 = vmatprep.subr.bf16.mxu0 0
        %1653 = vmatpush1.bf16.msra.mxu0 0
        %1654 = vmatprep.subr.bf16.mxu0 0
        %1655 = vmatpush1.bf16.msra.mxu0 0
        %1656 = vmatprep.mubr.bf16.mxu0 0
        %1657 = vmatmul.mubr.bf16.gmra.mrb[0].mxu0 %v1622
        %v1658 = vpop.f32.mrb[0].mxu0
        %v1659 = vadd.f32 %v1607, %v1658
        %v1660 = vpop.f32.mrb[0].mxu0
        %v1661 = vpop.f32.mrb[0].mxu0
        %v1662 = vadd.f32 %v1607, %v1661
        %v1663 = vpop.f32.mrb[0].mxu0
        %1664 = vdwg.mxu0
        %v1665 = vmul.f32 %v1659, %v1659
        %v1666 = vmul.f32 %v1662, %v1662
        %v1667 = vmul.f32 %v1659, %v1665
        %v1668 = vmul.f32 %v1662, %v1666
        %v1669 = vmul.f32 %v1667, 0.044715
        %v1670 = vmul.f32 %v1668, 0.044715
        %v1671 = vadd.f32 %v1659, %v1669
        %v1672 = vadd.f32 %v1662, %v1670
        %v1673 = vmul.f32 %v1671, 0.7978846
        %v1674 = vmul.f32 %v1672, 0.7978846
        %v1675 = vtanh.pop %v1673
        %v1676 = vtanh.pop %v1674
        %v1677 = vadd.f32 %v1675, 1.0
        %v1678 = vadd.f32 %v1676, 1.0
        %v1679 = vmul.f32 %v1677, 0.5
        %v1680 = vmul.f32 %v1678, 0.5
        %v1681 = vmul.f32 %v1659, %v1679
        %v1682 = vmul.f32 %v1662, %v1680
        %v1683 = vpack.c.bf16 %v1682, %v1681
        %v1684 = vld [vmem:[%s7] sm:$0xf]
        %v1685 = vld [vmem:[%s7 + $0x4] sm:$0xf]
        %v1686 = vld [vmem:[%s7 + $0x8] sm:$0xf]
        %v1687 = vld [vmem:[%s7 + $0xc] sm:$0xf]
        %v1688 = vld [vmem:[%s7 + $0x10] sm:$0xf]
        %v1689 = vld [vmem:[%s7 + $0x14] sm:$0xf]
        %v1690 = vld [vmem:[%s7 + $0x18] sm:$0xf]
        %v1691 = vld [vmem:[%s7 + $0x1c] sm:$0xf]
        %v1692 = vld [vmem:[%s8] sm:$0x1]
        %v1694 = vlaneseq
        %v1695 = vshrl.u32 %v1694, 7
        %v1696 = vsub.s32 0, %v1695
        %v1697 = vrot.slane %v1692, %v1696
        %v1707 = vunpack.c.l.b16 %v1684
        %v1708 = vunpack.c.l.b16 %v1685
        %v1709 = vunpack.c.l.b16 %v1686
        %v1710 = vunpack.c.l.b16 %v1687
        %v1711 = vunpack.c.l.b16 %v1688
        %v1712 = vunpack.c.l.b16 %v1689
        %v1713 = vunpack.c.l.b16 %v1690
        %v1714 = vunpack.c.l.b16 %v1691
        %v1715 = vpack.c.b16 %v1708, %v1707
        %v1716 = vpack.c.b16 %v1710, %v1709
        %v1717 = vpack.c.b16 %v1712, %v1711
        %v1718 = vpack.c.b16 %v1714, %v1713
        %vm1723 = vcmask 523264
        %v1725 = vsel %vm1723, %v1683, 0
        %1727 = vmatprep.subr.bf16.mxu0 0
        %1728 = vmatpush1.bf16.msra.mxu0 %v1715
        %1729 = vmatprep.subr.bf16.mxu0 0
        %1730 = vmatpush1.bf16.msra.mxu0 %v1716
        %1731 = vmatprep.subr.bf16.mxu0 0
        %1732 = vmatpush1.bf16.msra.mxu0 %v1717
        %1733 = vmatprep.subr.bf16.mxu0 0
        %1734 = vmatpush1.bf16.msra.mxu0 %v1718
        %1735 = vmatprep.subr.bf16.mxu0 0
        %1736 = vmatpush1.bf16.msra.mxu0 0
        %1737 = vmatprep.subr.bf16.mxu0 0
        %1738 = vmatpush1.bf16.msra.mxu0 0
        %1739 = vmatprep.subr.bf16.mxu0 0
        %1740 = vmatpush1.bf16.msra.mxu0 0
        %1741 = vmatprep.subr.bf16.mxu0 0
        %1742 = vmatpush1.bf16.msra.mxu0 0
        %1743 = vmatprep.subr.bf16.mxu0 0
        %1744 = vmatpush1.bf16.msra.mxu0 0
        %1745 = vmatprep.subr.bf16.mxu0 0
        %1746 = vmatpush1.bf16.msra.mxu0 0
        %1747 = vmatprep.subr.bf16.mxu0 0
        %1748 = vmatpush1.bf16.msra.mxu0 0
        %1749 = vmatprep.subr.bf16.mxu0 0
        %1750 = vmatpush1.bf16.msra.mxu0 0
        %1751 = vmatprep.subr.bf16.mxu0 0
        %1752 = vmatpush1.bf16.msra.mxu0 0
        %1753 = vmatprep.subr.bf16.mxu0 0
        %1754 = vmatpush1.bf16.msra.mxu0 0
        %1755 = vmatprep.subr.bf16.mxu0 0
        %1756 = vmatpush1.bf16.msra.mxu0 0
        %1757 = vmatprep.subr.bf16.mxu0 0
        %1758 = vmatpush1.bf16.msra.mxu0 0
        %1759 = vmatprep.mubr.bf16.mxu0 0
        %1760 = vmatmul.mubr.bf16.gmra.mrb[0].mxu0 %v1725
        %v1761 = vpop.f32.mrb[0].mxu0
        %v1762 = vadd.f32 %v1697, %v1761
        %v1763 = vpop.f32.mrb[0].mxu0
        %v1764 = vpop.f32.mrb[0].mxu0
        %v1765 = vadd.f32 %v1697, %v1764
        %v1766 = vpop.f32.mrb[0].mxu0
        %1767 = vdwg.mxu0
        %v1768 = vadd.f32 %v1595, %v1762
        %v1769 = vadd.f32 %v1596, %v1765
        %v1770 = vsel %vm1316, %v1768, 0.0
        %1771 = vadd.xlane.f32.xlu0 %v1770
        %v1772 = vpop.xlane.xlu0 %1771
        %v1773 = vsel %vm1316, %v1769, 0.0
        %1774 = vadd.xlane.f32.xlu0 %v1773
        %v1775 = vpop.xlane.xlu0 %1774
        %v1776 = vmul.f32 %v1772, %v1558
        %v1777 = vmul.f32 %v1775, %v1558
        %v1778 = vsub.f32 %v1768, %v1776
        %v1779 = vsub.f32 %v1769, %v1777
        %v1780 = vmul.f32 %v1778, %v1778
        %v1781 = vmul.f32 %v1779, %v1779
        %v1782 = vsel %vm1316, %v1780, 0.0
        %1783 = vadd.xlane.f32.xlu0 %v1782
        %v1784 = vpop.xlane.xlu0 %1783
        %v1785 = vsel %vm1316, %v1781, 0.0
        %1786 = vadd.xlane.f32.xlu0 %v1785
        %v1787 = vpop.xlane.xlu0 %1786
        %v1788 = vmul.f32 %v1784, %v1558
        %v1789 = vmul.f32 %v1787, %v1558
        %v1790 = vadd.f32 %v1788, 1e-05
        %v1791 = vadd.f32 %v1789, 1e-05
        %v1792 = vrsqrt.pop %v1790
        %v1793 = vrsqrt.pop %v1791
        %v1794 = vmul.f32 %v1778, %v1792
        %v1795 = vmul.f32 %v1779, %v1793
        %v1796 = vld [vmem:[%s11] sm:$0x1]
        %v1798 = vlaneseq
        %v1799 = vshrl.u32 %v1798, 7
        %v1800 = vsub.s32 0, %v1799
        %v1801 = vrot.slane %v1796, %v1800
        %v1803 = vmul.f32 %v1794, %v1801
        %v1804 = vmul.f32 %v1795, %v1801
        %v1805 = vld [vmem:[%s12] sm:$0x1]
        %v1807 = vlaneseq
        %v1808 = vshrl.u32 %v1807, 7
        %v1809 = vsub.s32 0, %v1808
        %v1810 = vrot.slane %v1805, %v1809
        %v1812 = vadd.f32 %v1803, %v1810
        %v1813 = vadd.f32 %v1804, %v1810
        %1814 = vst.msk [vmem:[%s468] sm:$0xff] %vm1316, %v1812
        %1815 = vst.msk [vmem:[%s468 + $0x8] sm:$0xff] %vm1316, %v1813
        %v1816 = vpack.c.bf16 %v1812, %v1812
        %v1817 = vld [vmem:[%s13] sm:$0xf]
        %v1818 = vld [vmem:[%s13 + $0x4] sm:$0xf]
        %v1819 = vld [vmem:[%s13 + $0x8] sm:$0xf]
        %v1820 = vld [vmem:[%s13 + $0xc] sm:$0xf]
        %v1821 = vld [vmem:[%s14] sm:$0x1]
        %v1826 = vunpack.c.l.b16 %v1817
        %v1827 = vunpack.c.l.b16 %v1818
        %v1828 = vunpack.c.l.b16 %v1819
        %v1829 = vunpack.c.l.b16 %v1820
        %v1830 = vpack.c.b16 %v1827, %v1826
        %v1831 = vpack.c.b16 %v1829, %v1828
        %v1835 = vsel %vm1316, %v1816, 0
        %1837 = vmatprep.subr.bf16.mxu0 0
        %1838 = vmatpush1.bf16.msra.mxu0 %v1830
        %1839 = vmatprep.subr.bf16.mxu0 0
        %1840 = vmatpush1.bf16.msra.mxu0 %v1831
        %1841 = vmatprep.subr.bf16.mxu0 0
        %1842 = vmatpush1.bf16.msra.mxu0 0
        %1843 = vmatprep.subr.bf16.mxu0 0
        %1844 = vmatpush1.bf16.msra.mxu0 0
        %1845 = vmatprep.subr.bf16.mxu0 0
        %1846 = vmatpush1.bf16.msra.mxu0 0
        %1847 = vmatprep.subr.bf16.mxu0 0
        %1848 = vmatpush1.bf16.msra.mxu0 0
        %1849 = vmatprep.subr.bf16.mxu0 0
        %1850 = vmatpush1.bf16.msra.mxu0 0
        %1851 = vmatprep.subr.bf16.mxu0 0
        %1852 = vmatpush1.bf16.msra.mxu0 0
        %1853 = vmatprep.subr.bf16.mxu0 0
        %1854 = vmatpush1.bf16.msra.mxu0 0
        %1855 = vmatprep.subr.bf16.mxu0 0
        %1856 = vmatpush1.bf16.msra.mxu0 0
        %1857 = vmatprep.subr.bf16.mxu0 0
        %1858 = vmatpush1.bf16.msra.mxu0 0
        %1859 = vmatprep.subr.bf16.mxu0 0
        %1860 = vmatpush1.bf16.msra.mxu0 0
        %1861 = vmatprep.subr.bf16.mxu0 0
        %1862 = vmatpush1.bf16.msra.mxu0 0
        %1863 = vmatprep.subr.bf16.mxu0 0
        %1864 = vmatpush1.bf16.msra.mxu0 0
        %1865 = vmatprep.subr.bf16.mxu0 0
        %1866 = vmatpush1.bf16.msra.mxu0 0
        %1867 = vmatprep.subr.bf16.mxu0 0
        %1868 = vmatpush1.bf16.msra.mxu0 0
        %1869 = vmatprep.mubr.bf16.mxu0 0
        %1870 = vmatmul.mubr.bf16.gmra.mrb[0].mxu0 %v1835
        %v1871 = vpop.f32.mrb[0].mxu0
        %v1872 = vadd.f32 %v1821, %v1871
        %v1873 = vpop.f32.mrb[0].mxu0
        %v1874 = vpop.f32.mrb[0].mxu0
        %v1875 = vpop.f32.mrb[0].mxu0
        %1876 = vdwg.mxu0
        %vm1877 = vcmask 16384
        %v1878 = vsel %vm1877, %v1872, -inf
        %1879 = vmax.xlane.f32.xlu0 %v1878
        %v1880 = vpop.xlane.xlu0 %1879
        %v1881 = vsub.f32 %v1872, %v1880
        %v1882 = vmul.f32 %v1881, 1.442695
        %v1883 = vpow.pop %v1882
        %v1884 = vsel %vm1877, %v1883, 0.0
        %1885 = vadd.xlane.f32.xlu0 %v1884
        %v1886 = vpop.xlane.xlu0 %1885
        %v1887 = vlog2.pop %v1886
        %v1888 = vmul.f32 %v1887, 0.6931472
        %v1889 = vadd.f32 %v1888, %v1880
        %v1890 = vsub.f32 %v1872, %v1889
        %1891 = vst.msk [vmem:[%s474] sm:$0x1] %vm1877, %v1890
        %s1892 = sand.u32 %s326, 1
        %s1893 = scalar_lea.sflag [#allocation7], %s1892
        %s1894 = sand.u32 %s326, 1
        %s1895 = smul.addr %s1894, 16
        %s1896 = scalar_lea.vmem [#allocation6], %s1895
        %s1897 = sand.u32 %s352, 1
        %s1898 = scalar_lea.sflag [#allocation9], %s1897
        %s1899 = sand.u32 %s352, 1
        %s1900 = scalar_lea.vmem [#allocation8], %s1899
        // Predicated region
        $region553: #{tpu_custom_call.1} parent=71 // pred_check
          %p1901 = pneg %p336
        $region554: #{tpu_custom_call.1} parent=71 // pred_check_branch
          %1903 = sbr.rel (%p1901) target = $region556
        $region555: #{tpu_custom_call.1} parent=71 // pred_region
          %s1905 = ssub.s32 256, 256
          %1906 = vsyncadd %s1893, %s1905
          %s1907 = smul.addr %s40, 2
          %s1908 = smul.addr %s1907, 128
          %s1909 = scalar_lea.hbm %s15, %s1908
          %s1910 = sshll.u32 %s1896, 4
          %s1911 = int_to_ptr.vmem [resolvable:$true] %s1910
          %1916 = dma.vmem_to_hbm [thread:$0]  %s1911, 256, %s1909, %s1893, 128, 128, 8
        $region556: #{tpu_custom_call.1} parent=71 // pred_fallthru
          _
        // Predicated region
        $region557: #{tpu_custom_call.1} parent=71 // pred_check
          %p1917 = pneg %p362
        $region558: #{tpu_custom_call.1} parent=71 // pred_check_branch
          %1919 = sbr.rel (%p1917) target = $region560
        $region559: #{tpu_custom_call.1} parent=71 // pred_region
          %s1921 = ssub.s32 16, 16
          %1922 = vsyncadd %s1898, %s1921
          %s1923 = smul.addr %s40, 16
          %s1924 = scalar_lea.hbm %s16, %s1923
          %s1926 = sshll.u32 %s1900, 4
          %s1927 = int_to_ptr.vmem [resolvable:$true] %s1926
          %1929 = dma.vmem_to_hbm [thread:$0]  %s1927, 16, %s1924, %s1898
        $region560: #{tpu_custom_call.1} parent=71 // pred_fallthru
          _
      $region72: #{tpu_custom_call.1} parent=5 // pred_fallthru
        _
      %p1930 = scmp.le.s32.totalorder 2, %s35
      // Predicated region
      $region561: #{tpu_custom_call.1} parent=5 // pred_check
        %p1931 = pneg %p1930
      $region562: #{tpu_custom_call.1} parent=5 // pred_check_branch
        %1933 = sbr.rel (%p1931) target = $region564
      $region563: #{tpu_custom_call.1} parent=5 // pred_region
        %s1934 = ssub.s32 %s35, 2
        // Predicated region
        $region565: #{tpu_custom_call.1} parent=563 // pred_check
          %p1935 = pneg %p342
        $region566: #{tpu_custom_call.1} parent=563 // pred_check_branch
          %1937 = sbr.rel (%p1935) target = $region568
        $region567: #{tpu_custom_call.1} parent=563 // pred_region
          %s1938 = sand.u32 %s327, 1
          %s1939 = scalar_lea.sflag [#allocation7], %s1938
          %s1940 = sand.u32 %s327, 1
          %s1941 = smul.addr %s1940, 16
          %s1942 = scalar_lea.vmem [#allocation6], %s1941
          %1943 = dma.done %s1939, 256
        $region568: #{tpu_custom_call.1} parent=563 // pred_fallthru
          _
        // Predicated region
        $region569: #{tpu_custom_call.1} parent=563 // pred_check
          %p1944 = pneg %p368
        $region570: #{tpu_custom_call.1} parent=563 // pred_check_branch
          %1946 = sbr.rel (%p1944) target = $region572
        $region571: #{tpu_custom_call.1} parent=563 // pred_region
          %s1947 = sand.u32 %s353, 1
          %s1948 = scalar_lea.sflag [#allocation9], %s1947
          %s1949 = sand.u32 %s353, 1
          %s1950 = scalar_lea.vmem [#allocation8], %s1949
          %1951 = dma.done %s1948, 16
        $region572: #{tpu_custom_call.1} parent=563 // pred_fallthru
          _
      $region564: #{tpu_custom_call.1} parent=5 // pred_fallthru
        _
    $region6: #{tpu_custom_call.1} parent=1 // loop_footer
      %s39 = sadd.s32 1, %s35
    $region7: #{tpu_custom_call.1} parent=1 // loop_footer_branch
      %34 = sbr.rel target = $region3
    $region8: #{tpu_custom_call.1} parent=1 // loop_exit
      _
    %1952 = vsyncpa [#allocation7], 1
    %s1953 = scalar_lea.sflag [#allocation7], 1
    %1954 = vsyncpa %s1953, 1
    %1955 = vsyncpa [#allocation9], 1
    %s1956 = scalar_lea.sflag [#allocation9], 1
    %1957 = vsyncpa %s1956, 1
  %1958 = vsyncmov [#allocation3]
  %s1959 = vpop.sfrf %1958
  %p1960 = scmp.eq.s32.totalorder %s1959, 0
  %p1961 = pneg %p1960
  %1963 = shalt.err (%p1961)
  %s1964 = scalar_lea.sflag [#allocation3], 1
  %1965 = vsyncmov %s1964
  %s1966 = vpop.sfrf %1965
  %p1967 = scmp.eq.s32.totalorder %s1966, 0
  %p1968 = pneg %p1967
  %1970 = shalt.err (%p1968)
  %s1971 = scalar_lea.sflag [#allocation3], 2
  %1972 = vsyncmov %s1971
  %s1973 = vpop.sfrf %1972
  %p1974 = scmp.eq.s32.totalorder %s1973, 0
  %p1975 = pneg %p1974
  %1977 = shalt.err (%p1975)
  %s1978 = scalar_lea.sflag [#allocation3], 3
  %1979 = vsyncmov %s1978
  %s1980 = vpop.sfrf %1979
  %p1981 = scmp.eq.s32.totalorder %s1980, 0
  %p1982 = pneg %p1981
  %1984 = shalt.err (%p1982)
  %s1985 = scalar_lea.sflag [#allocation3], 4
  %1986 = vsyncmov %s1985
  %s1987 = vpop.sfrf %1986
  %p1988 = scmp.eq.s32.totalorder %s1987, 0
  %p1989 = pneg %p1988
  %1991 = shalt.err (%p1989)
  %s1992 = scalar_lea.sflag [#allocation3], 5
  %1993 = vsyncmov %s1992
  %s1994 = vpop.sfrf %1993
  %p1995 = scmp.eq.s32.totalorder %s1994, 0
  %p1996 = pneg %p1995
  %1998 = shalt.err (%p1996)
  %s1999 = scalar_lea.sflag [#allocation3], 6
  %2000 = vsyncmov %s1999
  %s2001 = vpop.sfrf %2000
  %p2002 = scmp.eq.s32.totalorder %s2001, 0
  %p2003 = pneg %p2002
  %2005 = shalt.err (%p2003)
  %s2006 = scalar_lea.sflag [#allocation3], 7
  %2007 = vsyncmov %s2006
  %s2008 = vpop.sfrf %2007
  %p2009 = scmp.eq.s32.totalorder %s2008, 0
  %p2010 = pneg %p2009
  %2012 = shalt.err (%p2010)
  %s2013 = scalar_lea.sflag [#allocation3], 8
  %2014 = vsyncmov %s2013
  %s2015 = vpop.sfrf %2014
  %p2016 = scmp.eq.s32.totalorder %s2015, 0
  %p2017 = pneg %p2016
  %2019 = shalt.err (%p2017)
  %s2020 = scalar_lea.sflag [#allocation3], 9
  %2021 = vsyncmov %s2020
  %s2022 = vpop.sfrf %2021
  %p2023 = scmp.eq.s32.totalorder %s2022, 0
  %p2024 = pneg %p2023
  %2026 = shalt.err (%p2024)
  %s2027 = scalar_lea.sflag [#allocation3], 10
  %2028 = vsyncmov %s2027
  %s2029 = vpop.sfrf %2028
  %p2030 = scmp.eq.s32.totalorder %s2029, 0
  %p2031 = pneg %p2030
  %2033 = shalt.err (%p2031)
  %s2034 = scalar_lea.sflag [#allocation3], 11
  %2035 = vsyncmov %s2034
  %s2036 = vpop.sfrf %2035
  %p2037 = scmp.eq.s32.totalorder %s2036, 0
  %p2038 = pneg %p2037
  %2040 = shalt.err (%p2038)
  %s2041 = scalar_lea.sflag [#allocation3], 12
  %2042 = vsyncmov %s2041
  %s2043 = vpop.sfrf %2042
  %p2044 = scmp.eq.s32.totalorder %s2043, 0
  %p2045 = pneg %p2044
  %2047 = shalt.err (%p2045)
  %s2048 = scalar_lea.sflag [#allocation3], 13
  %2049 = vsyncmov %s2048
  %s2050 = vpop.sfrf %2049
  %p2051 = scmp.eq.s32.totalorder %s2050, 0
  %p2052 = pneg %p2051
  %2054 = shalt.err (%p2052)
  %s2055 = scalar_lea.sflag [#allocation3], 14
  %2056 = vsyncmov %s2055
  %s2057 = vpop.sfrf %2056
  %p2058 = scmp.eq.s32.totalorder %s2057, 0
  %p2059 = pneg %p2058
  %2061 = shalt.err (%p2059)
  %s2062 = scalar_lea.sflag [#allocation3], 15
  %2063 = vsyncmov %s2062
  %s2064 = vpop.sfrf %2063
  %p2065 = scmp.eq.s32.totalorder %s2064, 0
  %p2066 = pneg %p2065
  %2068 = shalt.err (%p2066)

</llo_original>
